<compile_context>
chip_gen: v7x
topology: tpu7x:2x2x1
jax: 0.10.0
libtpu: 0.0.40
codegen_flags: <defaults>
</compile_context>

<pallas_src>
import functools

import jax
import jax.numpy as jnp
from jax.experimental import pallas as pl
from jax.experimental.pallas import tpu as pltpu


def _round_up(x, m):
    return (x + m - 1) // m * m


# ----------------------------------------------------------------------------
# Kernel 1: fused conv1 -> conv2 -> conv3 (+ folded BN shift + ReLU) and
# global max over points.  Grid = (B, num_point_tiles); the output block is a
# per-batch running-max accumulator resident across the tile axis.
# ----------------------------------------------------------------------------
def _conv_chain_max_kernel(x_ref, w1_ref, w2_ref, w3_ref,
                           s1_ref, s2_ref, s3_ref, o_ref, *, compute_dtype):
    t = pl.program_id(1)

    x = x_ref[0]                                                  # (TN, C)
    y = jnp.dot(x, w1_ref[...], preferred_element_type=jnp.float32)
    y = jnp.maximum(y + s1_ref[...], 0.0)                         # (TN, 64)

    y = jnp.dot(y.astype(compute_dtype), w2_ref[...],
                preferred_element_type=jnp.float32)
    y = jnp.maximum(y + s2_ref[...], 0.0)                         # (TN, 128)

    y = jnp.dot(y.astype(compute_dtype), w3_ref[...],
                preferred_element_type=jnp.float32)
    y = jnp.maximum(y + s3_ref[...], 0.0)                         # (TN, 1024)

    tile_max = jnp.max(y, axis=0, keepdims=True)[None]            # (1, 1, 1024)

    @pl.when(t == 0)
    def _():
        o_ref[...] = tile_max

    @pl.when(t > 0)
    def _():
        o_ref[...] = jnp.maximum(o_ref[...], tile_max)


def conv_chain_max(x_bnc, w1, s1, w2, s2, w3, s3, *,
                   tile_n=256, compute_dtype=jnp.bfloat16):
    """(B, N, C) points -> fused conv1/2/3 + BN + ReLU -> max over N -> (B, 1024)."""
    B, N, C = x_bnc.shape
    C1, C2, C3 = w1.shape[1], w2.shape[1], w3.shape[1]

    # 8-aligned point tile, capped for VMEM; pad N by replicating the last
    # point (duplicates cannot change the max).
    tn = min(tile_n, _round_up(N, 8))
    n_pad = _round_up(N, tn)
    if n_pad != N:
        pad = jnp.broadcast_to(x_bnc[:, -1:, :], (B, n_pad - N, C))
        x_bnc = jnp.concatenate([x_bnc, pad], axis=1)
    nt = n_pad // tn

    x_bnc = x_bnc.astype(compute_dtype)
    w1 = w1.astype(compute_dtype)
    w2 = w2.astype(compute_dtype)
    w3 = w3.astype(compute_dtype)
    s1 = s1.reshape(1, C1).astype(jnp.float32)
    s2 = s2.reshape(1, C2).astype(jnp.float32)
    s3 = s3.reshape(1, C3).astype(jnp.float32)

    out = pl.pallas_call(
        functools.partial(_conv_chain_max_kernel, compute_dtype=compute_dtype),
        out_shape=jax.ShapeDtypeStruct((B, 1, C3), jnp.float32),
        grid=(B, nt),
        in_specs=[
            pl.BlockSpec((1, tn, C), lambda b, t: (b, t, 0)),   # point tile
            pl.BlockSpec((C, C1), lambda b, t: (0, 0)),         # resident weights
            pl.BlockSpec((C1, C2), lambda b, t: (0, 0)),
            pl.BlockSpec((C2, C3), lambda b, t: (0, 0)),
            pl.BlockSpec((1, C1), lambda b, t: (0, 0)),         # folded BN shifts
            pl.BlockSpec((1, C2), lambda b, t: (0, 0)),
            pl.BlockSpec((1, C3), lambda b, t: (0, 0)),
        ],
        out_specs=pl.BlockSpec((1, 1, C3), lambda b, t: (b, 0, 0)),
        compiler_params=pltpu.CompilerParams(
            dimension_semantics=("parallel", "arbitrary")),
    )(x_bnc, w1, w2, w3, s1, s2, s3)
    return out.reshape(B, C3)


# ----------------------------------------------------------------------------
# Kernel 2: fused FC head fc1 -> fc2 -> fc3 (BN folded, identity folded into
# the fc3 bias).  Tiny (B rows), so a single un-tiled call.
# ----------------------------------------------------------------------------
def _fc_head_kernel(g_ref, w1_ref, s1_ref, w2_ref, s2_ref, w3_ref, s3_ref,
                    o_ref, *, compute_dtype):
    g = g_ref[...]
    y = jnp.dot(g.astype(compute_dtype), w1_ref[...],
                preferred_element_type=jnp.float32)
    y = jnp.maximum(y + s1_ref[...], 0.0)
    y = jnp.dot(y.astype(compute_dtype), w2_ref[...],
                preferred_element_type=jnp.float32)
    y = jnp.maximum(y + s2_ref[...], 0.0)
    y = jnp.dot(y.astype(compute_dtype), w3_ref[...],
                preferred_element_type=jnp.float32)
    o_ref[...] = y + s3_ref[...]


def fc_head(g, w1, s1, w2, s2, w3, s3, *, compute_dtype=jnp.bfloat16):
    B, Cin = g.shape
    C1, C2, C3 = w1.shape[1], w2.shape[1], w3.shape[1]

    w1 = w1.astype(compute_dtype)
    w2 = w2.astype(compute_dtype)
    w3 = w3.astype(compute_dtype)
    s1 = s1.reshape(1, C1).astype(jnp.float32)
    s2 = s2.reshape(1, C2).astype(jnp.float32)
    s3 = s3.reshape(1, C3).astype(jnp.float32)

    return pl.pallas_call(
        functools.partial(_fc_head_kernel, compute_dtype=compute_dtype),
        out_shape=jax.ShapeDtypeStruct((B, C3), jnp.float32),
        grid=(1,),
        in_specs=[
            pl.BlockSpec((B, Cin), lambda i: (0, 0)),
            pl.BlockSpec((Cin, C1), lambda i: (0, 0)),
            pl.BlockSpec((1, C1), lambda i: (0, 0)),
            pl.BlockSpec((C1, C2), lambda i: (0, 0)),
            pl.BlockSpec((1, C2), lambda i: (0, 0)),
            pl.BlockSpec((C2, C3), lambda i: (0, 0)),
            pl.BlockSpec((1, C3), lambda i: (0, 0)),
        ],
        out_specs=pl.BlockSpec((B, C3), lambda i: (0, 0)),
        compiler_params=pltpu.CompilerParams(
            dimension_semantics=("arbitrary",)),
    )(g, w1, s1, w2, s2, w3, s3)


# ----------------------------------------------------------------------------
# Parameter construction (deterministic, synthetic; BN eval-mode folded).
# ----------------------------------------------------------------------------
def _make_linear(key, cin, cout):
    k1, k2 = jax.random.split(key)
    w = 0.05 * jax.random.normal(k1, (cin, cout), jnp.float32)
    b = 0.05 * jax.random.normal(k2, (cout,), jnp.float32)
    return w, b


def _make_bn(key, c):
    k1, k2, k3 = jax.random.split(key, 3)
    gamma = 1.0 + 0.1 * jax.random.normal(k1, (c,), jnp.float32)
    beta = 0.1 * jax.random.normal(k2, (c,), jnp.float32)
    mean = 0.1 * jax.random.normal(k3, (c,), jnp.float32)
    var = jnp.ones((c,), jnp.float32)
    return gamma, beta, mean, var


def _fold_linear_bn(key, cin, cout, eps=1e-5):
    """Linear/1x1-conv weight with BN (eval) scale folded into W; returns (W*, shift)."""
    k1, k2 = jax.random.split(key)
    w, b = _make_linear(k1, cin, cout)
    gamma, beta, mean, var = _make_bn(k2, cout)
    scale = gamma / jnp.sqrt(var + eps)
    w_folded = w * scale[None, :]
    shift = (b - mean) * scale + beta
    return w_folded, shift


def init_stn3d(key, channel):
    keys = jax.random.split(key, 6)
    p = {}
    p["conv1"] = _fold_linear_bn(keys[0], channel, 64)
    p["conv2"] = _fold_linear_bn(keys[1], 64, 128)
    p["conv3"] = _fold_linear_bn(keys[2], 128, 1024)
    p["fc1"] = _fold_linear_bn(keys[3], 1024, 512)
    p["fc2"] = _fold_linear_bn(keys[4], 512, 256)
    w, b = _make_linear(keys[5], 256, channel * channel)
    iden = jnp.eye(channel, dtype=jnp.float32).reshape(channel * channel)
    p["fc3"] = (w, b + iden)   # identity add folded into the fc3 bias
    return p


# ----------------------------------------------------------------------------
# STN3d forward
# ----------------------------------------------------------------------------
def stn3d_forward(x_bcn, params, *, tile_n=256, compute_dtype=jnp.bfloat16):
    """x: (B, channel, N) -> (B, channel, channel) transform (matches STN3d.forward)."""
    B, C, N = x_bcn.shape
    # Single cheap layout change at the API boundary; everything downstream is
    # point-major.
    x_bnc = jnp.transpose(x_bcn, (0, 2, 1))                       # (B, N, C)

    w1, s1 = params["conv1"]
    w2, s2 = params["conv2"]
    w3, s3 = params["conv3"]
    g = conv_chain_max(x_bnc, w1, s1, w2, s2, w3, s3,
                       tile_n=tile_n, compute_dtype=compute_dtype)  # (B, 1024)

    f1w, f1s = params["fc1"]
    f2w, f2s = params["fc2"]
    f3w, f3s = params["fc3"]
    trans_flat = fc_head(g, f1w, f1s, f2w, f2s, f3w, f3s,
                         compute_dtype=compute_dtype)              # (B, C*C)
    return trans_flat.reshape(B, C, C)


if __name__ == "__main__":
    key = jax.random.PRNGKey(0)
    k_params, k_data = jax.random.split(key)

    channel = 4
    B, N = 2, 16
    params = init_stn3d(k_params, channel)
    x = jax.random.normal(k_data, (B, channel, N), jnp.float32)

    fwd = jax.jit(lambda inp: stn3d_forward(inp, params))
    trans = fwd(x)
    jax.block_until_ready(trans)

    assert trans.shape == (B, channel, channel)
    assert bool(jnp.all(jnp.isfinite(trans)))
    print("KERNEL_OK")
</pallas_src>

<mosaic_0001>
module attributes {stable_mosaic.version = 11 : i64} {
  func.func @_conv_chain_max_kernel(%arg0: i32, %arg1: i32, %arg2: memref<1x16x4xbf16, #tpu.memory_space<vmem>>, %arg3: memref<4x64xbf16, #tpu.memory_space<vmem>>, %arg4: memref<64x128xbf16, #tpu.memory_space<vmem>>, %arg5: memref<128x1024xbf16, #tpu.memory_space<vmem>>, %arg6: memref<1x64xf32, #tpu.memory_space<vmem>>, %arg7: memref<1x128xf32, #tpu.memory_space<vmem>>, %arg8: memref<1x1024xf32, #tpu.memory_space<vmem>>, %arg9: memref<1x1x1024xf32, #tpu.memory_space<vmem>>) attributes {dimension_semantics = [#tpu.dimension_semantics<parallel>, #tpu.dimension_semantics<arbitrary>], iteration_bounds = array<i64: 2, 1>, scalar_prefetch = 0 : i64, scratch_operands = 0 : i64, tpu.core_type = #tpu.core_type<tc>, window_params = [{transform_indices = @transform_0, window_bounds = array<i64: 1, 16, 4>}, {pipeline_mode = #tpu.pipeline_mode<synchronous>, transform_indices = @transform_1, window_bounds = array<i64: 4, 64>}, {pipeline_mode = #tpu.pipeline_mode<synchronous>, transform_indices = @transform_2, window_bounds = array<i64: 64, 128>}, {pipeline_mode = #tpu.pipeline_mode<synchronous>, transform_indices = @transform_3, window_bounds = array<i64: 128, 1024>}, {pipeline_mode = #tpu.pipeline_mode<synchronous>, transform_indices = @transform_4, window_bounds = array<i64: 1, 64>}, {pipeline_mode = #tpu.pipeline_mode<synchronous>, transform_indices = @transform_5, window_bounds = array<i64: 1, 128>}, {pipeline_mode = #tpu.pipeline_mode<synchronous>, transform_indices = @transform_6, window_bounds = array<i64: 1, 1024>}, {transform_indices = @transform_7, window_bounds = array<i64: 1, 1, 1024>}]} {
    %c0 = arith.constant 0 : index
    %c0_0 = arith.constant 0 : index
    %c0_1 = arith.constant 0 : index
    %0 = vector.load %arg2[%c0, %c0_0, %c0_1] : memref<1x16x4xbf16, #tpu.memory_space<vmem>>, vector<1x16x4xbf16>
    %1 = vector.shape_cast %0 : vector<1x16x4xbf16> to vector<16x4xbf16>
    %c0_2 = arith.constant 0 : index
    %c0_3 = arith.constant 0 : index
    %2 = vector.load %arg3[%c0_2, %c0_3] : memref<4x64xbf16, #tpu.memory_space<vmem>>, vector<4x64xbf16>
    %cst = arith.constant dense<0.000000e+00> : vector<16x64xf32>
    %3 = tpu.matmul %1, %2, %cst {dimension_numbers = #tpu.dot_dimension_numbers<[1], [0], [0], [1], [0, 0, 1, 1], [], []>} : vector<16x4xbf16>, vector<4x64xbf16>, vector<16x64xf32> -> vector<16x64xf32>
    %c0_4 = arith.constant 0 : index
    %c0_5 = arith.constant 0 : index
    %4 = vector.load %arg6[%c0_4, %c0_5] : memref<1x64xf32, #tpu.memory_space<vmem>>, vector<1x64xf32>
    %5 = vector.broadcast %4 : vector<1x64xf32> to vector<16x64xf32>
    %6 = arith.addf %3, %5 : vector<16x64xf32>
    %cst_6 = arith.constant 0.000000e+00 : f32
    %7 = vector.broadcast %cst_6 : f32 to vector<16x64xf32>
    %8 = arith.maximumf %6, %7 : vector<16x64xf32>
    %9 = arith.truncf %8 : vector<16x64xf32> to vector<16x64xbf16>
    %c0_7 = arith.constant 0 : index
    %c0_8 = arith.constant 0 : index
    %10 = vector.load %arg4[%c0_7, %c0_8] : memref<64x128xbf16, #tpu.memory_space<vmem>>, vector<64x128xbf16>
    %cst_9 = arith.constant dense<0.000000e+00> : vector<16x128xf32>
    %11 = tpu.matmul %9, %10, %cst_9 {dimension_numbers = #tpu.dot_dimension_numbers<[1], [0], [0], [1], [0, 0, 1, 1], [], []>} : vector<16x64xbf16>, vector<64x128xbf16>, vector<16x128xf32> -> vector<16x128xf32>
    %c0_10 = arith.constant 0 : index
    %c0_11 = arith.constant 0 : index
    %12 = vector.load %arg7[%c0_10, %c0_11] : memref<1x128xf32, #tpu.memory_space<vmem>>, vector<1x128xf32>
    %13 = vector.broadcast %12 : vector<1x128xf32> to vector<16x128xf32>
    %14 = arith.addf %11, %13 : vector<16x128xf32>
    %cst_12 = arith.constant 0.000000e+00 : f32
    %15 = vector.broadcast %cst_12 : f32 to vector<16x128xf32>
    %16 = arith.maximumf %14, %15 : vector<16x128xf32>
    %17 = arith.truncf %16 : vector<16x128xf32> to vector<16x128xbf16>
    %c0_13 = arith.constant 0 : index
    %c0_14 = arith.constant 0 : index
    %18 = vector.load %arg5[%c0_13, %c0_14] : memref<128x1024xbf16, #tpu.memory_space<vmem>>, vector<128x1024xbf16>
    %cst_15 = arith.constant dense<0.000000e+00> : vector<16x1024xf32>
    %19 = tpu.matmul %17, %18, %cst_15 {dimension_numbers = #tpu.dot_dimension_numbers<[1], [0], [0], [1], [0, 0, 1, 1], [], []>} : vector<16x128xbf16>, vector<128x1024xbf16>, vector<16x1024xf32> -> vector<16x1024xf32>
    %c0_16 = arith.constant 0 : index
    %c0_17 = arith.constant 0 : index
    %20 = vector.load %arg8[%c0_16, %c0_17] : memref<1x1024xf32, #tpu.memory_space<vmem>>, vector<1x1024xf32>
    %21 = vector.broadcast %20 : vector<1x1024xf32> to vector<16x1024xf32>
    %22 = arith.addf %19, %21 : vector<16x1024xf32>
    %cst_18 = arith.constant 0.000000e+00 : f32
    %23 = vector.broadcast %cst_18 : f32 to vector<16x1024xf32>
    %24 = arith.maximumf %22, %23 : vector<16x1024xf32>
    %cst_19 = arith.constant dense<0xFF800000> : vector<1024xf32>
    %25 = vector.multi_reduction <maximumf>, %24, %cst_19 [0] : vector<16x1024xf32> to vector<1024xf32>
    %26 = vector.shape_cast %25 : vector<1024xf32> to vector<1x1024xf32>
    %27 = vector.shape_cast %26 : vector<1x1024xf32> to vector<1x1x1024xf32>
    %c0_i32 = arith.constant 0 : i32
    %28 = arith.cmpi eq, %arg1, %c0_i32 : i32
    %29 = arith.extui %28 : i1 to i32
    %c0_i32_20 = arith.constant 0 : i32
    %30 = arith.cmpi ne, %29, %c0_i32_20 : i32
    scf.if %30 {
      %c0_23 = arith.constant 0 : index
      %c0_24 = arith.constant 0 : index
      %c0_25 = arith.constant 0 : index
      %34 = vector.load %arg9[%c0_23, %c0_24, %c0_25] : memref<1x1x1024xf32, #tpu.memory_space<vmem>>, vector<1x1x1024xf32>
      tpu.vector_store %arg9[%c0_23, %c0_24, %c0_25], %27 {strides = array<i32>} : memref<1x1x1024xf32, #tpu.memory_space<vmem>>, vector<1x1x1024xf32>,
    } else {
    }
    %c0_i32_21 = arith.constant 0 : i32
    %31 = arith.cmpi sgt, %arg1, %c0_i32_21 : i32
    %32 = arith.extui %31 : i1 to i32
    %c0_i32_22 = arith.constant 0 : i32
    %33 = arith.cmpi ne, %32, %c0_i32_22 : i32
    scf.if %33 {
      %c0_23 = arith.constant 0 : index
      %c0_24 = arith.constant 0 : index
      %c0_25 = arith.constant 0 : index
      %34 = vector.load %arg9[%c0_23, %c0_24, %c0_25] : memref<1x1x1024xf32, #tpu.memory_space<vmem>>, vector<1x1x1024xf32>
      %35 = arith.maximumf %34, %27 : vector<1x1x1024xf32>
      %c0_26 = arith.constant 0 : index
      %c0_27 = arith.constant 0 : index
      %c0_28 = arith.constant 0 : index
      %36 = vector.load %arg9[%c0_26, %c0_27, %c0_28] : memref<1x1x1024xf32, #tpu.memory_space<vmem>>, vector<1x1x1024xf32>
      tpu.vector_store %arg9[%c0_26, %c0_27, %c0_28], %35 {strides = array<i32>} : memref<1x1x1024xf32, #tpu.memory_space<vmem>>, vector<1x1x1024xf32>,
    } else {
    }
    return
  }
  func.func @transform_0(%arg0: i32, %arg1: i32) -> (i32, i32, i32) {
    %c0_i32 = arith.constant 0 : i32
    %c0_i32_0 = arith.constant 0 : i32
    return %arg0, %arg1, %c0_i32 : i32, i32, i32
  }
  func.func @transform_1(%arg0: i32, %arg1: i32) -> (i32, i32) {
    %c0_i32 = arith.constant 0 : i32
    %c0_i32_0 = arith.constant 0 : i32
    %c0_i32_1 = arith.constant 0 : i32
    return %c0_i32, %c0_i32_0 : i32, i32
  }
  func.func @transform_2(%arg0: i32, %arg1: i32) -> (i32, i32) {
    %c0_i32 = arith.constant 0 : i32
    %c0_i32_0 = arith.constant 0 : i32
    %c0_i32_1 = arith.constant 0 : i32
    return %c0_i32, %c0_i32_0 : i32, i32
  }
  func.func @transform_3(%arg0: i32, %arg1: i32) -> (i32, i32) {
    %c0_i32 = arith.constant 0 : i32
    %c0_i32_0 = arith.constant 0 : i32
    %c0_i32_1 = arith.constant 0 : i32
    return %c0_i32, %c0_i32_0 : i32, i32
  }
  func.func @transform_4(%arg0: i32, %arg1: i32) -> (i32, i32) {
    %c0_i32 = arith.constant 0 : i32
    %c0_i32_0 = arith.constant 0 : i32
    %c0_i32_1 = arith.constant 0 : i32
    return %c0_i32, %c0_i32_0 : i32, i32
  }
  func.func @transform_5(%arg0: i32, %arg1: i32) -> (i32, i32) {
    %c0_i32 = arith.constant 0 : i32
    %c0_i32_0 = arith.constant 0 : i32
    %c0_i32_1 = arith.constant 0 : i32
    return %c0_i32, %c0_i32_0 : i32, i32
  }
  func.func @transform_6(%arg0: i32, %arg1: i32) -> (i32, i32) {
    %c0_i32 = arith.constant 0 : i32
    %c0_i32_0 = arith.constant 0 : i32
    %c0_i32_1 = arith.constant 0 : i32
    return %c0_i32, %c0_i32_0 : i32, i32
  }
  func.func @transform_7(%arg0: i32, %arg1: i32) -> (i32, i32, i32) {
    %c0_i32 = arith.constant 0 : i32
    %c0_i32_0 = arith.constant 0 : i32
    %c0_i32_1 = arith.constant 0 : i32
    return %arg0, %c0_i32, %c0_i32_0 : i32, i32, i32
  }
}

module attributes {stable_mosaic.version = 11 : i64} {
  func.func @_fc_head_kernel(%arg0: i32, %arg1: memref<2x1024xf32, #tpu.memory_space<vmem>>, %arg2: memref<1024x512xbf16, #tpu.memory_space<vmem>>, %arg3: memref<1x512xf32, #tpu.memory_space<vmem>>, %arg4: memref<512x256xbf16, #tpu.memory_space<vmem>>, %arg5: memref<1x256xf32, #tpu.memory_space<vmem>>, %arg6: memref<256x16xbf16, #tpu.memory_space<vmem>>, %arg7: memref<1x16xf32, #tpu.memory_space<vmem>>, %arg8: memref<2x16xf32, #tpu.memory_space<vmem>>) attributes {dimension_semantics = [#tpu.dimension_semantics<arbitrary>], iteration_bounds = array<i64: 1>, scalar_prefetch = 0 : i64, scratch_operands = 0 : i64, tpu.core_type = #tpu.core_type<tc>, window_params = [{pipeline_mode = #tpu.pipeline_mode<synchronous>, transform_indices = @transform_0, window_bounds = array<i64: 2, 1024>}, {pipeline_mode = #tpu.pipeline_mode<synchronous>, transform_indices = @transform_1, window_bounds = array<i64: 1024, 512>}, {pipeline_mode = #tpu.pipeline_mode<synchronous>, transform_indices = @transform_2, window_bounds = array<i64: 1, 512>}, {pipeline_mode = #tpu.pipeline_mode<synchronous>, transform_indices = @transform_3, window_bounds = array<i64: 512, 256>}, {pipeline_mode = #tpu.pipeline_mode<synchronous>, transform_indices = @transform_4, window_bounds = array<i64: 1, 256>}, {pipeline_mode = #tpu.pipeline_mode<synchronous>, transform_indices = @transform_5, window_bounds = array<i64: 256, 16>}, {pipeline_mode = #tpu.pipeline_mode<synchronous>, transform_indices = @transform_6, window_bounds = array<i64: 1, 16>}, {pipeline_mode = #tpu.pipeline_mode<synchronous>, transform_indices = @transform_7, window_bounds = array<i64: 2, 16>}]} {
    %c0 = arith.constant 0 : index
    %c0_0 = arith.constant 0 : index
    %0 = vector.load %arg1[%c0, %c0_0] : memref<2x1024xf32, #tpu.memory_space<vmem>>, vector<2x1024xf32>
    %1 = arith.truncf %0 : vector<2x1024xf32> to vector<2x1024xbf16>
    %c0_1 = arith.constant 0 : index
    %c0_2 = arith.constant 0 : index
    %2 = vector.load %arg2[%c0_1, %c0_2] : memref<1024x512xbf16, #tpu.memory_space<vmem>>, vector<1024x512xbf16>
    %cst = arith.constant dense<0.000000e+00> : vector<2x512xf32>
    %3 = tpu.matmul %1, %2, %cst {dimension_numbers = #tpu.dot_dimension_numbers<[1], [0], [0], [1], [0, 0, 1, 1], [], []>} : vector<2x1024xbf16>, vector<1024x512xbf16>, vector<2x512xf32> -> vector<2x512xf32>
    %c0_3 = arith.constant 0 : index
    %c0_4 = arith.constant 0 : index
    %4 = vector.load %arg3[%c0_3, %c0_4] : memref<1x512xf32, #tpu.memory_space<vmem>>, vector<1x512xf32>
    %5 = vector.broadcast %4 : vector<1x512xf32> to vector<2x512xf32>
    %6 = arith.addf %3, %5 : vector<2x512xf32>
    %cst_5 = arith.constant 0.000000e+00 : f32
    %7 = vector.broadcast %cst_5 : f32 to vector<2x512xf32>
    %8 = arith.maximumf %6, %7 : vector<2x512xf32>
    %9 = arith.truncf %8 : vector<2x512xf32> to vector<2x512xbf16>
    %c0_6 = arith.constant 0 : index
    %c0_7 = arith.constant 0 : index
    %10 = vector.load %arg4[%c0_6, %c0_7] : memref<512x256xbf16, #tpu.memory_space<vmem>>, vector<512x256xbf16>
    %cst_8 = arith.constant dense<0.000000e+00> : vector<2x256xf32>
    %11 = tpu.matmul %9, %10, %cst_8 {dimension_numbers = #tpu.dot_dimension_numbers<[1], [0], [0], [1], [0, 0, 1, 1], [], []>} : vector<2x512xbf16>, vector<512x256xbf16>, vector<2x256xf32> -> vector<2x256xf32>
    %c0_9 = arith.constant 0 : index
    %c0_10 = arith.constant 0 : index
    %12 = vector.load %arg5[%c0_9, %c0_10] : memref<1x256xf32, #tpu.memory_space<vmem>>, vector<1x256xf32>
    %13 = vector.broadcast %12 : vector<1x256xf32> to vector<2x256xf32>
    %14 = arith.addf %11, %13 : vector<2x256xf32>
    %cst_11 = arith.constant 0.000000e+00 : f32
    %15 = vector.broadcast %cst_11 : f32 to vector<2x256xf32>
    %16 = arith.maximumf %14, %15 : vector<2x256xf32>
    %17 = arith.truncf %16 : vector<2x256xf32> to vector<2x256xbf16>
    %c0_12 = arith.constant 0 : index
    %c0_13 = arith.constant 0 : index
    %18 = vector.load %arg6[%c0_12, %c0_13] : memref<256x16xbf16, #tpu.memory_space<vmem>>, vector<256x16xbf16>
    %cst_14 = arith.constant dense<0.000000e+00> : vector<2x16xf32>
    %19 = tpu.matmul %17, %18, %cst_14 {dimension_numbers = #tpu.dot_dimension_numbers<[1], [0], [0], [1], [0, 0, 1, 1], [], []>} : vector<2x256xbf16>, vector<256x16xbf16>, vector<2x16xf32> -> vector<2x16xf32>
    %c0_15 = arith.constant 0 : index
    %c0_16 = arith.constant 0 : index
    %20 = vector.load %arg7[%c0_15, %c0_16] : memref<1x16xf32, #tpu.memory_space<vmem>>, vector<1x16xf32>
    %21 = vector.broadcast %20 : vector<1x16xf32> to vector<2x16xf32>
    %22 = arith.addf %19, %21 : vector<2x16xf32>
    %c0_17 = arith.constant 0 : index
    %c0_18 = arith.constant 0 : index
    %23 = vector.load %arg8[%c0_17, %c0_18] : memref<2x16xf32, #tpu.memory_space<vmem>>, vector<2x16xf32>
    tpu.vector_store %arg8[%c0_17, %c0_18], %22 {strides = array<i32>} : memref<2x16xf32, #tpu.memory_space<vmem>>, vector<2x16xf32>,
    return
  }
  func.func @transform_0(%arg0: i32) -> (i32, i32) {
    %c0_i32 = arith.constant 0 : i32
    %c0_i32_0 = arith.constant 0 : i32
    %c0_i32_1 = arith.constant 0 : i32
    return %c0_i32, %c0_i32_0 : i32, i32
  }
  func.func @transform_1(%arg0: i32) -> (i32, i32) {
    %c0_i32 = arith.constant 0 : i32
    %c0_i32_0 = arith.constant 0 : i32
    %c0_i32_1 = arith.constant 0 : i32
    return %c0_i32, %c0_i32_0 : i32, i32
  }
  func.func @transform_2(%arg0: i32) -> (i32, i32) {
    %c0_i32 = arith.constant 0 : i32
    %c0_i32_0 = arith.constant 0 : i32
    %c0_i32_1 = arith.constant 0 : i32
    return %c0_i32, %c0_i32_0 : i32, i32
  }
  func.func @transform_3(%arg0: i32) -> (i32, i32) {
    %c0_i32 = arith.constant 0 : i32
    %c0_i32_0 = arith.constant 0 : i32
    %c0_i32_1 = arith.constant 0 : i32
    return %c0_i32, %c0_i32_0 : i32, i32
  }
  func.func @transform_4(%arg0: i32) -> (i32, i32) {
    %c0_i32 = arith.constant 0 : i32
    %c0_i32_0 = arith.constant 0 : i32
    %c0_i32_1 = arith.constant 0 : i32
    return %c0_i32, %c0_i32_0 : i32, i32
  }
  func.func @transform_5(%arg0: i32) -> (i32, i32) {
    %c0_i32 = arith.constant 0 : i32
    %c0_i32_0 = arith.constant 0 : i32
    %c0_i32_1 = arith.constant 0 : i32
    return %c0_i32, %c0_i32_0 : i32, i32
  }
  func.func @transform_6(%arg0: i32) -> (i32, i32) {
    %c0_i32 = arith.constant 0 : i32
    %c0_i32_0 = arith.constant 0 : i32
    %c0_i32_1 = arith.constant 0 : i32
    return %c0_i32, %c0_i32_0 : i32, i32
  }
  func.func @transform_7(%arg0: i32) -> (i32, i32) {
    %c0_i32 = arith.constant 0 : i32
    %c0_i32_0 = arith.constant 0 : i32
    %c0_i32_1 = arith.constant 0 : i32
    return %c0_i32, %c0_i32_0 : i32, i32
  }
}

</mosaic_0001>

<llo_original>
// kernel: _lambda_.2
$region0: #{_lambda_.2}
  #allocation0 [shape = 'u32[]', space=smem, size = 0x4, offset = 0x4, fixed_abs, tag = 'smem constant byte address 0x4 - core index']
  #allocation1 [shape = 'u32[144,128]{1,0:T(1,128)}', space=vmem, size = 0x12000, scoped, tag = 'internal scratch']
  %s0 = inlined_call_operand.vmem [shape: bf16[2,16,4], index: 0, kind: input, shape index: {}]
  %s1 = inlined_call_operand.vmem [shape: bf16[4,64], index: 1, kind: input, shape index: {}]
  %s2 = inlined_call_operand.vmem [shape: bf16[64,128], index: 2, kind: input, shape index: {}]
  %s3 = inlined_call_operand.vmem [shape: bf16[128,1024], index: 3, kind: input, shape index: {}]
  %s4 = inlined_call_operand.vmem [shape: f32[1,64], index: 4, kind: input, shape index: {}]
  %s5 = inlined_call_operand.vmem [shape: f32[1,128], index: 5, kind: input, shape index: {}]
  %s6 = inlined_call_operand.hbm [shape: f32[1,1024], index: 6, kind: input, shape index: {}]
  %s7 = inlined_call_operand.vmem [shape: f32[2,1,1024], index: 7, kind: output, shape index: {}]
  %s8 = sld [smem:[#allocation0]]
  $region73: #{_lambda_.2} parent=0
    _
  %s10 = ssub.s32 1, %s8
  %s11 = scalar_select 0, %s10, %s8
  $region1: #{_lambda_.2} parent=0
    #allocation2 [shape = 'u8[4096]{0}', space=vmem, size = 0x1000, scoped, tag = 'input window, operand 6, single buffered']
    #allocation3 [shape = 's32[2]{0}', space=sflag, size = 0x8, scoped, tag = 'scoped memory for _lambda_.2']
    %12 = vsyncpa [#allocation3], 0
    loop: start=0, step=1, limit=4
    $region2: #{_lambda_.2} parent=1 // loop_pre_header
      _
    $region3: #{_lambda_.2} parent=1 // loop_header
      %s14 = sphi 0, %s18
      %p15 = scmp.ge.s32.totalorder %s14, 4
      %s21 = sphi 0, %s33
      %s22 = sphi 0, %s29
      %s23 = sphi 0, %s21
      %s24 = sphi 0, %s22
      %s25 = sphi 0, %s23
      %s26 = sphi 0, %s24
      %s38 = sphi 0, %s40
      %s41 = sphi 0, %s38
      %s42 = sphi 0, %s41
      %s58 = sphi 0, %s42
      %s62 = sphi 0, %s62
      %s64 = sphi 0, %s62
      %s65 = sphi 0, %s64
      %s79 = sphi 0, %s65
      %s83 = sphi 0, %s83
      %s85 = sphi 0, %s83
      %s86 = sphi 0, %s85
      %s100 = sphi 0, %s86
      %s104 = sphi 0, %s104
      %s106 = sphi 0, %s104
      %s107 = sphi 0, %s106
      %s121 = sphi 0, %s107
      %s125 = sphi 0, %s125
      %s127 = sphi 0, %s125
      %s128 = sphi 0, %s127
      %s142 = sphi 0, %s128
      %s146 = sphi 0, %s146
      %s148 = sphi 0, %s146
      %s149 = sphi 0, %s148
      %s163 = sphi 0, %s149
      %s167 = sphi 0, %s167
      %s169 = sphi 0, %s167
      %s170 = sphi 0, %s169
      %s184 = sphi 0, %s170
      %s190 = sphi 0, %s192
      %s193 = sphi 0, %s190
      %s194 = sphi 0, %s193
      %s210 = sphi 0, %s194
    $region4: #{_lambda_.2} parent=1 // loop_header_branch
      %17 = sbr.rel (%p15) target = $region8
    $region5: #{_lambda_.2} parent=1 // loop_body
      %s19 = ssub.s32 %s14, 1
      %s20 = ssub.s32 %s14, 2
      %s27 = sadd.s32 1, %s22
      %p28 = scmp.ge.s32.totalorder %s27, 1
      %s29 = scalar_select %p28, 0, %s27
      %s30 = sadd.s32 1, %s21
      %s31 = scalar_select %p28, %s30, %s21
      %p32 = scmp.ge.s32.totalorder %s31, 2
      %s33 = scalar_select %p32, 0, %s31
      %s34 = ssub.s32 %s21, %s33
      %s35 = ssub.s32 %s22, %s29
      %s36 = sor.u32 %s34, %s35
      %p37 = scmp.eq.s32.totalorder %s36, 0
      %s39 = sadd.s32 %s38, 1
      %s40 = scalar_select %p37, %s38, %s39
      %p43 = pneg %p37
      %p44 = scmp.eq.s32.totalorder %s14, 1
      %p45 = por %p43, %p44
      %p46 = scmp.ne.s32.totalorder %s38, %s41
      %p47 = scmp.eq.s32.totalorder %s14, 0
      %p48 = por %p46, %p47
      %p49 = scmp.ne.s32.totalorder %s38, %s41
      %p50 = scmp.eq.s32.totalorder %s19, 1
      %p51 = por %p49, %p50
      %p52 = scmp.ne.s32.totalorder %s41, %s42
      %p53 = scmp.eq.s32.totalorder %s19, 0
      %p54 = por %p52, %p53
      %p55 = scmp.ne.s32.totalorder %s41, %s42
      %p56 = scmp.eq.s32.totalorder %s20, 1
      %p57 = por %p55, %p56
      %p59 = scmp.ne.s32.totalorder %s42, %s58
      %p60 = scmp.eq.s32.totalorder %s20, 0
      %p61 = por %p59, %p60
      %s63 = sadd.s32 %s62, 1
      %p66 = scmp.eq.s32.totalorder %s14, 1
      %p67 = scmp.ne.s32.totalorder %s62, %s64
      %p68 = scmp.eq.s32.totalorder %s14, 0
      %p69 = por %p67, %p68
      %p70 = scmp.ne.s32.totalorder %s62, %s64
      %p71 = scmp.eq.s32.totalorder %s19, 1
      %p72 = por %p70, %p71
      %p73 = scmp.ne.s32.totalorder %s64, %s65
      %p74 = scmp.eq.s32.totalorder %s19, 0
      %p75 = por %p73, %p74
      %p76 = scmp.ne.s32.totalorder %s64, %s65
      %p77 = scmp.eq.s32.totalorder %s20, 1
      %p78 = por %p76, %p77
      %p80 = scmp.ne.s32.totalorder %s65, %s79
      %p81 = scmp.eq.s32.totalorder %s20, 0
      %p82 = por %p80, %p81
      %s84 = sadd.s32 %s83, 1
      %p87 = scmp.eq.s32.totalorder %s14, 1
      %p88 = scmp.ne.s32.totalorder %s83, %s85
      %p89 = scmp.eq.s32.totalorder %s14, 0
      %p90 = por %p88, %p89
      %p91 = scmp.ne.s32.totalorder %s83, %s85
      %p92 = scmp.eq.s32.totalorder %s19, 1
      %p93 = por %p91, %p92
      %p94 = scmp.ne.s32.totalorder %s85, %s86
      %p95 = scmp.eq.s32.totalorder %s19, 0
      %p96 = por %p94, %p95
      %p97 = scmp.ne.s32.totalorder %s85, %s86
      %p98 = scmp.eq.s32.totalorder %s20, 1
      %p99 = por %p97, %p98
      %p101 = scmp.ne.s32.totalorder %s86, %s100
      %p102 = scmp.eq.s32.totalorder %s20, 0
      %p103 = por %p101, %p102
      %s105 = sadd.s32 %s104, 1
      %p108 = scmp.eq.s32.totalorder %s14, 1
      %p109 = scmp.ne.s32.totalorder %s104, %s106
      %p110 = scmp.eq.s32.totalorder %s14, 0
      %p111 = por %p109, %p110
      %p112 = scmp.ne.s32.totalorder %s104, %s106
      %p113 = scmp.eq.s32.totalorder %s19, 1
      %p114 = por %p112, %p113
      %p115 = scmp.ne.s32.totalorder %s106, %s107
      %p116 = scmp.eq.s32.totalorder %s19, 0
      %p117 = por %p115, %p116
      %p118 = scmp.ne.s32.totalorder %s106, %s107
      %p119 = scmp.eq.s32.totalorder %s20, 1
      %p120 = por %p118, %p119
      %p122 = scmp.ne.s32.totalorder %s107, %s121
      %p123 = scmp.eq.s32.totalorder %s20, 0
      %p124 = por %p122, %p123
      %s126 = sadd.s32 %s125, 1
      %p129 = scmp.eq.s32.totalorder %s14, 1
      %p130 = scmp.ne.s32.totalorder %s125, %s127
      %p131 = scmp.eq.s32.totalorder %s14, 0
      %p132 = por %p130, %p131
      %p133 = scmp.ne.s32.totalorder %s125, %s127
      %p134 = scmp.eq.s32.totalorder %s19, 1
      %p135 = por %p133, %p134
      %p136 = scmp.ne.s32.totalorder %s127, %s128
      %p137 = scmp.eq.s32.totalorder %s19, 0
      %p138 = por %p136, %p137
      %p139 = scmp.ne.s32.totalorder %s127, %s128
      %p140 = scmp.eq.s32.totalorder %s20, 1
      %p141 = por %p139, %p140
      %p143 = scmp.ne.s32.totalorder %s128, %s142
      %p144 = scmp.eq.s32.totalorder %s20, 0
      %p145 = por %p143, %p144
      %s147 = sadd.s32 %s146, 1
      %p150 = scmp.eq.s32.totalorder %s14, 1
      %p151 = scmp.ne.s32.totalorder %s146, %s148
      %p152 = scmp.eq.s32.totalorder %s14, 0
      %p153 = por %p151, %p152
      %p154 = scmp.ne.s32.totalorder %s146, %s148
      %p155 = scmp.eq.s32.totalorder %s19, 1
      %p156 = por %p154, %p155
      %p157 = scmp.ne.s32.totalorder %s148, %s149
      %p158 = scmp.eq.s32.totalorder %s19, 0
      %p159 = por %p157, %p158
      %p160 = scmp.ne.s32.totalorder %s148, %s149
      %p161 = scmp.eq.s32.totalorder %s20, 1
      %p162 = por %p160, %p161
      %p164 = scmp.ne.s32.totalorder %s149, %s163
      %p165 = scmp.eq.s32.totalorder %s20, 0
      %p166 = por %p164, %p165
      %s168 = sadd.s32 %s167, 1
      %p171 = scmp.eq.s32.totalorder %s14, 1
      %p172 = scmp.ne.s32.totalorder %s167, %s169
      %p173 = scmp.eq.s32.totalorder %s14, 0
      %p174 = por %p172, %p173
      %p175 = scmp.ne.s32.totalorder %s167, %s169
      %p176 = scmp.eq.s32.totalorder %s19, 1
      %p177 = por %p175, %p176
      %p178 = scmp.ne.s32.totalorder %s169, %s170
      %p179 = scmp.eq.s32.totalorder %s19, 0
      %p180 = por %p178, %p179
      %p181 = scmp.ne.s32.totalorder %s169, %s170
      %p182 = scmp.eq.s32.totalorder %s20, 1
      %p183 = por %p181, %p182
      %p185 = scmp.ne.s32.totalorder %s170, %s184
      %p186 = scmp.eq.s32.totalorder %s20, 0
      %p187 = por %p185, %p186
      %s188 = ssub.s32 %s21, %s33
      %p189 = scmp.eq.s32.totalorder %s188, 0
      %s191 = sadd.s32 %s190, 1
      %s192 = scalar_select %p189, %s190, %s191
      %p195 = pneg %p189
      %p196 = scmp.eq.s32.totalorder %s14, 1
      %p197 = por %p195, %p196
      %p198 = scmp.ne.s32.totalorder %s190, %s193
      %p199 = scmp.eq.s32.totalorder %s14, 0
      %p200 = por %p198, %p199
      %p201 = scmp.ne.s32.totalorder %s190, %s193
      %p202 = scmp.eq.s32.totalorder %s19, 1
      %p203 = por %p201, %p202
      %p204 = scmp.ne.s32.totalorder %s193, %s194
      %p205 = scmp.eq.s32.totalorder %s19, 0
      %p206 = por %p204, %p205
      %p207 = scmp.ne.s32.totalorder %s193, %s194
      %p208 = scmp.eq.s32.totalorder %s20, 1
      %p209 = por %p207, %p208
      %p211 = scmp.ne.s32.totalorder %s194, %s210
      %p212 = scmp.eq.s32.totalorder %s20, 0
      %p213 = por %p211, %p212
      %p214 = scmp.le.s32.totalorder 1, %s14
      %p215 = scmp.lt.s32.totalorder %s14, 3
      %p216 = pnand %p214, %p215
      %p217 = pneg %p216
      // Predicated region
      $region9: #{_lambda_.2} parent=5 // pred_check
        _
      $region10: #{_lambda_.2} parent=5 // pred_check_branch
        %219 = sbr.rel (%p216) target = $region12
      $region11: #{_lambda_.2} parent=5 // pred_region
        %s220 = ssub.s32 %s14, 1
        // Predicated region
        $region13: #{_lambda_.2} parent=11 // pred_check
          %p221 = pneg %p75
        $region14: #{_lambda_.2} parent=11 // pred_check_branch
          %223 = sbr.rel (%p221) target = $region16
        $region15: #{_lambda_.2} parent=11 // pred_region
          _
        $region16: #{_lambda_.2} parent=11 // pred_fallthru
          _
        // Predicated region
        $region17: #{_lambda_.2} parent=11 // pred_check
          %p224 = pneg %p96
        $region18: #{_lambda_.2} parent=11 // pred_check_branch
          %226 = sbr.rel (%p224) target = $region20
        $region19: #{_lambda_.2} parent=11 // pred_region
          _
        $region20: #{_lambda_.2} parent=11 // pred_fallthru
          _
        // Predicated region
        $region21: #{_lambda_.2} parent=11 // pred_check
          %p227 = pneg %p117
        $region22: #{_lambda_.2} parent=11 // pred_check_branch
          %229 = sbr.rel (%p227) target = $region24
        $region23: #{_lambda_.2} parent=11 // pred_region
          _
        $region24: #{_lambda_.2} parent=11 // pred_fallthru
          _
        // Predicated region
        $region25: #{_lambda_.2} parent=11 // pred_check
          %p230 = pneg %p138
        $region26: #{_lambda_.2} parent=11 // pred_check_branch
          %232 = sbr.rel (%p230) target = $region28
        $region27: #{_lambda_.2} parent=11 // pred_region
          _
        $region28: #{_lambda_.2} parent=11 // pred_fallthru
          _
        // Predicated region
        $region29: #{_lambda_.2} parent=11 // pred_check
          %p233 = pneg %p159
        $region30: #{_lambda_.2} parent=11 // pred_check_branch
          %235 = sbr.rel (%p233) target = $region32
        $region31: #{_lambda_.2} parent=11 // pred_region
          _
        $region32: #{_lambda_.2} parent=11 // pred_fallthru
          _
        // Predicated region
        $region33: #{_lambda_.2} parent=11 // pred_check
          %p236 = pneg %p180
        $region34: #{_lambda_.2} parent=11 // pred_check_branch
          %238 = sbr.rel (%p236) target = $region36
        $region35: #{_lambda_.2} parent=11 // pred_region
          %s240 = ssub.s32 128, 128
          %241 = vsyncadd [#allocation3], %s240
          %s243 = sshll.u32 [#allocation2], 4
          %s244 = int_to_ptr.vmem [resolvable:$true] %s243
          %246 = dma.hbm_to_vmem [thread:$0]  %s6, 128, %s244, [#allocation3]
        $region36: #{_lambda_.2} parent=11 // pred_fallthru
          _
      $region12: #{_lambda_.2} parent=5 // pred_fallthru
        _
      %p247 = scmp.lt.s32.totalorder %s14, 2
      // Predicated region
      $region37: #{_lambda_.2} parent=5 // pred_check
        %p248 = pneg %p247
      $region38: #{_lambda_.2} parent=5 // pred_check_branch
        %250 = sbr.rel (%p248) target = $region40
      $region39: #{_lambda_.2} parent=5 // pred_region
        // Predicated region
        $region41: #{_lambda_.2} parent=39 // pred_check
          %p251 = pneg %p48
        $region42: #{_lambda_.2} parent=39 // pred_check_branch
          %253 = sbr.rel (%p251) target = $region44
        $region43: #{_lambda_.2} parent=39 // pred_region
          %s254 = smul.u32 2, %s22
          %p255 = scmp.lt.s32.totalorder %s21, 1
          %s256 = scalar_select %p255, %s21, 1
          %p257 = scmp.lt.s32.totalorder %s254, 1
          %s258 = scalar_select %p257, %s254, 1
          %s259 = smul.addr %s256, 2
          %s260 = sadd.s32 %s258, %s259
          %s261 = smul.addr %s260, 4
          %s262 = scalar_lea.vmem %s0, %s261
          %s263 = smul.u32 2, %s22
        $region44: #{_lambda_.2} parent=39 // pred_fallthru
          _
      $region40: #{_lambda_.2} parent=5 // pred_fallthru
        _
      %p264 = scmp.le.s32.totalorder 1, %s14
      %p265 = scmp.lt.s32.totalorder %s14, 3
      %p266 = pnand %p264, %p265
      %p267 = pneg %p266
      // Predicated region
      $region45: #{_lambda_.2} parent=5 // pred_check
        _
      $region46: #{_lambda_.2} parent=5 // pred_check_branch
        %269 = sbr.rel (%p266) target = $region48
      $region47: #{_lambda_.2} parent=5 // pred_region
        %s270 = ssub.s32 %s14, 1
        // Predicated region
        $region49: #{_lambda_.2} parent=47 // pred_check
          %p271 = pneg %p180
        $region50: #{_lambda_.2} parent=47 // pred_check_branch
          %273 = sbr.rel (%p271) target = $region52
        $region51: #{_lambda_.2} parent=47 // pred_region
          %274 = dma.done [#allocation3], 128
        $region52: #{_lambda_.2} parent=47 // pred_fallthru
          _
        %s275 = smul.u32 2, %s24
        %p276 = scmp.lt.s32.totalorder %s23, 1
        %s277 = scalar_select %p276, %s23, 1
        %p278 = scmp.lt.s32.totalorder %s275, 1
        %s279 = scalar_select %p278, %s275, 1
        %s280 = smul.addr %s277, 2
        %s281 = sadd.s32 %s279, %s280
        %s282 = smul.addr %s281, 4
        %s283 = scalar_lea.vmem %s0, %s282
        %p284 = pneg %p54
        %p285 = pneg %p51
        %p286 = pneg %p75
        %p287 = pneg %p72
        %p288 = pneg %p96
        %p289 = pneg %p93
        %p290 = pneg %p117
        %p291 = pneg %p114
        %p292 = pneg %p138
        %p293 = pneg %p135
        %p294 = pneg %p159
        %p295 = pneg %p156
        %p296 = pneg %p180
        %p297 = pneg %p177
        %p298 = pneg %p206
        %p299 = pneg %p203
        %p300 = scmp.lt.s32.totalorder %s23, 1
        %s301 = scalar_select %p300, %s23, 1
        %s302 = smul.addr %s301, 8
        %s303 = scalar_lea.vmem %s7, %s302
        %s304 = smul.u32 2, %s24
        %p305 = scmp.lt.s32.totalorder %s23, 1
        %s306 = scalar_select %p305, %s23, 1
        %p307 = scmp.lt.s32.totalorder %s304, 1
        %s308 = scalar_select %p307, %s304, 1
        %s309 = smul.addr %s306, 2
        %s310 = sadd.s32 %s308, %s309
        %s311 = smul.addr %s310, 4
        %s312 = scalar_lea.vmem %s0, %s311
        %s313 = smul.u32 2, %s24
        %p314 = scmp.lt.s32.totalorder %s23, 1
        %s315 = scalar_select %p314, %s23, 1
        %s316 = smul.addr %s315, 8
        %s317 = scalar_lea.vmem %s7, %s316
        %v319 = vld [vmem:[%s312] sm:$0xf]
        %v320 = vld [vmem:[%s312 + $0x4] sm:$0xf]
        %v321 = vld [vmem:[%s1] sm:$0x3]
        %v322 = vld [vmem:[%s4] sm:$0x1]
        %v324 = vlaneseq
        %v325 = vshrl.u32 %v324, 7
        %v326 = vsub.s32 0, %v325
        %v327 = vrot.slane %v322, %v326
        %v331 = vunpack.c.l.b16 %v319
        %v332 = vunpack.c.l.b16 %v320
        %v333 = vpack.c.b16 %v332, %v331
        %vm334 = vcmask 31744
        %v336 = vsel %vm334, %v333, 0
        %vm338 = vcmask 1041408
        %v340 = vsel %vm338, %v321, 0
        %342 = vmatprep.subr.bf16.mxu0 0
        %343 = vmatpush1.bf16.msra.mxu0 %v340
        %344 = vmatprep.subr.bf16.mxu0 0
        %345 = vmatpush1.bf16.msra.mxu0 0
        %346 = vmatprep.subr.bf16.mxu0 0
        %347 = vmatpush1.bf16.msra.mxu0 0
        %348 = vmatprep.subr.bf16.mxu0 0
        %349 = vmatpush1.bf16.msra.mxu0 0
        %350 = vmatprep.subr.bf16.mxu0 0
        %351 = vmatpush1.bf16.msra.mxu0 0
        %352 = vmatprep.subr.bf16.mxu0 0
        %353 = vmatpush1.bf16.msra.mxu0 0
        %354 = vmatprep.subr.bf16.mxu0 0
        %355 = vmatpush1.bf16.msra.mxu0 0
        %356 = vmatprep.subr.bf16.mxu0 0
        %357 = vmatpush1.bf16.msra.mxu0 0
        %358 = vmatprep.subr.bf16.mxu0 0
        %359 = vmatpush1.bf16.msra.mxu0 0
        %360 = vmatprep.subr.bf16.mxu0 0
        %361 = vmatpush1.bf16.msra.mxu0 0
        %362 = vmatprep.subr.bf16.mxu0 0
        %363 = vmatpush1.bf16.msra.mxu0 0
        %364 = vmatprep.subr.bf16.mxu0 0
        %365 = vmatpush1.bf16.msra.mxu0 0
        %366 = vmatprep.subr.bf16.mxu0 0
        %367 = vmatpush1.bf16.msra.mxu0 0
        %368 = vmatprep.subr.bf16.mxu0 0
        %369 = vmatpush1.bf16.msra.mxu0 0
        %370 = vmatprep.subr.bf16.mxu0 0
        %371 = vmatpush1.bf16.msra.mxu0 0
        %372 = vmatprep.subr.bf16.mxu0 0
        %373 = vmatpush1.bf16.msra.mxu0 0
        %374 = vmatprep.mubr.bf16.mxu0 0
        %375 = vmatmul.mubr.bf16.gmra.mrb[0].mxu0 %v336
        %v376 = vpop.f32.mrb[0].mxu0
        %v377 = vadd.f32 %v327, %v376
        %v378 = vpop.f32.mrb[0].mxu0
        %v379 = vpop.f32.mrb[0].mxu0
        %v380 = vadd.f32 %v327, %v379
        %v381 = vpop.f32.mrb[0].mxu0
        %382 = vdwg.mxu0
        %v383 = vmax.f32 %v377, 0.0
        %v384 = vmax.f32 %v380, 0.0
        %v385 = vpack.c.bf16 %v384, %v383
        %v386 = vld [vmem:[%s2] sm:$0xf]
        %v387 = vld [vmem:[%s2 + $0x4] sm:$0xf]
        %v388 = vld [vmem:[%s2 + $0x8] sm:$0xf]
        %v389 = vld [vmem:[%s2 + $0xc] sm:$0xf]
        %v390 = vld [vmem:[%s2 + $0x10] sm:$0xf]
        %v391 = vld [vmem:[%s2 + $0x14] sm:$0xf]
        %v392 = vld [vmem:[%s2 + $0x18] sm:$0xf]
        %v393 = vld [vmem:[%s2 + $0x1c] sm:$0xf]
        %v394 = vld [vmem:[%s5] sm:$0x1]
        %v396 = vlaneseq
        %v397 = vshrl.u32 %v396, 7
        %v398 = vsub.s32 0, %v397
        %v399 = vrot.slane %v394, %v398
        %v409 = vunpack.c.l.b16 %v386
        %v410 = vunpack.c.l.b16 %v387
        %v411 = vunpack.c.l.b16 %v388
        %v412 = vunpack.c.l.b16 %v389
        %v413 = vunpack.c.l.b16 %v390
        %v414 = vunpack.c.l.b16 %v391
        %v415 = vunpack.c.l.b16 %v392
        %v416 = vunpack.c.l.b16 %v393
        %v417 = vpack.c.b16 %v410, %v409
        %v418 = vpack.c.b16 %v412, %v411
        %v419 = vpack.c.b16 %v414, %v413
        %v420 = vpack.c.b16 %v416, %v415
        %vm425 = vcmask 523264
        %v427 = vsel %vm425, %v385, 0
        %429 = vmatprep.subr.bf16.mxu0 0
        %430 = vmatpush1.bf16.msra.mxu0 %v417
        %431 = vmatprep.subr.bf16.mxu0 0
        %432 = vmatpush1.bf16.msra.mxu0 %v418
        %433 = vmatprep.subr.bf16.mxu0 0
        %434 = vmatpush1.bf16.msra.mxu0 %v419
        %435 = vmatprep.subr.bf16.mxu0 0
        %436 = vmatpush1.bf16.msra.mxu0 %v420
        %437 = vmatprep.subr.bf16.mxu0 0
        %438 = vmatpush1.bf16.msra.mxu0 0
        %439 = vmatprep.subr.bf16.mxu0 0
        %440 = vmatpush1.bf16.msra.mxu0 0
        %441 = vmatprep.subr.bf16.mxu0 0
        %442 = vmatpush1.bf16.msra.mxu0 0
        %443 = vmatprep.subr.bf16.mxu0 0
        %444 = vmatpush1.bf16.msra.mxu0 0
        %445 = vmatprep.subr.bf16.mxu0 0
        %446 = vmatpush1.bf16.msra.mxu0 0
        %447 = vmatprep.subr.bf16.mxu0 0
        %448 = vmatpush1.bf16.msra.mxu0 0
        %449 = vmatprep.subr.bf16.mxu0 0
        %450 = vmatpush1.bf16.msra.mxu0 0
        %451 = vmatprep.subr.bf16.mxu0 0
        %452 = vmatpush1.bf16.msra.mxu0 0
        %453 = vmatprep.subr.bf16.mxu0 0
        %454 = vmatpush1.bf16.msra.mxu0 0
        %455 = vmatprep.subr.bf16.mxu0 0
        %456 = vmatpush1.bf16.msra.mxu0 0
        %457 = vmatprep.subr.bf16.mxu0 0
        %458 = vmatpush1.bf16.msra.mxu0 0
        %459 = vmatprep.subr.bf16.mxu0 0
        %460 = vmatpush1.bf16.msra.mxu0 0
        %461 = vmatprep.mubr.bf16.mxu0 0
        %462 = vmatmul.mubr.bf16.gmra.mrb[0].mxu0 %v427
        %v463 = vpop.f32.mrb[0].mxu0
        %v464 = vadd.f32 %v399, %v463
        %v465 = vpop.f32.mrb[0].mxu0
        %v466 = vpop.f32.mrb[0].mxu0
        %v467 = vadd.f32 %v399, %v466
        %v468 = vpop.f32.mrb[0].mxu0
        %469 = vdwg.mxu0
        %v470 = vmax.f32 %v464, 0.0
        %v471 = vmax.f32 %v467, 0.0
        %v472 = vpack.c.bf16 %v471, %v470
        %v473 = vld [vmem:[%s3] sm:$0xff]
        %v474 = vld [vmem:[%s3 + $0x8] sm:$0xff]
        %v475 = vld [vmem:[%s3 + $0x10] sm:$0xff]
        %v476 = vld [vmem:[%s3 + $0x18] sm:$0xff]
        %v477 = vld [vmem:[%s3 + $0x20] sm:$0xff]
        %v478 = vld [vmem:[%s3 + $0x28] sm:$0xff]
        %v479 = vld [vmem:[%s3 + $0x30] sm:$0xff]
        %v480 = vld [vmem:[%s3 + $0x38] sm:$0xff]
        %v481 = vld [vmem:[%s3 + $0x40] sm:$0xff]
        %v482 = vld [vmem:[%s3 + $0x48] sm:$0xff]
        %v483 = vld [vmem:[%s3 + $0x50] sm:$0xff]
        %v484 = vld [vmem:[%s3 + $0x58] sm:$0xff]
        %v485 = vld [vmem:[%s3 + $0x60] sm:$0xff]
        %v486 = vld [vmem:[%s3 + $0x68] sm:$0xff]
        %v487 = vld [vmem:[%s3 + $0x70] sm:$0xff]
        %v488 = vld [vmem:[%s3 + $0x78] sm:$0xff]
        %v489 = vld [vmem:[%s3 + $0x80] sm:$0xff]
        %v490 = vld [vmem:[%s3 + $0x88] sm:$0xff]
        %v491 = vld [vmem:[%s3 + $0x90] sm:$0xff]
        %v492 = vld [vmem:[%s3 + $0x98] sm:$0xff]
        %v493 = vld [vmem:[%s3 + $0xa0] sm:$0xff]
        %v494 = vld [vmem:[%s3 + $0xa8] sm:$0xff]
        %v495 = vld [vmem:[%s3 + $0xb0] sm:$0xff]
        %v496 = vld [vmem:[%s3 + $0xb8] sm:$0xff]
        %v497 = vld [vmem:[%s3 + $0xc0] sm:$0xff]
        %v498 = vld [vmem:[%s3 + $0xc8] sm:$0xff]
        %v499 = vld [vmem:[%s3 + $0xd0] sm:$0xff]
        %v500 = vld [vmem:[%s3 + $0xd8] sm:$0xff]
        %v501 = vld [vmem:[%s3 + $0xe0] sm:$0xff]
        %v502 = vld [vmem:[%s3 + $0xe8] sm:$0xff]
        %v503 = vld [vmem:[%s3 + $0xf0] sm:$0xff]
        %v504 = vld [vmem:[%s3 + $0xf8] sm:$0xff]
        %v505 = vld [vmem:[%s3 + $0x100] sm:$0xff]
        %v506 = vld [vmem:[%s3 + $0x108] sm:$0xff]
        %v507 = vld [vmem:[%s3 + $0x110] sm:$0xff]
        %v508 = vld [vmem:[%s3 + $0x118] sm:$0xff]
        %v509 = vld [vmem:[%s3 + $0x120] sm:$0xff]
        %v510 = vld [vmem:[%s3 + $0x128] sm:$0xff]
        %v511 = vld [vmem:[%s3 + $0x130] sm:$0xff]
        %v512 = vld [vmem:[%s3 + $0x138] sm:$0xff]
        %v513 = vld [vmem:[%s3 + $0x140] sm:$0xff]
        %v514 = vld [vmem:[%s3 + $0x148] sm:$0xff]
        %v515 = vld [vmem:[%s3 + $0x150] sm:$0xff]
        %v516 = vld [vmem:[%s3 + $0x158] sm:$0xff]
        %v517 = vld [vmem:[%s3 + $0x160] sm:$0xff]
        %v518 = vld [vmem:[%s3 + $0x168] sm:$0xff]
        %v519 = vld [vmem:[%s3 + $0x170] sm:$0xff]
        %v520 = vld [vmem:[%s3 + $0x178] sm:$0xff]
        %v521 = vld [vmem:[%s3 + $0x180] sm:$0xff]
        %v522 = vld [vmem:[%s3 + $0x188] sm:$0xff]
        %v523 = vld [vmem:[%s3 + $0x190] sm:$0xff]
        %v524 = vld [vmem:[%s3 + $0x198] sm:$0xff]
        %v525 = vld [vmem:[%s3 + $0x1a0] sm:$0xff]
        %v526 = vld [vmem:[%s3 + $0x1a8] sm:$0xff]
        %v527 = vld [vmem:[%s3 + $0x1b0] sm:$0xff]
        %v528 = vld [vmem:[%s3 + $0x1b8] sm:$0xff]
        %v529 = vld [vmem:[%s3 + $0x1c0] sm:$0xff]
        %v530 = vld [vmem:[%s3 + $0x1c8] sm:$0xff]
        %v531 = vld [vmem:[%s3 + $0x1d0] sm:$0xff]
        %v532 = vld [vmem:[%s3 + $0x1d8] sm:$0xff]
        %v533 = vld [vmem:[%s3 + $0x1e0] sm:$0xff]
        %v534 = vld [vmem:[%s3 + $0x1e8] sm:$0xff]
        %v535 = vld [vmem:[%s3 + $0x1f0] sm:$0xff]
        %v536 = vld [vmem:[%s3 + $0x1f8] sm:$0xff]
        %v537 = vld [vmem:[#allocation2] sm:$0xff]
        %v539 = vlaneseq
        %v540 = vshrl.u32 %v539, 7
        %v541 = vsub.s32 0, %v540
        %v542 = vrot.slane %v537, %v541
        %v543 = vlaneseq
        %v544 = vshrl.u32 %v543, 7
        %v545 = vsub.s32 1, %v544
        %v546 = vrot.slane %v537, %v545
        %v547 = vlaneseq
        %v548 = vshrl.u32 %v547, 7
        %v549 = vsub.s32 2, %v548
        %v550 = vrot.slane %v537, %v549
        %v551 = vlaneseq
        %v552 = vshrl.u32 %v551, 7
        %v553 = vsub.s32 3, %v552
        %v554 = vrot.slane %v537, %v553
        %v555 = vlaneseq
        %v556 = vshrl.u32 %v555, 7
        %v557 = vsub.s32 4, %v556
        %v558 = vrot.slane %v537, %v557
        %v559 = vlaneseq
        %v560 = vshrl.u32 %v559, 7
        %v561 = vsub.s32 5, %v560
        %v562 = vrot.slane %v537, %v561
        %v563 = vlaneseq
        %v564 = vshrl.u32 %v563, 7
        %v565 = vsub.s32 6, %v564
        %v566 = vrot.slane %v537, %v565
        %v567 = vlaneseq
        %v568 = vshrl.u32 %v567, 7
        %v569 = vsub.s32 7, %v568
        %v570 = vrot.slane %v537, %v569
        %v643 = vunpack.c.l.b16 %v473
        %v644 = vunpack.c.h.b16 %v473
        %v645 = vunpack.c.l.b16 %v474
        %v646 = vunpack.c.h.b16 %v474
        %v647 = vunpack.c.l.b16 %v475
        %v648 = vunpack.c.h.b16 %v475
        %v649 = vunpack.c.l.b16 %v476
        %v650 = vunpack.c.h.b16 %v476
        %v651 = vunpack.c.l.b16 %v477
        %v652 = vunpack.c.h.b16 %v477
        %v653 = vunpack.c.l.b16 %v478
        %v654 = vunpack.c.h.b16 %v478
        %v655 = vunpack.c.l.b16 %v479
        %v656 = vunpack.c.h.b16 %v479
        %v657 = vunpack.c.l.b16 %v480
        %v658 = vunpack.c.h.b16 %v480
        %v659 = vunpack.c.l.b16 %v481
        %v660 = vunpack.c.h.b16 %v481
        %v661 = vunpack.c.l.b16 %v482
        %v662 = vunpack.c.h.b16 %v482
        %v663 = vunpack.c.l.b16 %v483
        %v664 = vunpack.c.h.b16 %v483
        %v665 = vunpack.c.l.b16 %v484
        %v666 = vunpack.c.h.b16 %v484
        %v667 = vunpack.c.l.b16 %v485
        %v668 = vunpack.c.h.b16 %v485
        %v669 = vunpack.c.l.b16 %v486
        %v670 = vunpack.c.h.b16 %v486
        %v671 = vunpack.c.l.b16 %v487
        %v672 = vunpack.c.h.b16 %v487
        %v673 = vunpack.c.l.b16 %v488
        %v674 = vunpack.c.h.b16 %v488
        %v675 = vunpack.c.l.b16 %v489
        %v676 = vunpack.c.h.b16 %v489
        %v677 = vunpack.c.l.b16 %v490
        %v678 = vunpack.c.h.b16 %v490
        %v679 = vunpack.c.l.b16 %v491
        %v680 = vunpack.c.h.b16 %v491
        %v681 = vunpack.c.l.b16 %v492
        %v682 = vunpack.c.h.b16 %v492
        %v683 = vunpack.c.l.b16 %v493
        %v684 = vunpack.c.h.b16 %v493
        %v685 = vunpack.c.l.b16 %v494
        %v686 = vunpack.c.h.b16 %v494
        %v687 = vunpack.c.l.b16 %v495
        %v688 = vunpack.c.h.b16 %v495
        %v689 = vunpack.c.l.b16 %v496
        %v690 = vunpack.c.h.b16 %v496
        %v691 = vunpack.c.l.b16 %v497
        %v692 = vunpack.c.h.b16 %v497
        %v693 = vunpack.c.l.b16 %v498
        %v694 = vunpack.c.h.b16 %v498
        %v695 = vunpack.c.l.b16 %v499
        %v696 = vunpack.c.h.b16 %v499
        %v697 = vunpack.c.l.b16 %v500
        %v698 = vunpack.c.h.b16 %v500
        %v699 = vunpack.c.l.b16 %v501
        %v700 = vunpack.c.h.b16 %v501
        %v701 = vunpack.c.l.b16 %v502
        %v702 = vunpack.c.h.b16 %v502
        %v703 = vunpack.c.l.b16 %v503
        %v704 = vunpack.c.h.b16 %v503
        %v705 = vunpack.c.l.b16 %v504
        %v706 = vunpack.c.h.b16 %v504
        %v707 = vunpack.c.l.b16 %v505
        %v708 = vunpack.c.h.b16 %v505
        %v709 = vunpack.c.l.b16 %v506
        %v710 = vunpack.c.h.b16 %v506
        %v711 = vunpack.c.l.b16 %v507
        %v712 = vunpack.c.h.b16 %v507
        %v713 = vunpack.c.l.b16 %v508
        %v714 = vunpack.c.h.b16 %v508
        %v715 = vunpack.c.l.b16 %v509
        %v716 = vunpack.c.h.b16 %v509
        %v717 = vunpack.c.l.b16 %v510
        %v718 = vunpack.c.h.b16 %v510
        %v719 = vunpack.c.l.b16 %v511
        %v720 = vunpack.c.h.b16 %v511
        %v721 = vunpack.c.l.b16 %v512
        %v722 = vunpack.c.h.b16 %v512
        %v723 = vunpack.c.l.b16 %v513
        %v724 = vunpack.c.h.b16 %v513
        %v725 = vunpack.c.l.b16 %v514
        %v726 = vunpack.c.h.b16 %v514
        %v727 = vunpack.c.l.b16 %v515
        %v728 = vunpack.c.h.b16 %v515
        %v729 = vunpack.c.l.b16 %v516
        %v730 = vunpack.c.h.b16 %v516
        %v731 = vunpack.c.l.b16 %v517
        %v732 = vunpack.c.h.b16 %v517
        %v733 = vunpack.c.l.b16 %v518
        %v734 = vunpack.c.h.b16 %v518
        %v735 = vunpack.c.l.b16 %v519
        %v736 = vunpack.c.h.b16 %v519
        %v737 = vunpack.c.l.b16 %v520
        %v738 = vunpack.c.h.b16 %v520
        %v739 = vunpack.c.l.b16 %v521
        %v740 = vunpack.c.h.b16 %v521
        %v741 = vunpack.c.l.b16 %v522
        %v742 = vunpack.c.h.b16 %v522
        %v743 = vunpack.c.l.b16 %v523
        %v744 = vunpack.c.h.b16 %v523
        %v745 = vunpack.c.l.b16 %v524
        %v746 = vunpack.c.h.b16 %v524
        %v747 = vunpack.c.l.b16 %v525
        %v748 = vunpack.c.h.b16 %v525
        %v749 = vunpack.c.l.b16 %v526
        %v750 = vunpack.c.h.b16 %v526
        %v751 = vunpack.c.l.b16 %v527
        %v752 = vunpack.c.h.b16 %v527
        %v753 = vunpack.c.l.b16 %v528
        %v754 = vunpack.c.h.b16 %v528
        %v755 = vunpack.c.l.b16 %v529
        %v756 = vunpack.c.h.b16 %v529
        %v757 = vunpack.c.l.b16 %v530
        %v758 = vunpack.c.h.b16 %v530
        %v759 = vunpack.c.l.b16 %v531
        %v760 = vunpack.c.h.b16 %v531
        %v761 = vunpack.c.l.b16 %v532
        %v762 = vunpack.c.h.b16 %v532
        %v763 = vunpack.c.l.b16 %v533
        %v764 = vunpack.c.h.b16 %v533
        %v765 = vunpack.c.l.b16 %v534
        %v766 = vunpack.c.h.b16 %v534
        %v767 = vunpack.c.l.b16 %v535
        %v768 = vunpack.c.h.b16 %v535
        %v769 = vunpack.c.l.b16 %v536
        %v770 = vunpack.c.h.b16 %v536
        %v771 = vpack.c.b16 %v651, %v643
        %v772 = vpack.c.b16 %v652, %v644
        %v773 = vpack.c.b16 %v653, %v645
        %v774 = vpack.c.b16 %v654, %v646
        %v775 = vpack.c.b16 %v655, %v647
        %v776 = vpack.c.b16 %v656, %v648
        %v777 = vpack.c.b16 %v657, %v649
        %v778 = vpack.c.b16 %v658, %v650
        %v779 = vpack.c.b16 %v667, %v659
        %v780 = vpack.c.b16 %v668, %v660
        %v781 = vpack.c.b16 %v669, %v661
        %v782 = vpack.c.b16 %v670, %v662
        %v783 = vpack.c.b16 %v671, %v663
        %v784 = vpack.c.b16 %v672, %v664
        %v785 = vpack.c.b16 %v673, %v665
        %v786 = vpack.c.b16 %v674, %v666
        %v787 = vpack.c.b16 %v683, %v675
        %v788 = vpack.c.b16 %v684, %v676
        %v789 = vpack.c.b16 %v685, %v677
        %v790 = vpack.c.b16 %v686, %v678
        %v791 = vpack.c.b16 %v687, %v679
        %v792 = vpack.c.b16 %v688, %v680
        %v793 = vpack.c.b16 %v689, %v681
        %v794 = vpack.c.b16 %v690, %v682
        %v795 = vpack.c.b16 %v699, %v691
        %v796 = vpack.c.b16 %v700, %v692
        %v797 = vpack.c.b16 %v701, %v693
        %v798 = vpack.c.b16 %v702, %v694
        %v799 = vpack.c.b16 %v703, %v695
        %v800 = vpack.c.b16 %v704, %v696
        %v801 = vpack.c.b16 %v705, %v697
        %v802 = vpack.c.b16 %v706, %v698
        %v803 = vpack.c.b16 %v715, %v707
        %v804 = vpack.c.b16 %v716, %v708
        %v805 = vpack.c.b16 %v717, %v709
        %v806 = vpack.c.b16 %v718, %v710
        %v807 = vpack.c.b16 %v719, %v711
        %v808 = vpack.c.b16 %v720, %v712
        %v809 = vpack.c.b16 %v721, %v713
        %v810 = vpack.c.b16 %v722, %v714
        %v811 = vpack.c.b16 %v731, %v723
        %v812 = vpack.c.b16 %v732, %v724
        %v813 = vpack.c.b16 %v733, %v725
        %v814 = vpack.c.b16 %v734, %v726
        %v815 = vpack.c.b16 %v735, %v727
        %v816 = vpack.c.b16 %v736, %v728
        %v817 = vpack.c.b16 %v737, %v729
        %v818 = vpack.c.b16 %v738, %v730
        %v819 = vpack.c.b16 %v747, %v739
        %v820 = vpack.c.b16 %v748, %v740
        %v821 = vpack.c.b16 %v749, %v741
        %v822 = vpack.c.b16 %v750, %v742
        %v823 = vpack.c.b16 %v751, %v743
        %v824 = vpack.c.b16 %v752, %v744
        %v825 = vpack.c.b16 %v753, %v745
        %v826 = vpack.c.b16 %v754, %v746
        %v827 = vpack.c.b16 %v763, %v755
        %v828 = vpack.c.b16 %v764, %v756
        %v829 = vpack.c.b16 %v765, %v757
        %v830 = vpack.c.b16 %v766, %v758
        %v831 = vpack.c.b16 %v767, %v759
        %v832 = vpack.c.b16 %v768, %v760
        %v833 = vpack.c.b16 %v769, %v761
        %v834 = vpack.c.b16 %v770, %v762
        %899 = vmatprep.subr.bf16.mxu0 %v772
        %900 = vmatpush1.bf16.msra.mxu0 %v771
        %901 = vmatprep.subr.bf16.mxu0 %v780
        %902 = vmatpush1.bf16.msra.mxu0 %v779
        %903 = vmatprep.subr.bf16.mxu0 %v788
        %904 = vmatpush1.bf16.msra.mxu0 %v787
        %905 = vmatprep.subr.bf16.mxu0 %v796
        %906 = vmatpush1.bf16.msra.mxu0 %v795
        %907 = vmatprep.subr.bf16.mxu0 %v804
        %908 = vmatpush1.bf16.msra.mxu0 %v803
        %909 = vmatprep.subr.bf16.mxu0 %v812
        %910 = vmatpush1.bf16.msra.mxu0 %v811
        %911 = vmatprep.subr.bf16.mxu0 %v820
        %912 = vmatpush1.bf16.msra.mxu0 %v819
        %913 = vmatprep.subr.bf16.mxu0 %v828
        %914 = vmatpush1.bf16.msra.mxu0 %v827
        %915 = vmatprep.subr.bf16.mxu0 0
        %916 = vmatpush1.bf16.msra.mxu0 0
        %917 = vmatprep.subr.bf16.mxu0 0
        %918 = vmatpush1.bf16.msra.mxu0 0
        %919 = vmatprep.subr.bf16.mxu0 0
        %920 = vmatpush1.bf16.msra.mxu0 0
        %921 = vmatprep.subr.bf16.mxu0 0
        %922 = vmatpush1.bf16.msra.mxu0 0
        %923 = vmatprep.subr.bf16.mxu0 0
        %924 = vmatpush1.bf16.msra.mxu0 0
        %925 = vmatprep.subr.bf16.mxu0 0
        %926 = vmatpush1.bf16.msra.mxu0 0
        %927 = vmatprep.subr.bf16.mxu0 0
        %928 = vmatpush1.bf16.msra.mxu0 0
        %929 = vmatprep.subr.bf16.mxu0 0
        %930 = vmatpush1.bf16.msra.mxu0 0
        %931 = vmatprep.mubr.bf16.mxu0 0
        %932 = vmatmul.mubr.bf16.gmra.mrb[0].mxu0 %v472
        %v933 = vpop.f32.mrb[0].mxu0
        %v934 = vadd.f32 %v542, %v933
        %v935 = vpop.f32.mrb[0].mxu0
        %v936 = vadd.f32 %v546, %v935
        %v937 = vpop.f32.mrb[0].mxu0
        %v938 = vadd.f32 %v542, %v937
        %v939 = vpop.f32.mrb[0].mxu0
        %v940 = vadd.f32 %v546, %v939
        %941 = vdwg.mxu0
        %942 = vmatprep.subr.bf16.mxu0 %v774
        %943 = vmatpush1.bf16.msra.mxu0 %v773
        %944 = vmatprep.subr.bf16.mxu0 %v782
        %945 = vmatpush1.bf16.msra.mxu0 %v781
        %946 = vmatprep.subr.bf16.mxu0 %v790
        %947 = vmatpush1.bf16.msra.mxu0 %v789
        %948 = vmatprep.subr.bf16.mxu0 %v798
        %949 = vmatpush1.bf16.msra.mxu0 %v797
        %950 = vmatprep.subr.bf16.mxu0 %v806
        %951 = vmatpush1.bf16.msra.mxu0 %v805
        %952 = vmatprep.subr.bf16.mxu0 %v814
        %953 = vmatpush1.bf16.msra.mxu0 %v813
        %954 = vmatprep.subr.bf16.mxu0 %v822
        %955 = vmatpush1.bf16.msra.mxu0 %v821
        %956 = vmatprep.subr.bf16.mxu0 %v830
        %957 = vmatpush1.bf16.msra.mxu0 %v829
        %958 = vmatprep.subr.bf16.mxu0 0
        %959 = vmatpush1.bf16.msra.mxu0 0
        %960 = vmatprep.subr.bf16.mxu0 0
        %961 = vmatpush1.bf16.msra.mxu0 0
        %962 = vmatprep.subr.bf16.mxu0 0
        %963 = vmatpush1.bf16.msra.mxu0 0
        %964 = vmatprep.subr.bf16.mxu0 0
        %965 = vmatpush1.bf16.msra.mxu0 0
        %966 = vmatprep.subr.bf16.mxu0 0
        %967 = vmatpush1.bf16.msra.mxu0 0
        %968 = vmatprep.subr.bf16.mxu0 0
        %969 = vmatpush1.bf16.msra.mxu0 0
        %970 = vmatprep.subr.bf16.mxu0 0
        %971 = vmatpush1.bf16.msra.mxu0 0
        %972 = vmatprep.subr.bf16.mxu0 0
        %973 = vmatpush1.bf16.msra.mxu0 0
        %974 = vmatprep.mubr.bf16.mxu0 0
        %975 = vmatmul.mubr.bf16.gmra.mrb[0].mxu0 %v472
        %v976 = vpop.f32.mrb[0].mxu0
        %v977 = vadd.f32 %v550, %v976
        %v978 = vpop.f32.mrb[0].mxu0
        %v979 = vadd.f32 %v554, %v978
        %v980 = vpop.f32.mrb[0].mxu0
        %v981 = vadd.f32 %v550, %v980
        %v982 = vpop.f32.mrb[0].mxu0
        %v983 = vadd.f32 %v554, %v982
        %984 = vdwg.mxu0
        %985 = vmatprep.subr.bf16.mxu0 %v776
        %986 = vmatpush1.bf16.msra.mxu0 %v775
        %987 = vmatprep.subr.bf16.mxu0 %v784
        %988 = vmatpush1.bf16.msra.mxu0 %v783
        %989 = vmatprep.subr.bf16.mxu0 %v792
        %990 = vmatpush1.bf16.msra.mxu0 %v791
        %991 = vmatprep.subr.bf16.mxu0 %v800
        %992 = vmatpush1.bf16.msra.mxu0 %v799
        %993 = vmatprep.subr.bf16.mxu0 %v808
        %994 = vmatpush1.bf16.msra.mxu0 %v807
        %995 = vmatprep.subr.bf16.mxu0 %v816
        %996 = vmatpush1.bf16.msra.mxu0 %v815
        %997 = vmatprep.subr.bf16.mxu0 %v824
        %998 = vmatpush1.bf16.msra.mxu0 %v823
        %999 = vmatprep.subr.bf16.mxu0 %v832
        %1000 = vmatpush1.bf16.msra.mxu0 %v831
        %1001 = vmatprep.subr.bf16.mxu0 0
        %1002 = vmatpush1.bf16.msra.mxu0 0
        %1003 = vmatprep.subr.bf16.mxu0 0
        %1004 = vmatpush1.bf16.msra.mxu0 0
        %1005 = vmatprep.subr.bf16.mxu0 0
        %1006 = vmatpush1.bf16.msra.mxu0 0
        %1007 = vmatprep.subr.bf16.mxu0 0
        %1008 = vmatpush1.bf16.msra.mxu0 0
        %1009 = vmatprep.subr.bf16.mxu0 0
        %1010 = vmatpush1.bf16.msra.mxu0 0
        %1011 = vmatprep.subr.bf16.mxu0 0
        %1012 = vmatpush1.bf16.msra.mxu0 0
        %1013 = vmatprep.subr.bf16.mxu0 0
        %1014 = vmatpush1.bf16.msra.mxu0 0
        %1015 = vmatprep.subr.bf16.mxu0 0
        %1016 = vmatpush1.bf16.msra.mxu0 0
        %1017 = vmatprep.mubr.bf16.mxu0 0
        %1018 = vmatmul.mubr.bf16.gmra.mrb[0].mxu0 %v472
        %v1019 = vpop.f32.mrb[0].mxu0
        %v1020 = vadd.f32 %v558, %v1019
        %v1021 = vpop.f32.mrb[0].mxu0
        %v1022 = vadd.f32 %v562, %v1021
        %v1023 = vpop.f32.mrb[0].mxu0
        %v1024 = vadd.f32 %v558, %v1023
        %v1025 = vpop.f32.mrb[0].mxu0
        %v1026 = vadd.f32 %v562, %v1025
        %1027 = vdwg.mxu0
        %1028 = vmatprep.subr.bf16.mxu0 %v778
        %1029 = vmatpush1.bf16.msra.mxu0 %v777
        %1030 = vmatprep.subr.bf16.mxu0 %v786
        %1031 = vmatpush1.bf16.msra.mxu0 %v785
        %1032 = vmatprep.subr.bf16.mxu0 %v794
        %1033 = vmatpush1.bf16.msra.mxu0 %v793
        %1034 = vmatprep.subr.bf16.mxu0 %v802
        %1035 = vmatpush1.bf16.msra.mxu0 %v801
        %1036 = vmatprep.subr.bf16.mxu0 %v810
        %1037 = vmatpush1.bf16.msra.mxu0 %v809
        %1038 = vmatprep.subr.bf16.mxu0 %v818
        %1039 = vmatpush1.bf16.msra.mxu0 %v817
        %1040 = vmatprep.subr.bf16.mxu0 %v826
        %1041 = vmatpush1.bf16.msra.mxu0 %v825
        %1042 = vmatprep.subr.bf16.mxu0 %v834
        %1043 = vmatpush1.bf16.msra.mxu0 %v833
        %1044 = vmatprep.subr.bf16.mxu0 0
        %1045 = vmatpush1.bf16.msra.mxu0 0
        %1046 = vmatprep.subr.bf16.mxu0 0
        %1047 = vmatpush1.bf16.msra.mxu0 0
        %1048 = vmatprep.subr.bf16.mxu0 0
        %1049 = vmatpush1.bf16.msra.mxu0 0
        %1050 = vmatprep.subr.bf16.mxu0 0
        %1051 = vmatpush1.bf16.msra.mxu0 0
        %1052 = vmatprep.subr.bf16.mxu0 0
        %1053 = vmatpush1.bf16.msra.mxu0 0
        %1054 = vmatprep.subr.bf16.mxu0 0
        %1055 = vmatpush1.bf16.msra.mxu0 0
        %1056 = vmatprep.subr.bf16.mxu0 0
        %1057 = vmatpush1.bf16.msra.mxu0 0
        %1058 = vmatprep.subr.bf16.mxu0 0
        %1059 = vmatpush1.bf16.msra.mxu0 0
        %1060 = vmatprep.mubr.bf16.mxu0 0
        %1061 = vmatmul.mubr.bf16.gmra.mrb[0].mxu0 %v472
        %v1062 = vpop.f32.mrb[0].mxu0
        %v1063 = vadd.f32 %v566, %v1062
        %v1064 = vpop.f32.mrb[0].mxu0
        %v1065 = vadd.f32 %v570, %v1064
        %v1066 = vpop.f32.mrb[0].mxu0
        %v1067 = vadd.f32 %v566, %v1066
        %v1068 = vpop.f32.mrb[0].mxu0
        %v1069 = vadd.f32 %v570, %v1068
        %1070 = vdwg.mxu0
        %v1071 = vmax.f32 %v934, 0.0
        %v1072 = vmax.f32 %v936, 0.0
        %v1073 = vmax.f32 %v977, 0.0
        %v1074 = vmax.f32 %v979, 0.0
        %v1075 = vmax.f32 %v1020, 0.0
        %v1076 = vmax.f32 %v1022, 0.0
        %v1077 = vmax.f32 %v1063, 0.0
        %v1078 = vmax.f32 %v1065, 0.0
        %v1079 = vmax.f32 %v938, 0.0
        %v1080 = vmax.f32 %v940, 0.0
        %v1081 = vmax.f32 %v981, 0.0
        %v1082 = vmax.f32 %v983, 0.0
        %v1083 = vmax.f32 %v1024, 0.0
        %v1084 = vmax.f32 %v1026, 0.0
        %v1085 = vmax.f32 %v1067, 0.0
        %v1086 = vmax.f32 %v1069, 0.0
        %v1087 = vmax.f32 %v1071, %v1079
        %v1088 = vrot.slane %v1087, 4
        %v1089 = vmax.f32 %v1087, %v1088
        %v1090 = vrot.slane %v1089, 2
        %v1091 = vmax.f32 %v1089, %v1090
        %v1092 = vrot.slane %v1091, 1
        %v1093 = vmax.f32 %v1091, %v1092
        %v1094 = vmax.f32 %v1072, %v1080
        %v1095 = vrot.slane %v1094, 4
        %v1096 = vmax.f32 %v1094, %v1095
        %v1097 = vrot.slane %v1096, 2
        %v1098 = vmax.f32 %v1096, %v1097
        %v1099 = vrot.slane %v1098, 1
        %v1100 = vmax.f32 %v1098, %v1099
        %v1101 = vmax.f32 %v1073, %v1081
        %v1102 = vrot.slane %v1101, 4
        %v1103 = vmax.f32 %v1101, %v1102
        %v1104 = vrot.slane %v1103, 2
        %v1105 = vmax.f32 %v1103, %v1104
        %v1106 = vrot.slane %v1105, 1
        %v1107 = vmax.f32 %v1105, %v1106
        %v1108 = vmax.f32 %v1074, %v1082
        %v1109 = vrot.slane %v1108, 4
        %v1110 = vmax.f32 %v1108, %v1109
        %v1111 = vrot.slane %v1110, 2
        %v1112 = vmax.f32 %v1110, %v1111
        %v1113 = vrot.slane %v1112, 1
        %v1114 = vmax.f32 %v1112, %v1113
        %v1115 = vmax.f32 %v1075, %v1083
        %v1116 = vrot.slane %v1115, 4
        %v1117 = vmax.f32 %v1115, %v1116
        %v1118 = vrot.slane %v1117, 2
        %v1119 = vmax.f32 %v1117, %v1118
        %v1120 = vrot.slane %v1119, 1
        %v1121 = vmax.f32 %v1119, %v1120
        %v1122 = vmax.f32 %v1076, %v1084
        %v1123 = vrot.slane %v1122, 4
        %v1124 = vmax.f32 %v1122, %v1123
        %v1125 = vrot.slane %v1124, 2
        %v1126 = vmax.f32 %v1124, %v1125
        %v1127 = vrot.slane %v1126, 1
        %v1128 = vmax.f32 %v1126, %v1127
        %v1129 = vmax.f32 %v1077, %v1085
        %v1130 = vrot.slane %v1129, 4
        %v1131 = vmax.f32 %v1129, %v1130
        %v1132 = vrot.slane %v1131, 2
        %v1133 = vmax.f32 %v1131, %v1132
        %v1134 = vrot.slane %v1133, 1
        %v1135 = vmax.f32 %v1133, %v1134
        %v1136 = vmax.f32 %v1078, %v1086
        %v1137 = vrot.slane %v1136, 4
        %v1138 = vmax.f32 %v1136, %v1137
        %v1139 = vrot.slane %v1138, 2
        %v1140 = vmax.f32 %v1138, %v1139
        %v1141 = vrot.slane %v1140, 1
        %v1142 = vmax.f32 %v1140, %v1141
        %p1143 = scmp.eq.s32.totalorder %s24, 0
        // Predicated region
        $region53: #{_lambda_.2} parent=47 // pred_check
          %p1144 = pneg %p1143
        $region54: #{_lambda_.2} parent=47 // pred_check_branch
          %1146 = sbr.rel (%p1144) target = $region56
        $region55: #{_lambda_.2} parent=47 // pred_region
          %v1155 = vcombine.low %v1093, %v1100
          %v1156 = vcombine.low %v1107, %v1114
          %v1157 = vcombine.low %v1121, %v1128
          %v1158 = vcombine.low %v1135, %v1142
          %v1160 = vunpack.c.l.s4 1966171168
          %v1161 = vunpack.c.0.s8 %v1160
          %v1162 = vlaneseq
          %v1163 = vshrl.u32 %v1162, 7
          %v1164 = vsub.s32 %v1161, %v1163
          %v1165 = vrot.slane %v1155, %v1164
          %v1167 = vunpack.c.l.s4 1966171168
          %v1168 = vunpack.c.0.s8 %v1167
          %v1169 = vlaneseq
          %v1170 = vshrl.u32 %v1169, 7
          %v1171 = vsub.s32 %v1168, %v1170
          %v1172 = vrot.slane %v1156, %v1171
          %v1174 = vunpack.c.l.s4 1966171168
          %v1175 = vunpack.c.0.s8 %v1174
          %v1176 = vlaneseq
          %v1177 = vshrl.u32 %v1176, 7
          %v1178 = vsub.s32 %v1175, %v1177
          %v1179 = vrot.slane %v1157, %v1178
          %v1181 = vunpack.c.l.s4 1966171168
          %v1182 = vunpack.c.0.s8 %v1181
          %v1183 = vlaneseq
          %v1184 = vshrl.u32 %v1183, 7
          %v1185 = vsub.s32 %v1182, %v1184
          %v1186 = vrot.slane %v1158, %v1185
          %v1187 = vcombine.low %v1165, %v1172
          %v1188 = vcombine.low %v1179, %v1186
          %v1190 = vunpack.c.l.s4 1966171168
          %v1191 = vunpack.c.0.s8 %v1190
          %v1192 = vlaneseq
          %v1193 = vshrl.u32 %v1192, 7
          %v1194 = vsub.s32 %v1191, %v1193
          %v1195 = vrot.slane %v1187, %v1194
          %v1197 = vunpack.c.l.s4 1966171168
          %v1198 = vunpack.c.0.s8 %v1197
          %v1199 = vlaneseq
          %v1200 = vshrl.u32 %v1199, 7
          %v1201 = vsub.s32 %v1198, %v1200
          %v1202 = vrot.slane %v1188, %v1201
          %v1203 = vcombine.low %v1195, %v1202
          %1205 = vst [vmem:[%s317] sm:$0xff] %v1203
        $region56: #{_lambda_.2} parent=47 // pred_fallthru
          _
        %p1206 = scmp.gt.s32.totalorder %s24, 0
        // Predicated region
        $region57: #{_lambda_.2} parent=47 // pred_check
          %p1207 = pneg %p1206
        $region58: #{_lambda_.2} parent=47 // pred_check_branch
          %1209 = sbr.rel (%p1207) target = $region60
        $region59: #{_lambda_.2} parent=47 // pred_region
          %v1210 = vld [vmem:[%s317] sm:$0xff]
          %v1219 = vcombine.low %v1093, %v1100
          %v1220 = vcombine.low %v1107, %v1114
          %v1221 = vcombine.low %v1121, %v1128
          %v1222 = vcombine.low %v1135, %v1142
          %v1224 = vunpack.c.l.s4 1966171168
          %v1225 = vunpack.c.0.s8 %v1224
          %v1226 = vlaneseq
          %v1227 = vshrl.u32 %v1226, 7
          %v1228 = vsub.s32 %v1225, %v1227
          %v1229 = vrot.slane %v1219, %v1228
          %v1231 = vunpack.c.l.s4 1966171168
          %v1232 = vunpack.c.0.s8 %v1231
          %v1233 = vlaneseq
          %v1234 = vshrl.u32 %v1233, 7
          %v1235 = vsub.s32 %v1232, %v1234
          %v1236 = vrot.slane %v1220, %v1235
          %v1238 = vunpack.c.l.s4 1966171168
          %v1239 = vunpack.c.0.s8 %v1238
          %v1240 = vlaneseq
          %v1241 = vshrl.u32 %v1240, 7
          %v1242 = vsub.s32 %v1239, %v1241
          %v1243 = vrot.slane %v1221, %v1242
          %v1245 = vunpack.c.l.s4 1966171168
          %v1246 = vunpack.c.0.s8 %v1245
          %v1247 = vlaneseq
          %v1248 = vshrl.u32 %v1247, 7
          %v1249 = vsub.s32 %v1246, %v1248
          %v1250 = vrot.slane %v1222, %v1249
          %v1251 = vcombine.low %v1229, %v1236
          %v1252 = vcombine.low %v1243, %v1250
          %v1254 = vunpack.c.l.s4 1966171168
          %v1255 = vunpack.c.0.s8 %v1254
          %v1256 = vlaneseq
          %v1257 = vshrl.u32 %v1256, 7
          %v1258 = vsub.s32 %v1255, %v1257
          %v1259 = vrot.slane %v1251, %v1258
          %v1261 = vunpack.c.l.s4 1966171168
          %v1262 = vunpack.c.0.s8 %v1261
          %v1263 = vlaneseq
          %v1264 = vshrl.u32 %v1263, 7
          %v1265 = vsub.s32 %v1262, %v1264
          %v1266 = vrot.slane %v1252, %v1265
          %v1267 = vcombine.low %v1259, %v1266
          %v1269 = vmax.f32 %v1210, %v1267
          %1270 = vst [vmem:[%s317] sm:$0xff] %v1269
        $region60: #{_lambda_.2} parent=47 // pred_fallthru
          _
        %p1271 = scmp.lt.s32.totalorder %s23, 1
        %s1272 = scalar_select %p1271, %s23, 1
        %s1273 = smul.addr %s1272, 8
        %s1274 = scalar_lea.vmem %s7, %s1273
        // Predicated region
        $region61: #{_lambda_.2} parent=47 // pred_check
          %p1275 = pneg %p203
        $region62: #{_lambda_.2} parent=47 // pred_check_branch
          %1277 = sbr.rel (%p1275) target = $region64
        $region63: #{_lambda_.2} parent=47 // pred_region
          _
        $region64: #{_lambda_.2} parent=47 // pred_fallthru
          _
      $region48: #{_lambda_.2} parent=5 // pred_fallthru
        _
      %p1278 = scmp.le.s32.totalorder 2, %s14
      // Predicated region
      $region65: #{_lambda_.2} parent=5 // pred_check
        %p1279 = pneg %p1278
      $region66: #{_lambda_.2} parent=5 // pred_check_branch
        %1281 = sbr.rel (%p1279) target = $region68
      $region67: #{_lambda_.2} parent=5 // pred_region
        %s1282 = ssub.s32 %s14, 2
        // Predicated region
        $region69: #{_lambda_.2} parent=67 // pred_check
          %p1283 = pneg %p209
        $region70: #{_lambda_.2} parent=67 // pred_check_branch
          %1285 = sbr.rel (%p1283) target = $region72
        $region71: #{_lambda_.2} parent=67 // pred_region
          %p1286 = scmp.lt.s32.totalorder %s25, 1
          %s1287 = scalar_select %p1286, %s25, 1
          %s1288 = smul.addr %s1287, 8
          %s1289 = scalar_lea.vmem %s7, %s1288
        $region72: #{_lambda_.2} parent=67 // pred_fallthru
          _
      $region68: #{_lambda_.2} parent=5 // pred_fallthru
        _
    $region6: #{_lambda_.2} parent=1 // loop_footer
      %s18 = sadd.s32 1, %s14
    $region7: #{_lambda_.2} parent=1 // loop_footer_branch
      %13 = sbr.rel target = $region3
    $region8: #{_lambda_.2} parent=1 // loop_exit
      _
    %1290 = vsyncpa [#allocation3], 1
    %s1291 = scalar_lea.sflag [#allocation3], 1
    %1292 = vsyncpa %s1291, 1

// kernel: _lambda_.3
$region0: #{_lambda_.3}
  #allocation0 [shape = 'u32[]', space=smem, size = 0x4, offset = 0x4, fixed_abs, tag = 'smem constant byte address 0x4 - core index']
  #allocation1 [shape = 'u32[144,128]{1,0:T(1,128)}', space=vmem, size = 0x12000, scoped, tag = 'internal scratch']
  %s0 = inlined_call_operand.vmem [shape: f32[2,1024], index: 0, kind: input, shape index: {}]
  %s1 = inlined_call_operand.vmem [shape: bf16[1024,512], index: 1, kind: input, shape index: {}]
  %s2 = inlined_call_operand.vmem [shape: f32[1,512], index: 2, kind: input, shape index: {}]
  %s3 = inlined_call_operand.vmem [shape: bf16[512,256], index: 3, kind: input, shape index: {}]
  %s4 = inlined_call_operand.vmem [shape: f32[1,256], index: 4, kind: input, shape index: {}]
  %s5 = inlined_call_operand.vmem [shape: bf16[256,16], index: 5, kind: input, shape index: {}]
  %s6 = inlined_call_operand.vmem [shape: f32[1,16], index: 6, kind: input, shape index: {}]
  %s7 = inlined_call_operand.vmem [shape: f32[2,16], index: 7, kind: output, shape index: {}]
  %s8 = sld [smem:[#allocation0]]
  $region38: #{_lambda_.3} parent=0
    _
  %s10 = ssub.s32 1, %s8
  %s11 = scalar_select 0, %s10, %s8
  // Predicated region
  $region2: #{_lambda_.3} parent=0 // pred_check
    _
  $region3: #{_lambda_.3} parent=0 // pred_check_branch
    %13 = sbr.rel (0) target = $region5
  $region4: #{_lambda_.3} parent=0 // pred_region
    _
  $region5: #{_lambda_.3} parent=0 // pred_fallthru
    _
  // Predicated region
  $region6: #{_lambda_.3} parent=0 // pred_check
    _
  $region7: #{_lambda_.3} parent=0 // pred_check_branch
    %15 = sbr.rel (0) target = $region9
  $region8: #{_lambda_.3} parent=0 // pred_region
    _
  $region9: #{_lambda_.3} parent=0 // pred_fallthru
    _
  // Predicated region
  $region10: #{_lambda_.3} parent=0 // pred_check
    _
  $region11: #{_lambda_.3} parent=0 // pred_check_branch
    %17 = sbr.rel (0) target = $region13
  $region12: #{_lambda_.3} parent=0 // pred_region
    _
  $region13: #{_lambda_.3} parent=0 // pred_fallthru
    _
  // Predicated region
  $region14: #{_lambda_.3} parent=0 // pred_check
    _
  $region15: #{_lambda_.3} parent=0 // pred_check_branch
    %19 = sbr.rel (0) target = $region17
  $region16: #{_lambda_.3} parent=0 // pred_region
    _
  $region17: #{_lambda_.3} parent=0 // pred_fallthru
    _
  // Predicated region
  $region18: #{_lambda_.3} parent=0 // pred_check
    _
  $region19: #{_lambda_.3} parent=0 // pred_check_branch
    %21 = sbr.rel (0) target = $region21
  $region20: #{_lambda_.3} parent=0 // pred_region
    _
  $region21: #{_lambda_.3} parent=0 // pred_fallthru
    _
  // Predicated region
  $region22: #{_lambda_.3} parent=0 // pred_check
    _
  $region23: #{_lambda_.3} parent=0 // pred_check_branch
    %23 = sbr.rel (0) target = $region25
  $region24: #{_lambda_.3} parent=0 // pred_region
    _
  $region25: #{_lambda_.3} parent=0 // pred_fallthru
    _
  // Predicated region
  $region26: #{_lambda_.3} parent=0 // pred_check
    _
  $region27: #{_lambda_.3} parent=0 // pred_check_branch
    %25 = sbr.rel (0) target = $region29
  $region28: #{_lambda_.3} parent=0 // pred_region
    _
  $region29: #{_lambda_.3} parent=0 // pred_fallthru
    _
  %v27 = vld [vmem:[%s0] sm:$0xff]
  %v28 = vld [vmem:[%s0 + $0x8] sm:$0xff]
  %v31 = vcombine.high %v27, %v27
  %v33 = vunpack.c.l.s4 1983009808
  %v34 = vunpack.c.0.s8 %v33
  %v35 = vlaneseq
  %v36 = vshrl.u32 %v35, 7
  %v37 = vsub.s32 %v34, %v36
  %v38 = vrot.slane %v27, %v37
  %v40 = vunpack.c.l.s4 1983009808
  %v41 = vunpack.c.0.s8 %v40
  %v42 = vlaneseq
  %v43 = vshrl.u32 %v42, 7
  %v44 = vsub.s32 %v41, %v43
  %v45 = vrot.slane %v31, %v44
  %v46 = vcombine.high %v38, %v38
  %v47 = vcombine.high %v45, %v45
  %v48 = vcombine.high %v28, %v28
  %v50 = vunpack.c.l.s4 1983009808
  %v51 = vunpack.c.0.s8 %v50
  %v52 = vlaneseq
  %v53 = vshrl.u32 %v52, 7
  %v54 = vsub.s32 %v51, %v53
  %v55 = vrot.slane %v28, %v54
  %v57 = vunpack.c.l.s4 1983009808
  %v58 = vunpack.c.0.s8 %v57
  %v59 = vlaneseq
  %v60 = vshrl.u32 %v59, 7
  %v61 = vsub.s32 %v58, %v60
  %v62 = vrot.slane %v48, %v61
  %v63 = vcombine.high %v55, %v55
  %v64 = vcombine.high %v62, %v62
  %v73 = vpack.c.bf16 %v38, %v38
  %v74 = vpack.c.bf16 %v46, %v46
  %v75 = vpack.c.bf16 %v45, %v45
  %v76 = vpack.c.bf16 %v47, %v47
  %v77 = vpack.c.bf16 %v55, %v55
  %v78 = vpack.c.bf16 %v63, %v63
  %v79 = vpack.c.bf16 %v62, %v62
  %v80 = vpack.c.bf16 %v64, %v64
  %v81 = vld [vmem:[%s1] sm:$0xff]
  %v82 = vld [vmem:[%s1 + $0x8] sm:$0xff]
  %v83 = vld [vmem:[%s1 + $0x10] sm:$0xff]
  %v84 = vld [vmem:[%s1 + $0x18] sm:$0xff]
  %v85 = vld [vmem:[%s1 + $0x20] sm:$0xff]
  %v86 = vld [vmem:[%s1 + $0x28] sm:$0xff]
  %v87 = vld [vmem:[%s1 + $0x30] sm:$0xff]
  %v88 = vld [vmem:[%s1 + $0x38] sm:$0xff]
  %v89 = vld [vmem:[%s1 + $0x40] sm:$0xff]
  %v90 = vld [vmem:[%s1 + $0x48] sm:$0xff]
  %v91 = vld [vmem:[%s1 + $0x50] sm:$0xff]
  %v92 = vld [vmem:[%s1 + $0x58] sm:$0xff]
  %v93 = vld [vmem:[%s1 + $0x60] sm:$0xff]
  %v94 = vld [vmem:[%s1 + $0x68] sm:$0xff]
  %v95 = vld [vmem:[%s1 + $0x70] sm:$0xff]
  %v96 = vld [vmem:[%s1 + $0x78] sm:$0xff]
  %v97 = vld [vmem:[%s1 + $0x80] sm:$0xff]
  %v98 = vld [vmem:[%s1 + $0x88] sm:$0xff]
  %v99 = vld [vmem:[%s1 + $0x90] sm:$0xff]
  %v100 = vld [vmem:[%s1 + $0x98] sm:$0xff]
  %v101 = vld [vmem:[%s1 + $0xa0] sm:$0xff]
  %v102 = vld [vmem:[%s1 + $0xa8] sm:$0xff]
  %v103 = vld [vmem:[%s1 + $0xb0] sm:$0xff]
  %v104 = vld [vmem:[%s1 + $0xb8] sm:$0xff]
  %v105 = vld [vmem:[%s1 + $0xc0] sm:$0xff]
  %v106 = vld [vmem:[%s1 + $0xc8] sm:$0xff]
  %v107 = vld [vmem:[%s1 + $0xd0] sm:$0xff]
  %v108 = vld [vmem:[%s1 + $0xd8] sm:$0xff]
  %v109 = vld [vmem:[%s1 + $0xe0] sm:$0xff]
  %v110 = vld [vmem:[%s1 + $0xe8] sm:$0xff]
  %v111 = vld [vmem:[%s1 + $0xf0] sm:$0xff]
  %v112 = vld [vmem:[%s1 + $0xf8] sm:$0xff]
  %v113 = vld [vmem:[%s1 + $0x100] sm:$0xff]
  %v114 = vld [vmem:[%s1 + $0x108] sm:$0xff]
  %v115 = vld [vmem:[%s1 + $0x110] sm:$0xff]
  %v116 = vld [vmem:[%s1 + $0x118] sm:$0xff]
  %v117 = vld [vmem:[%s1 + $0x120] sm:$0xff]
  %v118 = vld [vmem:[%s1 + $0x128] sm:$0xff]
  %v119 = vld [vmem:[%s1 + $0x130] sm:$0xff]
  %v120 = vld [vmem:[%s1 + $0x138] sm:$0xff]
  %v121 = vld [vmem:[%s1 + $0x140] sm:$0xff]
  %v122 = vld [vmem:[%s1 + $0x148] sm:$0xff]
  %v123 = vld [vmem:[%s1 + $0x150] sm:$0xff]
  %v124 = vld [vmem:[%s1 + $0x158] sm:$0xff]
  %v125 = vld [vmem:[%s1 + $0x160] sm:$0xff]
  %v126 = vld [vmem:[%s1 + $0x168] sm:$0xff]
  %v127 = vld [vmem:[%s1 + $0x170] sm:$0xff]
  %v128 = vld [vmem:[%s1 + $0x178] sm:$0xff]
  %v129 = vld [vmem:[%s1 + $0x180] sm:$0xff]
  %v130 = vld [vmem:[%s1 + $0x188] sm:$0xff]
  %v131 = vld [vmem:[%s1 + $0x190] sm:$0xff]
  %v132 = vld [vmem:[%s1 + $0x198] sm:$0xff]
  %v133 = vld [vmem:[%s1 + $0x1a0] sm:$0xff]
  %v134 = vld [vmem:[%s1 + $0x1a8] sm:$0xff]
  %v135 = vld [vmem:[%s1 + $0x1b0] sm:$0xff]
  %v136 = vld [vmem:[%s1 + $0x1b8] sm:$0xff]
  %v137 = vld [vmem:[%s1 + $0x1c0] sm:$0xff]
  %v138 = vld [vmem:[%s1 + $0x1c8] sm:$0xff]
  %v139 = vld [vmem:[%s1 + $0x1d0] sm:$0xff]
  %v140 = vld [vmem:[%s1 + $0x1d8] sm:$0xff]
  %v141 = vld [vmem:[%s1 + $0x1e0] sm:$0xff]
  %v142 = vld [vmem:[%s1 + $0x1e8] sm:$0xff]
  %v143 = vld [vmem:[%s1 + $0x1f0] sm:$0xff]
  %v144 = vld [vmem:[%s1 + $0x1f8] sm:$0xff]
  %v145 = vld [vmem:[%s1 + $0x200] sm:$0xff]
  %v146 = vld [vmem:[%s1 + $0x208] sm:$0xff]
  %v147 = vld [vmem:[%s1 + $0x210] sm:$0xff]
  %v148 = vld [vmem:[%s1 + $0x218] sm:$0xff]
  %v149 = vld [vmem:[%s1 + $0x220] sm:$0xff]
  %v150 = vld [vmem:[%s1 + $0x228] sm:$0xff]
  %v151 = vld [vmem:[%s1 + $0x230] sm:$0xff]
  %v152 = vld [vmem:[%s1 + $0x238] sm:$0xff]
  %v153 = vld [vmem:[%s1 + $0x240] sm:$0xff]
  %v154 = vld [vmem:[%s1 + $0x248] sm:$0xff]
  %v155 = vld [vmem:[%s1 + $0x250] sm:$0xff]
  %v156 = vld [vmem:[%s1 + $0x258] sm:$0xff]
  %v157 = vld [vmem:[%s1 + $0x260] sm:$0xff]
  %v158 = vld [vmem:[%s1 + $0x268] sm:$0xff]
  %v159 = vld [vmem:[%s1 + $0x270] sm:$0xff]
  %v160 = vld [vmem:[%s1 + $0x278] sm:$0xff]
  %v161 = vld [vmem:[%s1 + $0x280] sm:$0xff]
  %v162 = vld [vmem:[%s1 + $0x288] sm:$0xff]
  %v163 = vld [vmem:[%s1 + $0x290] sm:$0xff]
  %v164 = vld [vmem:[%s1 + $0x298] sm:$0xff]
  %v165 = vld [vmem:[%s1 + $0x2a0] sm:$0xff]
  %v166 = vld [vmem:[%s1 + $0x2a8] sm:$0xff]
  %v167 = vld [vmem:[%s1 + $0x2b0] sm:$0xff]
  %v168 = vld [vmem:[%s1 + $0x2b8] sm:$0xff]
  %v169 = vld [vmem:[%s1 + $0x2c0] sm:$0xff]
  %v170 = vld [vmem:[%s1 + $0x2c8] sm:$0xff]
  %v171 = vld [vmem:[%s1 + $0x2d0] sm:$0xff]
  %v172 = vld [vmem:[%s1 + $0x2d8] sm:$0xff]
  %v173 = vld [vmem:[%s1 + $0x2e0] sm:$0xff]
  %v174 = vld [vmem:[%s1 + $0x2e8] sm:$0xff]
  %v175 = vld [vmem:[%s1 + $0x2f0] sm:$0xff]
  %v176 = vld [vmem:[%s1 + $0x2f8] sm:$0xff]
  %v177 = vld [vmem:[%s1 + $0x300] sm:$0xff]
  %v178 = vld [vmem:[%s1 + $0x308] sm:$0xff]
  %v179 = vld [vmem:[%s1 + $0x310] sm:$0xff]
  %v180 = vld [vmem:[%s1 + $0x318] sm:$0xff]
  %v181 = vld [vmem:[%s1 + $0x320] sm:$0xff]
  %v182 = vld [vmem:[%s1 + $0x328] sm:$0xff]
  %v183 = vld [vmem:[%s1 + $0x330] sm:$0xff]
  %v184 = vld [vmem:[%s1 + $0x338] sm:$0xff]
  %v185 = vld [vmem:[%s1 + $0x340] sm:$0xff]
  %v186 = vld [vmem:[%s1 + $0x348] sm:$0xff]
  %v187 = vld [vmem:[%s1 + $0x350] sm:$0xff]
  %v188 = vld [vmem:[%s1 + $0x358] sm:$0xff]
  %v189 = vld [vmem:[%s1 + $0x360] sm:$0xff]
  %v190 = vld [vmem:[%s1 + $0x368] sm:$0xff]
  %v191 = vld [vmem:[%s1 + $0x370] sm:$0xff]
  %v192 = vld [vmem:[%s1 + $0x378] sm:$0xff]
  %v193 = vld [vmem:[%s1 + $0x380] sm:$0xff]
  %v194 = vld [vmem:[%s1 + $0x388] sm:$0xff]
  %v195 = vld [vmem:[%s1 + $0x390] sm:$0xff]
  %v196 = vld [vmem:[%s1 + $0x398] sm:$0xff]
  %v197 = vld [vmem:[%s1 + $0x3a0] sm:$0xff]
  %v198 = vld [vmem:[%s1 + $0x3a8] sm:$0xff]
  %v199 = vld [vmem:[%s1 + $0x3b0] sm:$0xff]
  %v200 = vld [vmem:[%s1 + $0x3b8] sm:$0xff]
  %v201 = vld [vmem:[%s1 + $0x3c0] sm:$0xff]
  %v202 = vld [vmem:[%s1 + $0x3c8] sm:$0xff]
  %v203 = vld [vmem:[%s1 + $0x3d0] sm:$0xff]
  %v204 = vld [vmem:[%s1 + $0x3d8] sm:$0xff]
  %v205 = vld [vmem:[%s1 + $0x3e0] sm:$0xff]
  %v206 = vld [vmem:[%s1 + $0x3e8] sm:$0xff]
  %v207 = vld [vmem:[%s1 + $0x3f0] sm:$0xff]
  %v208 = vld [vmem:[%s1 + $0x3f8] sm:$0xff]
  %v209 = vld [vmem:[%s1 + $0x400] sm:$0xff]
  %v210 = vld [vmem:[%s1 + $0x408] sm:$0xff]
  %v211 = vld [vmem:[%s1 + $0x410] sm:$0xff]
  %v212 = vld [vmem:[%s1 + $0x418] sm:$0xff]
  %v213 = vld [vmem:[%s1 + $0x420] sm:$0xff]
  %v214 = vld [vmem:[%s1 + $0x428] sm:$0xff]
  %v215 = vld [vmem:[%s1 + $0x430] sm:$0xff]
  %v216 = vld [vmem:[%s1 + $0x438] sm:$0xff]
  %v217 = vld [vmem:[%s1 + $0x440] sm:$0xff]
  %v218 = vld [vmem:[%s1 + $0x448] sm:$0xff]
  %v219 = vld [vmem:[%s1 + $0x450] sm:$0xff]
  %v220 = vld [vmem:[%s1 + $0x458] sm:$0xff]
  %v221 = vld [vmem:[%s1 + $0x460] sm:$0xff]
  %v222 = vld [vmem:[%s1 + $0x468] sm:$0xff]
  %v223 = vld [vmem:[%s1 + $0x470] sm:$0xff]
  %v224 = vld [vmem:[%s1 + $0x478] sm:$0xff]
  %v225 = vld [vmem:[%s1 + $0x480] sm:$0xff]
  %v226 = vld [vmem:[%s1 + $0x488] sm:$0xff]
  %v227 = vld [vmem:[%s1 + $0x490] sm:$0xff]
  %v228 = vld [vmem:[%s1 + $0x498] sm:$0xff]
  %v229 = vld [vmem:[%s1 + $0x4a0] sm:$0xff]
  %v230 = vld [vmem:[%s1 + $0x4a8] sm:$0xff]
  %v231 = vld [vmem:[%s1 + $0x4b0] sm:$0xff]
  %v232 = vld [vmem:[%s1 + $0x4b8] sm:$0xff]
  %v233 = vld [vmem:[%s1 + $0x4c0] sm:$0xff]
  %v234 = vld [vmem:[%s1 + $0x4c8] sm:$0xff]
  %v235 = vld [vmem:[%s1 + $0x4d0] sm:$0xff]
  %v236 = vld [vmem:[%s1 + $0x4d8] sm:$0xff]
  %v237 = vld [vmem:[%s1 + $0x4e0] sm:$0xff]
  %v238 = vld [vmem:[%s1 + $0x4e8] sm:$0xff]
  %v239 = vld [vmem:[%s1 + $0x4f0] sm:$0xff]
  %v240 = vld [vmem:[%s1 + $0x4f8] sm:$0xff]
  %v241 = vld [vmem:[%s1 + $0x500] sm:$0xff]
  %v242 = vld [vmem:[%s1 + $0x508] sm:$0xff]
  %v243 = vld [vmem:[%s1 + $0x510] sm:$0xff]
  %v244 = vld [vmem:[%s1 + $0x518] sm:$0xff]
  %v245 = vld [vmem:[%s1 + $0x520] sm:$0xff]
  %v246 = vld [vmem:[%s1 + $0x528] sm:$0xff]
  %v247 = vld [vmem:[%s1 + $0x530] sm:$0xff]
  %v248 = vld [vmem:[%s1 + $0x538] sm:$0xff]
  %v249 = vld [vmem:[%s1 + $0x540] sm:$0xff]
  %v250 = vld [vmem:[%s1 + $0x548] sm:$0xff]
  %v251 = vld [vmem:[%s1 + $0x550] sm:$0xff]
  %v252 = vld [vmem:[%s1 + $0x558] sm:$0xff]
  %v253 = vld [vmem:[%s1 + $0x560] sm:$0xff]
  %v254 = vld [vmem:[%s1 + $0x568] sm:$0xff]
  %v255 = vld [vmem:[%s1 + $0x570] sm:$0xff]
  %v256 = vld [vmem:[%s1 + $0x578] sm:$0xff]
  %v257 = vld [vmem:[%s1 + $0x580] sm:$0xff]
  %v258 = vld [vmem:[%s1 + $0x588] sm:$0xff]
  %v259 = vld [vmem:[%s1 + $0x590] sm:$0xff]
  %v260 = vld [vmem:[%s1 + $0x598] sm:$0xff]
  %v261 = vld [vmem:[%s1 + $0x5a0] sm:$0xff]
  %v262 = vld [vmem:[%s1 + $0x5a8] sm:$0xff]
  %v263 = vld [vmem:[%s1 + $0x5b0] sm:$0xff]
  %v264 = vld [vmem:[%s1 + $0x5b8] sm:$0xff]
  %v265 = vld [vmem:[%s1 + $0x5c0] sm:$0xff]
  %v266 = vld [vmem:[%s1 + $0x5c8] sm:$0xff]
  %v267 = vld [vmem:[%s1 + $0x5d0] sm:$0xff]
  %v268 = vld [vmem:[%s1 + $0x5d8] sm:$0xff]
  %v269 = vld [vmem:[%s1 + $0x5e0] sm:$0xff]
  %v270 = vld [vmem:[%s1 + $0x5e8] sm:$0xff]
  %v271 = vld [vmem:[%s1 + $0x5f0] sm:$0xff]
  %v272 = vld [vmem:[%s1 + $0x5f8] sm:$0xff]
  %v273 = vld [vmem:[%s1 + $0x600] sm:$0xff]
  %v274 = vld [vmem:[%s1 + $0x608] sm:$0xff]
  %v275 = vld [vmem:[%s1 + $0x610] sm:$0xff]
  %v276 = vld [vmem:[%s1 + $0x618] sm:$0xff]
  %v277 = vld [vmem:[%s1 + $0x620] sm:$0xff]
  %v278 = vld [vmem:[%s1 + $0x628] sm:$0xff]
  %v279 = vld [vmem:[%s1 + $0x630] sm:$0xff]
  %v280 = vld [vmem:[%s1 + $0x638] sm:$0xff]
  %v281 = vld [vmem:[%s1 + $0x640] sm:$0xff]
  %v282 = vld [vmem:[%s1 + $0x648] sm:$0xff]
  %v283 = vld [vmem:[%s1 + $0x650] sm:$0xff]
  %v284 = vld [vmem:[%s1 + $0x658] sm:$0xff]
  %v285 = vld [vmem:[%s1 + $0x660] sm:$0xff]
  %v286 = vld [vmem:[%s1 + $0x668] sm:$0xff]
  %v287 = vld [vmem:[%s1 + $0x670] sm:$0xff]
  %v288 = vld [vmem:[%s1 + $0x678] sm:$0xff]
  %v289 = vld [vmem:[%s1 + $0x680] sm:$0xff]
  %v290 = vld [vmem:[%s1 + $0x688] sm:$0xff]
  %v291 = vld [vmem:[%s1 + $0x690] sm:$0xff]
  %v292 = vld [vmem:[%s1 + $0x698] sm:$0xff]
  %v293 = vld [vmem:[%s1 + $0x6a0] sm:$0xff]
  %v294 = vld [vmem:[%s1 + $0x6a8] sm:$0xff]
  %v295 = vld [vmem:[%s1 + $0x6b0] sm:$0xff]
  %v296 = vld [vmem:[%s1 + $0x6b8] sm:$0xff]
  %v297 = vld [vmem:[%s1 + $0x6c0] sm:$0xff]
  %v298 = vld [vmem:[%s1 + $0x6c8] sm:$0xff]
  %v299 = vld [vmem:[%s1 + $0x6d0] sm:$0xff]
  %v300 = vld [vmem:[%s1 + $0x6d8] sm:$0xff]
  %v301 = vld [vmem:[%s1 + $0x6e0] sm:$0xff]
  %v302 = vld [vmem:[%s1 + $0x6e8] sm:$0xff]
  %v303 = vld [vmem:[%s1 + $0x6f0] sm:$0xff]
  %v304 = vld [vmem:[%s1 + $0x6f8] sm:$0xff]
  %v305 = vld [vmem:[%s1 + $0x700] sm:$0xff]
  %v306 = vld [vmem:[%s1 + $0x708] sm:$0xff]
  %v307 = vld [vmem:[%s1 + $0x710] sm:$0xff]
  %v308 = vld [vmem:[%s1 + $0x718] sm:$0xff]
  %v309 = vld [vmem:[%s1 + $0x720] sm:$0xff]
  %v310 = vld [vmem:[%s1 + $0x728] sm:$0xff]
  %v311 = vld [vmem:[%s1 + $0x730] sm:$0xff]
  %v312 = vld [vmem:[%s1 + $0x738] sm:$0xff]
  %v313 = vld [vmem:[%s1 + $0x740] sm:$0xff]
  %v314 = vld [vmem:[%s1 + $0x748] sm:$0xff]
  %v315 = vld [vmem:[%s1 + $0x750] sm:$0xff]
  %v316 = vld [vmem:[%s1 + $0x758] sm:$0xff]
  %v317 = vld [vmem:[%s1 + $0x760] sm:$0xff]
  %v318 = vld [vmem:[%s1 + $0x768] sm:$0xff]
  %v319 = vld [vmem:[%s1 + $0x770] sm:$0xff]
  %v320 = vld [vmem:[%s1 + $0x778] sm:$0xff]
  %v321 = vld [vmem:[%s1 + $0x780] sm:$0xff]
  %v322 = vld [vmem:[%s1 + $0x788] sm:$0xff]
  %v323 = vld [vmem:[%s1 + $0x790] sm:$0xff]
  %v324 = vld [vmem:[%s1 + $0x798] sm:$0xff]
  %v325 = vld [vmem:[%s1 + $0x7a0] sm:$0xff]
  %v326 = vld [vmem:[%s1 + $0x7a8] sm:$0xff]
  %v327 = vld [vmem:[%s1 + $0x7b0] sm:$0xff]
  %v328 = vld [vmem:[%s1 + $0x7b8] sm:$0xff]
  %v329 = vld [vmem:[%s1 + $0x7c0] sm:$0xff]
  %v330 = vld [vmem:[%s1 + $0x7c8] sm:$0xff]
  %v331 = vld [vmem:[%s1 + $0x7d0] sm:$0xff]
  %v332 = vld [vmem:[%s1 + $0x7d8] sm:$0xff]
  %v333 = vld [vmem:[%s1 + $0x7e0] sm:$0xff]
  %v334 = vld [vmem:[%s1 + $0x7e8] sm:$0xff]
  %v335 = vld [vmem:[%s1 + $0x7f0] sm:$0xff]
  %v336 = vld [vmem:[%s1 + $0x7f8] sm:$0xff]
  %v337 = vld [vmem:[%s2] sm:$0xf]
  %v339 = vlaneseq
  %v340 = vshrl.u32 %v339, 7
  %v341 = vsub.s32 0, %v340
  %v342 = vrot.slane %v337, %v341
  %v343 = vlaneseq
  %v344 = vshrl.u32 %v343, 7
  %v345 = vsub.s32 1, %v344
  %v346 = vrot.slane %v337, %v345
  %v347 = vlaneseq
  %v348 = vshrl.u32 %v347, 7
  %v349 = vsub.s32 2, %v348
  %v350 = vrot.slane %v337, %v349
  %v351 = vlaneseq
  %v352 = vshrl.u32 %v351, 7
  %v353 = vsub.s32 3, %v352
  %v354 = vrot.slane %v337, %v353
  %v615 = vunpack.c.l.b16 %v81
  %v616 = vunpack.c.h.b16 %v81
  %v617 = vunpack.c.l.b16 %v82
  %v618 = vunpack.c.h.b16 %v82
  %v619 = vunpack.c.l.b16 %v83
  %v620 = vunpack.c.h.b16 %v83
  %v621 = vunpack.c.l.b16 %v84
  %v622 = vunpack.c.h.b16 %v84
  %v623 = vunpack.c.l.b16 %v85
  %v624 = vunpack.c.h.b16 %v85
  %v625 = vunpack.c.l.b16 %v86
  %v626 = vunpack.c.h.b16 %v86
  %v627 = vunpack.c.l.b16 %v87
  %v628 = vunpack.c.h.b16 %v87
  %v629 = vunpack.c.l.b16 %v88
  %v630 = vunpack.c.h.b16 %v88
  %v631 = vunpack.c.l.b16 %v89
  %v632 = vunpack.c.h.b16 %v89
  %v633 = vunpack.c.l.b16 %v90
  %v634 = vunpack.c.h.b16 %v90
  %v635 = vunpack.c.l.b16 %v91
  %v636 = vunpack.c.h.b16 %v91
  %v637 = vunpack.c.l.b16 %v92
  %v638 = vunpack.c.h.b16 %v92
  %v639 = vunpack.c.l.b16 %v93
  %v640 = vunpack.c.h.b16 %v93
  %v641 = vunpack.c.l.b16 %v94
  %v642 = vunpack.c.h.b16 %v94
  %v643 = vunpack.c.l.b16 %v95
  %v644 = vunpack.c.h.b16 %v95
  %v645 = vunpack.c.l.b16 %v96
  %v646 = vunpack.c.h.b16 %v96
  %v647 = vunpack.c.l.b16 %v97
  %v648 = vunpack.c.h.b16 %v97
  %v649 = vunpack.c.l.b16 %v98
  %v650 = vunpack.c.h.b16 %v98
  %v651 = vunpack.c.l.b16 %v99
  %v652 = vunpack.c.h.b16 %v99
  %v653 = vunpack.c.l.b16 %v100
  %v654 = vunpack.c.h.b16 %v100
  %v655 = vunpack.c.l.b16 %v101
  %v656 = vunpack.c.h.b16 %v101
  %v657 = vunpack.c.l.b16 %v102
  %v658 = vunpack.c.h.b16 %v102
  %v659 = vunpack.c.l.b16 %v103
  %v660 = vunpack.c.h.b16 %v103
  %v661 = vunpack.c.l.b16 %v104
  %v662 = vunpack.c.h.b16 %v104
  %v663 = vunpack.c.l.b16 %v105
  %v664 = vunpack.c.h.b16 %v105
  %v665 = vunpack.c.l.b16 %v106
  %v666 = vunpack.c.h.b16 %v106
  %v667 = vunpack.c.l.b16 %v107
  %v668 = vunpack.c.h.b16 %v107
  %v669 = vunpack.c.l.b16 %v108
  %v670 = vunpack.c.h.b16 %v108
  %v671 = vunpack.c.l.b16 %v109
  %v672 = vunpack.c.h.b16 %v109
  %v673 = vunpack.c.l.b16 %v110
  %v674 = vunpack.c.h.b16 %v110
  %v675 = vunpack.c.l.b16 %v111
  %v676 = vunpack.c.h.b16 %v111
  %v677 = vunpack.c.l.b16 %v112
  %v678 = vunpack.c.h.b16 %v112
  %v679 = vunpack.c.l.b16 %v113
  %v680 = vunpack.c.h.b16 %v113
  %v681 = vunpack.c.l.b16 %v114
  %v682 = vunpack.c.h.b16 %v114
  %v683 = vunpack.c.l.b16 %v115
  %v684 = vunpack.c.h.b16 %v115
  %v685 = vunpack.c.l.b16 %v116
  %v686 = vunpack.c.h.b16 %v116
  %v687 = vunpack.c.l.b16 %v117
  %v688 = vunpack.c.h.b16 %v117
  %v689 = vunpack.c.l.b16 %v118
  %v690 = vunpack.c.h.b16 %v118
  %v691 = vunpack.c.l.b16 %v119
  %v692 = vunpack.c.h.b16 %v119
  %v693 = vunpack.c.l.b16 %v120
  %v694 = vunpack.c.h.b16 %v120
  %v695 = vunpack.c.l.b16 %v121
  %v696 = vunpack.c.h.b16 %v121
  %v697 = vunpack.c.l.b16 %v122
  %v698 = vunpack.c.h.b16 %v122
  %v699 = vunpack.c.l.b16 %v123
  %v700 = vunpack.c.h.b16 %v123
  %v701 = vunpack.c.l.b16 %v124
  %v702 = vunpack.c.h.b16 %v124
  %v703 = vunpack.c.l.b16 %v125
  %v704 = vunpack.c.h.b16 %v125
  %v705 = vunpack.c.l.b16 %v126
  %v706 = vunpack.c.h.b16 %v126
  %v707 = vunpack.c.l.b16 %v127
  %v708 = vunpack.c.h.b16 %v127
  %v709 = vunpack.c.l.b16 %v128
  %v710 = vunpack.c.h.b16 %v128
  %v711 = vunpack.c.l.b16 %v129
  %v712 = vunpack.c.h.b16 %v129
  %v713 = vunpack.c.l.b16 %v130
  %v714 = vunpack.c.h.b16 %v130
  %v715 = vunpack.c.l.b16 %v131
  %v716 = vunpack.c.h.b16 %v131
  %v717 = vunpack.c.l.b16 %v132
  %v718 = vunpack.c.h.b16 %v132
  %v719 = vunpack.c.l.b16 %v133
  %v720 = vunpack.c.h.b16 %v133
  %v721 = vunpack.c.l.b16 %v134
  %v722 = vunpack.c.h.b16 %v134
  %v723 = vunpack.c.l.b16 %v135
  %v724 = vunpack.c.h.b16 %v135
  %v725 = vunpack.c.l.b16 %v136
  %v726 = vunpack.c.h.b16 %v136
  %v727 = vunpack.c.l.b16 %v137
  %v728 = vunpack.c.h.b16 %v137
  %v729 = vunpack.c.l.b16 %v138
  %v730 = vunpack.c.h.b16 %v138
  %v731 = vunpack.c.l.b16 %v139
  %v732 = vunpack.c.h.b16 %v139
  %v733 = vunpack.c.l.b16 %v140
  %v734 = vunpack.c.h.b16 %v140
  %v735 = vunpack.c.l.b16 %v141
  %v736 = vunpack.c.h.b16 %v141
  %v737 = vunpack.c.l.b16 %v142
  %v738 = vunpack.c.h.b16 %v142
  %v739 = vunpack.c.l.b16 %v143
  %v740 = vunpack.c.h.b16 %v143
  %v741 = vunpack.c.l.b16 %v144
  %v742 = vunpack.c.h.b16 %v144
  %v743 = vunpack.c.l.b16 %v145
  %v744 = vunpack.c.h.b16 %v145
  %v745 = vunpack.c.l.b16 %v146
  %v746 = vunpack.c.h.b16 %v146
  %v747 = vunpack.c.l.b16 %v147
  %v748 = vunpack.c.h.b16 %v147
  %v749 = vunpack.c.l.b16 %v148
  %v750 = vunpack.c.h.b16 %v148
  %v751 = vunpack.c.l.b16 %v149
  %v752 = vunpack.c.h.b16 %v149
  %v753 = vunpack.c.l.b16 %v150
  %v754 = vunpack.c.h.b16 %v150
  %v755 = vunpack.c.l.b16 %v151
  %v756 = vunpack.c.h.b16 %v151
  %v757 = vunpack.c.l.b16 %v152
  %v758 = vunpack.c.h.b16 %v152
  %v759 = vunpack.c.l.b16 %v153
  %v760 = vunpack.c.h.b16 %v153
  %v761 = vunpack.c.l.b16 %v154
  %v762 = vunpack.c.h.b16 %v154
  %v763 = vunpack.c.l.b16 %v155
  %v764 = vunpack.c.h.b16 %v155
  %v765 = vunpack.c.l.b16 %v156
  %v766 = vunpack.c.h.b16 %v156
  %v767 = vunpack.c.l.b16 %v157
  %v768 = vunpack.c.h.b16 %v157
  %v769 = vunpack.c.l.b16 %v158
  %v770 = vunpack.c.h.b16 %v158
  %v771 = vunpack.c.l.b16 %v159
  %v772 = vunpack.c.h.b16 %v159
  %v773 = vunpack.c.l.b16 %v160
  %v774 = vunpack.c.h.b16 %v160
  %v775 = vunpack.c.l.b16 %v161
  %v776 = vunpack.c.h.b16 %v161
  %v777 = vunpack.c.l.b16 %v162
  %v778 = vunpack.c.h.b16 %v162
  %v779 = vunpack.c.l.b16 %v163
  %v780 = vunpack.c.h.b16 %v163
  %v781 = vunpack.c.l.b16 %v164
  %v782 = vunpack.c.h.b16 %v164
  %v783 = vunpack.c.l.b16 %v165
  %v784 = vunpack.c.h.b16 %v165
  %v785 = vunpack.c.l.b16 %v166
  %v786 = vunpack.c.h.b16 %v166
  %v787 = vunpack.c.l.b16 %v167
  %v788 = vunpack.c.h.b16 %v167
  %v789 = vunpack.c.l.b16 %v168
  %v790 = vunpack.c.h.b16 %v168
  %v791 = vunpack.c.l.b16 %v169
  %v792 = vunpack.c.h.b16 %v169
  %v793 = vunpack.c.l.b16 %v170
  %v794 = vunpack.c.h.b16 %v170
  %v795 = vunpack.c.l.b16 %v171
  %v796 = vunpack.c.h.b16 %v171
  %v797 = vunpack.c.l.b16 %v172
  %v798 = vunpack.c.h.b16 %v172
  %v799 = vunpack.c.l.b16 %v173
  %v800 = vunpack.c.h.b16 %v173
  %v801 = vunpack.c.l.b16 %v174
  %v802 = vunpack.c.h.b16 %v174
  %v803 = vunpack.c.l.b16 %v175
  %v804 = vunpack.c.h.b16 %v175
  %v805 = vunpack.c.l.b16 %v176
  %v806 = vunpack.c.h.b16 %v176
  %v807 = vunpack.c.l.b16 %v177
  %v808 = vunpack.c.h.b16 %v177
  %v809 = vunpack.c.l.b16 %v178
  %v810 = vunpack.c.h.b16 %v178
  %v811 = vunpack.c.l.b16 %v179
  %v812 = vunpack.c.h.b16 %v179
  %v813 = vunpack.c.l.b16 %v180
  %v814 = vunpack.c.h.b16 %v180
  %v815 = vunpack.c.l.b16 %v181
  %v816 = vunpack.c.h.b16 %v181
  %v817 = vunpack.c.l.b16 %v182
  %v818 = vunpack.c.h.b16 %v182
  %v819 = vunpack.c.l.b16 %v183
  %v820 = vunpack.c.h.b16 %v183
  %v821 = vunpack.c.l.b16 %v184
  %v822 = vunpack.c.h.b16 %v184
  %v823 = vunpack.c.l.b16 %v185
  %v824 = vunpack.c.h.b16 %v185
  %v825 = vunpack.c.l.b16 %v186
  %v826 = vunpack.c.h.b16 %v186
  %v827 = vunpack.c.l.b16 %v187
  %v828 = vunpack.c.h.b16 %v187
  %v829 = vunpack.c.l.b16 %v188
  %v830 = vunpack.c.h.b16 %v188
  %v831 = vunpack.c.l.b16 %v189
  %v832 = vunpack.c.h.b16 %v189
  %v833 = vunpack.c.l.b16 %v190
  %v834 = vunpack.c.h.b16 %v190
  %v835 = vunpack.c.l.b16 %v191
  %v836 = vunpack.c.h.b16 %v191
  %v837 = vunpack.c.l.b16 %v192
  %v838 = vunpack.c.h.b16 %v192
  %v839 = vunpack.c.l.b16 %v193
  %v840 = vunpack.c.h.b16 %v193
  %v841 = vunpack.c.l.b16 %v194
  %v842 = vunpack.c.h.b16 %v194
  %v843 = vunpack.c.l.b16 %v195
  %v844 = vunpack.c.h.b16 %v195
  %v845 = vunpack.c.l.b16 %v196
  %v846 = vunpack.c.h.b16 %v196
  %v847 = vunpack.c.l.b16 %v197
  %v848 = vunpack.c.h.b16 %v197
  %v849 = vunpack.c.l.b16 %v198
  %v850 = vunpack.c.h.b16 %v198
  %v851 = vunpack.c.l.b16 %v199
  %v852 = vunpack.c.h.b16 %v199
  %v853 = vunpack.c.l.b16 %v200
  %v854 = vunpack.c.h.b16 %v200
  %v855 = vunpack.c.l.b16 %v201
  %v856 = vunpack.c.h.b16 %v201
  %v857 = vunpack.c.l.b16 %v202
  %v858 = vunpack.c.h.b16 %v202
  %v859 = vunpack.c.l.b16 %v203
  %v860 = vunpack.c.h.b16 %v203
  %v861 = vunpack.c.l.b16 %v204
  %v862 = vunpack.c.h.b16 %v204
  %v863 = vunpack.c.l.b16 %v205
  %v864 = vunpack.c.h.b16 %v205
  %v865 = vunpack.c.l.b16 %v206
  %v866 = vunpack.c.h.b16 %v206
  %v867 = vunpack.c.l.b16 %v207
  %v868 = vunpack.c.h.b16 %v207
  %v869 = vunpack.c.l.b16 %v208
  %v870 = vunpack.c.h.b16 %v208
  %v871 = vunpack.c.l.b16 %v209
  %v872 = vunpack.c.h.b16 %v209
  %v873 = vunpack.c.l.b16 %v210
  %v874 = vunpack.c.h.b16 %v210
  %v875 = vunpack.c.l.b16 %v211
  %v876 = vunpack.c.h.b16 %v211
  %v877 = vunpack.c.l.b16 %v212
  %v878 = vunpack.c.h.b16 %v212
  %v879 = vunpack.c.l.b16 %v213
  %v880 = vunpack.c.h.b16 %v213
  %v881 = vunpack.c.l.b16 %v214
  %v882 = vunpack.c.h.b16 %v214
  %v883 = vunpack.c.l.b16 %v215
  %v884 = vunpack.c.h.b16 %v215
  %v885 = vunpack.c.l.b16 %v216
  %v886 = vunpack.c.h.b16 %v216
  %v887 = vunpack.c.l.b16 %v217
  %v888 = vunpack.c.h.b16 %v217
  %v889 = vunpack.c.l.b16 %v218
  %v890 = vunpack.c.h.b16 %v218
  %v891 = vunpack.c.l.b16 %v219
  %v892 = vunpack.c.h.b16 %v219
  %v893 = vunpack.c.l.b16 %v220
  %v894 = vunpack.c.h.b16 %v220
  %v895 = vunpack.c.l.b16 %v221
  %v896 = vunpack.c.h.b16 %v221
  %v897 = vunpack.c.l.b16 %v222
  %v898 = vunpack.c.h.b16 %v222
  %v899 = vunpack.c.l.b16 %v223
  %v900 = vunpack.c.h.b16 %v223
  %v901 = vunpack.c.l.b16 %v224
  %v902 = vunpack.c.h.b16 %v224
  %v903 = vunpack.c.l.b16 %v225
  %v904 = vunpack.c.h.b16 %v225
  %v905 = vunpack.c.l.b16 %v226
  %v906 = vunpack.c.h.b16 %v226
  %v907 = vunpack.c.l.b16 %v227
  %v908 = vunpack.c.h.b16 %v227
  %v909 = vunpack.c.l.b16 %v228
  %v910 = vunpack.c.h.b16 %v228
  %v911 = vunpack.c.l.b16 %v229
  %v912 = vunpack.c.h.b16 %v229
  %v913 = vunpack.c.l.b16 %v230
  %v914 = vunpack.c.h.b16 %v230
  %v915 = vunpack.c.l.b16 %v231
  %v916 = vunpack.c.h.b16 %v231
  %v917 = vunpack.c.l.b16 %v232
  %v918 = vunpack.c.h.b16 %v232
  %v919 = vunpack.c.l.b16 %v233
  %v920 = vunpack.c.h.b16 %v233
  %v921 = vunpack.c.l.b16 %v234
  %v922 = vunpack.c.h.b16 %v234
  %v923 = vunpack.c.l.b16 %v235
  %v924 = vunpack.c.h.b16 %v235
  %v925 = vunpack.c.l.b16 %v236
  %v926 = vunpack.c.h.b16 %v236
  %v927 = vunpack.c.l.b16 %v237
  %v928 = vunpack.c.h.b16 %v237
  %v929 = vunpack.c.l.b16 %v238
  %v930 = vunpack.c.h.b16 %v238
  %v931 = vunpack.c.l.b16 %v239
  %v932 = vunpack.c.h.b16 %v239
  %v933 = vunpack.c.l.b16 %v240
  %v934 = vunpack.c.h.b16 %v240
  %v935 = vunpack.c.l.b16 %v241
  %v936 = vunpack.c.h.b16 %v241
  %v937 = vunpack.c.l.b16 %v242
  %v938 = vunpack.c.h.b16 %v242
  %v939 = vunpack.c.l.b16 %v243
  %v940 = vunpack.c.h.b16 %v243
  %v941 = vunpack.c.l.b16 %v244
  %v942 = vunpack.c.h.b16 %v244
  %v943 = vunpack.c.l.b16 %v245
  %v944 = vunpack.c.h.b16 %v245
  %v945 = vunpack.c.l.b16 %v246
  %v946 = vunpack.c.h.b16 %v246
  %v947 = vunpack.c.l.b16 %v247
  %v948 = vunpack.c.h.b16 %v247
  %v949 = vunpack.c.l.b16 %v248
  %v950 = vunpack.c.h.b16 %v248
  %v951 = vunpack.c.l.b16 %v249
  %v952 = vunpack.c.h.b16 %v249
  %v953 = vunpack.c.l.b16 %v250
  %v954 = vunpack.c.h.b16 %v250
  %v955 = vunpack.c.l.b16 %v251
  %v956 = vunpack.c.h.b16 %v251
  %v957 = vunpack.c.l.b16 %v252
  %v958 = vunpack.c.h.b16 %v252
  %v959 = vunpack.c.l.b16 %v253
  %v960 = vunpack.c.h.b16 %v253
  %v961 = vunpack.c.l.b16 %v254
  %v962 = vunpack.c.h.b16 %v254
  %v963 = vunpack.c.l.b16 %v255
  %v964 = vunpack.c.h.b16 %v255
  %v965 = vunpack.c.l.b16 %v256
  %v966 = vunpack.c.h.b16 %v256
  %v967 = vunpack.c.l.b16 %v257
  %v968 = vunpack.c.h.b16 %v257
  %v969 = vunpack.c.l.b16 %v258
  %v970 = vunpack.c.h.b16 %v258
  %v971 = vunpack.c.l.b16 %v259
  %v972 = vunpack.c.h.b16 %v259
  %v973 = vunpack.c.l.b16 %v260
  %v974 = vunpack.c.h.b16 %v260
  %v975 = vunpack.c.l.b16 %v261
  %v976 = vunpack.c.h.b16 %v261
  %v977 = vunpack.c.l.b16 %v262
  %v978 = vunpack.c.h.b16 %v262
  %v979 = vunpack.c.l.b16 %v263
  %v980 = vunpack.c.h.b16 %v263
  %v981 = vunpack.c.l.b16 %v264
  %v982 = vunpack.c.h.b16 %v264
  %v983 = vunpack.c.l.b16 %v265
  %v984 = vunpack.c.h.b16 %v265
  %v985 = vunpack.c.l.b16 %v266
  %v986 = vunpack.c.h.b16 %v266
  %v987 = vunpack.c.l.b16 %v267
  %v988 = vunpack.c.h.b16 %v267
  %v989 = vunpack.c.l.b16 %v268
  %v990 = vunpack.c.h.b16 %v268
  %v991 = vunpack.c.l.b16 %v269
  %v992 = vunpack.c.h.b16 %v269
  %v993 = vunpack.c.l.b16 %v270
  %v994 = vunpack.c.h.b16 %v270
  %v995 = vunpack.c.l.b16 %v271
  %v996 = vunpack.c.h.b16 %v271
  %v997 = vunpack.c.l.b16 %v272
  %v998 = vunpack.c.h.b16 %v272
  %v999 = vunpack.c.l.b16 %v273
  %v1000 = vunpack.c.h.b16 %v273
  %v1001 = vunpack.c.l.b16 %v274
  %v1002 = vunpack.c.h.b16 %v274
  %v1003 = vunpack.c.l.b16 %v275
  %v1004 = vunpack.c.h.b16 %v275
  %v1005 = vunpack.c.l.b16 %v276
  %v1006 = vunpack.c.h.b16 %v276
  %v1007 = vunpack.c.l.b16 %v277
  %v1008 = vunpack.c.h.b16 %v277
  %v1009 = vunpack.c.l.b16 %v278
  %v1010 = vunpack.c.h.b16 %v278
  %v1011 = vunpack.c.l.b16 %v279
  %v1012 = vunpack.c.h.b16 %v279
  %v1013 = vunpack.c.l.b16 %v280
  %v1014 = vunpack.c.h.b16 %v280
  %v1015 = vunpack.c.l.b16 %v281
  %v1016 = vunpack.c.h.b16 %v281
  %v1017 = vunpack.c.l.b16 %v282
  %v1018 = vunpack.c.h.b16 %v282
  %v1019 = vunpack.c.l.b16 %v283
  %v1020 = vunpack.c.h.b16 %v283
  %v1021 = vunpack.c.l.b16 %v284
  %v1022 = vunpack.c.h.b16 %v284
  %v1023 = vunpack.c.l.b16 %v285
  %v1024 = vunpack.c.h.b16 %v285
  %v1025 = vunpack.c.l.b16 %v286
  %v1026 = vunpack.c.h.b16 %v286
  %v1027 = vunpack.c.l.b16 %v287
  %v1028 = vunpack.c.h.b16 %v287
  %v1029 = vunpack.c.l.b16 %v288
  %v1030 = vunpack.c.h.b16 %v288
  %v1031 = vunpack.c.l.b16 %v289
  %v1032 = vunpack.c.h.b16 %v289
  %v1033 = vunpack.c.l.b16 %v290
  %v1034 = vunpack.c.h.b16 %v290
  %v1035 = vunpack.c.l.b16 %v291
  %v1036 = vunpack.c.h.b16 %v291
  %v1037 = vunpack.c.l.b16 %v292
  %v1038 = vunpack.c.h.b16 %v292
  %v1039 = vunpack.c.l.b16 %v293
  %v1040 = vunpack.c.h.b16 %v293
  %v1041 = vunpack.c.l.b16 %v294
  %v1042 = vunpack.c.h.b16 %v294
  %v1043 = vunpack.c.l.b16 %v295
  %v1044 = vunpack.c.h.b16 %v295
  %v1045 = vunpack.c.l.b16 %v296
  %v1046 = vunpack.c.h.b16 %v296
  %v1047 = vunpack.c.l.b16 %v297
  %v1048 = vunpack.c.h.b16 %v297
  %v1049 = vunpack.c.l.b16 %v298
  %v1050 = vunpack.c.h.b16 %v298
  %v1051 = vunpack.c.l.b16 %v299
  %v1052 = vunpack.c.h.b16 %v299
  %v1053 = vunpack.c.l.b16 %v300
  %v1054 = vunpack.c.h.b16 %v300
  %v1055 = vunpack.c.l.b16 %v301
  %v1056 = vunpack.c.h.b16 %v301
  %v1057 = vunpack.c.l.b16 %v302
  %v1058 = vunpack.c.h.b16 %v302
  %v1059 = vunpack.c.l.b16 %v303
  %v1060 = vunpack.c.h.b16 %v303
  %v1061 = vunpack.c.l.b16 %v304
  %v1062 = vunpack.c.h.b16 %v304
  %v1063 = vunpack.c.l.b16 %v305
  %v1064 = vunpack.c.h.b16 %v305
  %v1065 = vunpack.c.l.b16 %v306
  %v1066 = vunpack.c.h.b16 %v306
  %v1067 = vunpack.c.l.b16 %v307
  %v1068 = vunpack.c.h.b16 %v307
  %v1069 = vunpack.c.l.b16 %v308
  %v1070 = vunpack.c.h.b16 %v308
  %v1071 = vunpack.c.l.b16 %v309
  %v1072 = vunpack.c.h.b16 %v309
  %v1073 = vunpack.c.l.b16 %v310
  %v1074 = vunpack.c.h.b16 %v310
  %v1075 = vunpack.c.l.b16 %v311
  %v1076 = vunpack.c.h.b16 %v311
  %v1077 = vunpack.c.l.b16 %v312
  %v1078 = vunpack.c.h.b16 %v312
  %v1079 = vunpack.c.l.b16 %v313
  %v1080 = vunpack.c.h.b16 %v313
  %v1081 = vunpack.c.l.b16 %v314
  %v1082 = vunpack.c.h.b16 %v314
  %v1083 = vunpack.c.l.b16 %v315
  %v1084 = vunpack.c.h.b16 %v315
  %v1085 = vunpack.c.l.b16 %v316
  %v1086 = vunpack.c.h.b16 %v316
  %v1087 = vunpack.c.l.b16 %v317
  %v1088 = vunpack.c.h.b16 %v317
  %v1089 = vunpack.c.l.b16 %v318
  %v1090 = vunpack.c.h.b16 %v318
  %v1091 = vunpack.c.l.b16 %v319
  %v1092 = vunpack.c.h.b16 %v319
  %v1093 = vunpack.c.l.b16 %v320
  %v1094 = vunpack.c.h.b16 %v320
  %v1095 = vunpack.c.l.b16 %v321
  %v1096 = vunpack.c.h.b16 %v321
  %v1097 = vunpack.c.l.b16 %v322
  %v1098 = vunpack.c.h.b16 %v322
  %v1099 = vunpack.c.l.b16 %v323
  %v1100 = vunpack.c.h.b16 %v323
  %v1101 = vunpack.c.l.b16 %v324
  %v1102 = vunpack.c.h.b16 %v324
  %v1103 = vunpack.c.l.b16 %v325
  %v1104 = vunpack.c.h.b16 %v325
  %v1105 = vunpack.c.l.b16 %v326
  %v1106 = vunpack.c.h.b16 %v326
  %v1107 = vunpack.c.l.b16 %v327
  %v1108 = vunpack.c.h.b16 %v327
  %v1109 = vunpack.c.l.b16 %v328
  %v1110 = vunpack.c.h.b16 %v328
  %v1111 = vunpack.c.l.b16 %v329
  %v1112 = vunpack.c.h.b16 %v329
  %v1113 = vunpack.c.l.b16 %v330
  %v1114 = vunpack.c.h.b16 %v330
  %v1115 = vunpack.c.l.b16 %v331
  %v1116 = vunpack.c.h.b16 %v331
  %v1117 = vunpack.c.l.b16 %v332
  %v1118 = vunpack.c.h.b16 %v332
  %v1119 = vunpack.c.l.b16 %v333
  %v1120 = vunpack.c.h.b16 %v333
  %v1121 = vunpack.c.l.b16 %v334
  %v1122 = vunpack.c.h.b16 %v334
  %v1123 = vunpack.c.l.b16 %v335
  %v1124 = vunpack.c.h.b16 %v335
  %v1125 = vunpack.c.l.b16 %v336
  %v1126 = vunpack.c.h.b16 %v336
  %v1127 = vpack.c.b16 %v619, %v615
  %v1128 = vpack.c.b16 %v620, %v616
  %v1129 = vpack.c.b16 %v621, %v617
  %v1130 = vpack.c.b16 %v622, %v618
  %v1131 = vpack.c.b16 %v627, %v623
  %v1132 = vpack.c.b16 %v628, %v624
  %v1133 = vpack.c.b16 %v629, %v625
  %v1134 = vpack.c.b16 %v630, %v626
  %v1135 = vpack.c.b16 %v635, %v631
  %v1136 = vpack.c.b16 %v636, %v632
  %v1137 = vpack.c.b16 %v637, %v633
  %v1138 = vpack.c.b16 %v638, %v634
  %v1139 = vpack.c.b16 %v643, %v639
  %v1140 = vpack.c.b16 %v644, %v640
  %v1141 = vpack.c.b16 %v645, %v641
  %v1142 = vpack.c.b16 %v646, %v642
  %v1143 = vpack.c.b16 %v651, %v647
  %v1144 = vpack.c.b16 %v652, %v648
  %v1145 = vpack.c.b16 %v653, %v649
  %v1146 = vpack.c.b16 %v654, %v650
  %v1147 = vpack.c.b16 %v659, %v655
  %v1148 = vpack.c.b16 %v660, %v656
  %v1149 = vpack.c.b16 %v661, %v657
  %v1150 = vpack.c.b16 %v662, %v658
  %v1151 = vpack.c.b16 %v667, %v663
  %v1152 = vpack.c.b16 %v668, %v664
  %v1153 = vpack.c.b16 %v669, %v665
  %v1154 = vpack.c.b16 %v670, %v666
  %v1155 = vpack.c.b16 %v675, %v671
  %v1156 = vpack.c.b16 %v676, %v672
  %v1157 = vpack.c.b16 %v677, %v673
  %v1158 = vpack.c.b16 %v678, %v674
  %v1159 = vpack.c.b16 %v683, %v679
  %v1160 = vpack.c.b16 %v684, %v680
  %v1161 = vpack.c.b16 %v685, %v681
  %v1162 = vpack.c.b16 %v686, %v682
  %v1163 = vpack.c.b16 %v691, %v687
  %v1164 = vpack.c.b16 %v692, %v688
  %v1165 = vpack.c.b16 %v693, %v689
  %v1166 = vpack.c.b16 %v694, %v690
  %v1167 = vpack.c.b16 %v699, %v695
  %v1168 = vpack.c.b16 %v700, %v696
  %v1169 = vpack.c.b16 %v701, %v697
  %v1170 = vpack.c.b16 %v702, %v698
  %v1171 = vpack.c.b16 %v707, %v703
  %v1172 = vpack.c.b16 %v708, %v704
  %v1173 = vpack.c.b16 %v709, %v705
  %v1174 = vpack.c.b16 %v710, %v706
  %v1175 = vpack.c.b16 %v715, %v711
  %v1176 = vpack.c.b16 %v716, %v712
  %v1177 = vpack.c.b16 %v717, %v713
  %v1178 = vpack.c.b16 %v718, %v714
  %v1179 = vpack.c.b16 %v723, %v719
  %v1180 = vpack.c.b16 %v724, %v720
  %v1181 = vpack.c.b16 %v725, %v721
  %v1182 = vpack.c.b16 %v726, %v722
  %v1183 = vpack.c.b16 %v731, %v727
  %v1184 = vpack.c.b16 %v732, %v728
  %v1185 = vpack.c.b16 %v733, %v729
  %v1186 = vpack.c.b16 %v734, %v730
  %v1187 = vpack.c.b16 %v739, %v735
  %v1188 = vpack.c.b16 %v740, %v736
  %v1189 = vpack.c.b16 %v741, %v737
  %v1190 = vpack.c.b16 %v742, %v738
  %v1191 = vpack.c.b16 %v747, %v743
  %v1192 = vpack.c.b16 %v748, %v744
  %v1193 = vpack.c.b16 %v749, %v745
  %v1194 = vpack.c.b16 %v750, %v746
  %v1195 = vpack.c.b16 %v755, %v751
  %v1196 = vpack.c.b16 %v756, %v752
  %v1197 = vpack.c.b16 %v757, %v753
  %v1198 = vpack.c.b16 %v758, %v754
  %v1199 = vpack.c.b16 %v763, %v759
  %v1200 = vpack.c.b16 %v764, %v760
  %v1201 = vpack.c.b16 %v765, %v761
  %v1202 = vpack.c.b16 %v766, %v762
  %v1203 = vpack.c.b16 %v771, %v767
  %v1204 = vpack.c.b16 %v772, %v768
  %v1205 = vpack.c.b16 %v773, %v769
  %v1206 = vpack.c.b16 %v774, %v770
  %v1207 = vpack.c.b16 %v779, %v775
  %v1208 = vpack.c.b16 %v780, %v776
  %v1209 = vpack.c.b16 %v781, %v777
  %v1210 = vpack.c.b16 %v782, %v778
  %v1211 = vpack.c.b16 %v787, %v783
  %v1212 = vpack.c.b16 %v788, %v784
  %v1213 = vpack.c.b16 %v789, %v785
  %v1214 = vpack.c.b16 %v790, %v786
  %v1215 = vpack.c.b16 %v795, %v791
  %v1216 = vpack.c.b16 %v796, %v792
  %v1217 = vpack.c.b16 %v797, %v793
  %v1218 = vpack.c.b16 %v798, %v794
  %v1219 = vpack.c.b16 %v803, %v799
  %v1220 = vpack.c.b16 %v804, %v800
  %v1221 = vpack.c.b16 %v805, %v801
  %v1222 = vpack.c.b16 %v806, %v802
  %v1223 = vpack.c.b16 %v811, %v807
  %v1224 = vpack.c.b16 %v812, %v808
  %v1225 = vpack.c.b16 %v813, %v809
  %v1226 = vpack.c.b16 %v814, %v810
  %v1227 = vpack.c.b16 %v819, %v815
  %v1228 = vpack.c.b16 %v820, %v816
  %v1229 = vpack.c.b16 %v821, %v817
  %v1230 = vpack.c.b16 %v822, %v818
  %v1231 = vpack.c.b16 %v827, %v823
  %v1232 = vpack.c.b16 %v828, %v824
  %v1233 = vpack.c.b16 %v829, %v825
  %v1234 = vpack.c.b16 %v830, %v826
  %v1235 = vpack.c.b16 %v835, %v831
  %v1236 = vpack.c.b16 %v836, %v832
  %v1237 = vpack.c.b16 %v837, %v833
  %v1238 = vpack.c.b16 %v838, %v834
  %v1239 = vpack.c.b16 %v843, %v839
  %v1240 = vpack.c.b16 %v844, %v840
  %v1241 = vpack.c.b16 %v845, %v841
  %v1242 = vpack.c.b16 %v846, %v842
  %v1243 = vpack.c.b16 %v851, %v847
  %v1244 = vpack.c.b16 %v852, %v848
  %v1245 = vpack.c.b16 %v853, %v849
  %v1246 = vpack.c.b16 %v854, %v850
  %v1247 = vpack.c.b16 %v859, %v855
  %v1248 = vpack.c.b16 %v860, %v856
  %v1249 = vpack.c.b16 %v861, %v857
  %v1250 = vpack.c.b16 %v862, %v858
  %v1251 = vpack.c.b16 %v867, %v863
  %v1252 = vpack.c.b16 %v868, %v864
  %v1253 = vpack.c.b16 %v869, %v865
  %v1254 = vpack.c.b16 %v870, %v866
  %v1255 = vpack.c.b16 %v875, %v871
  %v1256 = vpack.c.b16 %v876, %v872
  %v1257 = vpack.c.b16 %v877, %v873
  %v1258 = vpack.c.b16 %v878, %v874
  %v1259 = vpack.c.b16 %v883, %v879
  %v1260 = vpack.c.b16 %v884, %v880
  %v1261 = vpack.c.b16 %v885, %v881
  %v1262 = vpack.c.b16 %v886, %v882
  %v1263 = vpack.c.b16 %v891, %v887
  %v1264 = vpack.c.b16 %v892, %v888
  %v1265 = vpack.c.b16 %v893, %v889
  %v1266 = vpack.c.b16 %v894, %v890
  %v1267 = vpack.c.b16 %v899, %v895
  %v1268 = vpack.c.b16 %v900, %v896
  %v1269 = vpack.c.b16 %v901, %v897
  %v1270 = vpack.c.b16 %v902, %v898
  %v1271 = vpack.c.b16 %v907, %v903
  %v1272 = vpack.c.b16 %v908, %v904
  %v1273 = vpack.c.b16 %v909, %v905
  %v1274 = vpack.c.b16 %v910, %v906
  %v1275 = vpack.c.b16 %v915, %v911
  %v1276 = vpack.c.b16 %v916, %v912
  %v1277 = vpack.c.b16 %v917, %v913
  %v1278 = vpack.c.b16 %v918, %v914
  %v1279 = vpack.c.b16 %v923, %v919
  %v1280 = vpack.c.b16 %v924, %v920
  %v1281 = vpack.c.b16 %v925, %v921
  %v1282 = vpack.c.b16 %v926, %v922
  %v1283 = vpack.c.b16 %v931, %v927
  %v1284 = vpack.c.b16 %v932, %v928
  %v1285 = vpack.c.b16 %v933, %v929
  %v1286 = vpack.c.b16 %v934, %v930
  %v1287 = vpack.c.b16 %v939, %v935
  %v1288 = vpack.c.b16 %v940, %v936
  %v1289 = vpack.c.b16 %v941, %v937
  %v1290 = vpack.c.b16 %v942, %v938
  %v1291 = vpack.c.b16 %v947, %v943
  %v1292 = vpack.c.b16 %v948, %v944
  %v1293 = vpack.c.b16 %v949, %v945
  %v1294 = vpack.c.b16 %v950, %v946
  %v1295 = vpack.c.b16 %v955, %v951
  %v1296 = vpack.c.b16 %v956, %v952
  %v1297 = vpack.c.b16 %v957, %v953
  %v1298 = vpack.c.b16 %v958, %v954
  %v1299 = vpack.c.b16 %v963, %v959
  %v1300 = vpack.c.b16 %v964, %v960
  %v1301 = vpack.c.b16 %v965, %v961
  %v1302 = vpack.c.b16 %v966, %v962
  %v1303 = vpack.c.b16 %v971, %v967
  %v1304 = vpack.c.b16 %v972, %v968
  %v1305 = vpack.c.b16 %v973, %v969
  %v1306 = vpack.c.b16 %v974, %v970
  %v1307 = vpack.c.b16 %v979, %v975
  %v1308 = vpack.c.b16 %v980, %v976
  %v1309 = vpack.c.b16 %v981, %v977
  %v1310 = vpack.c.b16 %v982, %v978
  %v1311 = vpack.c.b16 %v987, %v983
  %v1312 = vpack.c.b16 %v988, %v984
  %v1313 = vpack.c.b16 %v989, %v985
  %v1314 = vpack.c.b16 %v990, %v986
  %v1315 = vpack.c.b16 %v995, %v991
  %v1316 = vpack.c.b16 %v996, %v992
  %v1317 = vpack.c.b16 %v997, %v993
  %v1318 = vpack.c.b16 %v998, %v994
  %v1319 = vpack.c.b16 %v1003, %v999
  %v1320 = vpack.c.b16 %v1004, %v1000
  %v1321 = vpack.c.b16 %v1005, %v1001
  %v1322 = vpack.c.b16 %v1006, %v1002
  %v1323 = vpack.c.b16 %v1011, %v1007
  %v1324 = vpack.c.b16 %v1012, %v1008
  %v1325 = vpack.c.b16 %v1013, %v1009
  %v1326 = vpack.c.b16 %v1014, %v1010
  %v1327 = vpack.c.b16 %v1019, %v1015
  %v1328 = vpack.c.b16 %v1020, %v1016
  %v1329 = vpack.c.b16 %v1021, %v1017
  %v1330 = vpack.c.b16 %v1022, %v1018
  %v1331 = vpack.c.b16 %v1027, %v1023
  %v1332 = vpack.c.b16 %v1028, %v1024
  %v1333 = vpack.c.b16 %v1029, %v1025
  %v1334 = vpack.c.b16 %v1030, %v1026
  %v1335 = vpack.c.b16 %v1035, %v1031
  %v1336 = vpack.c.b16 %v1036, %v1032
  %v1337 = vpack.c.b16 %v1037, %v1033
  %v1338 = vpack.c.b16 %v1038, %v1034
  %v1339 = vpack.c.b16 %v1043, %v1039
  %v1340 = vpack.c.b16 %v1044, %v1040
  %v1341 = vpack.c.b16 %v1045, %v1041
  %v1342 = vpack.c.b16 %v1046, %v1042
  %v1343 = vpack.c.b16 %v1051, %v1047
  %v1344 = vpack.c.b16 %v1052, %v1048
  %v1345 = vpack.c.b16 %v1053, %v1049
  %v1346 = vpack.c.b16 %v1054, %v1050
  %v1347 = vpack.c.b16 %v1059, %v1055
  %v1348 = vpack.c.b16 %v1060, %v1056
  %v1349 = vpack.c.b16 %v1061, %v1057
  %v1350 = vpack.c.b16 %v1062, %v1058
  %v1351 = vpack.c.b16 %v1067, %v1063
  %v1352 = vpack.c.b16 %v1068, %v1064
  %v1353 = vpack.c.b16 %v1069, %v1065
  %v1354 = vpack.c.b16 %v1070, %v1066
  %v1355 = vpack.c.b16 %v1075, %v1071
  %v1356 = vpack.c.b16 %v1076, %v1072
  %v1357 = vpack.c.b16 %v1077, %v1073
  %v1358 = vpack.c.b16 %v1078, %v1074
  %v1359 = vpack.c.b16 %v1083, %v1079
  %v1360 = vpack.c.b16 %v1084, %v1080
  %v1361 = vpack.c.b16 %v1085, %v1081
  %v1362 = vpack.c.b16 %v1086, %v1082
  %v1363 = vpack.c.b16 %v1091, %v1087
  %v1364 = vpack.c.b16 %v1092, %v1088
  %v1365 = vpack.c.b16 %v1093, %v1089
  %v1366 = vpack.c.b16 %v1094, %v1090
  %v1367 = vpack.c.b16 %v1099, %v1095
  %v1368 = vpack.c.b16 %v1100, %v1096
  %v1369 = vpack.c.b16 %v1101, %v1097
  %v1370 = vpack.c.b16 %v1102, %v1098
  %v1371 = vpack.c.b16 %v1107, %v1103
  %v1372 = vpack.c.b16 %v1108, %v1104
  %v1373 = vpack.c.b16 %v1109, %v1105
  %v1374 = vpack.c.b16 %v1110, %v1106
  %v1375 = vpack.c.b16 %v1115, %v1111
  %v1376 = vpack.c.b16 %v1116, %v1112
  %v1377 = vpack.c.b16 %v1117, %v1113
  %v1378 = vpack.c.b16 %v1118, %v1114
  %v1379 = vpack.c.b16 %v1123, %v1119
  %v1380 = vpack.c.b16 %v1124, %v1120
  %v1381 = vpack.c.b16 %v1125, %v1121
  %v1382 = vpack.c.b16 %v1126, %v1122
  %1639 = vmatprep.subr.bf16.mxu0 %v1128
  %1640 = vmatpush1.bf16.msra.mxu0 %v1127
  %1641 = vmatprep.subr.bf16.mxu0 %v1132
  %1642 = vmatpush1.bf16.msra.mxu0 %v1131
  %1643 = vmatprep.subr.bf16.mxu0 %v1136
  %1644 = vmatpush1.bf16.msra.mxu0 %v1135
  %1645 = vmatprep.subr.bf16.mxu0 %v1140
  %1646 = vmatpush1.bf16.msra.mxu0 %v1139
  %1647 = vmatprep.subr.bf16.mxu0 %v1144
  %1648 = vmatpush1.bf16.msra.mxu0 %v1143
  %1649 = vmatprep.subr.bf16.mxu0 %v1148
  %1650 = vmatpush1.bf16.msra.mxu0 %v1147
  %1651 = vmatprep.subr.bf16.mxu0 %v1152
  %1652 = vmatpush1.bf16.msra.mxu0 %v1151
  %1653 = vmatprep.subr.bf16.mxu0 %v1156
  %1654 = vmatpush1.bf16.msra.mxu0 %v1155
  %1655 = vmatprep.subr.bf16.mxu0 %v1160
  %1656 = vmatpush1.bf16.msra.mxu0 %v1159
  %1657 = vmatprep.subr.bf16.mxu0 %v1164
  %1658 = vmatpush1.bf16.msra.mxu0 %v1163
  %1659 = vmatprep.subr.bf16.mxu0 %v1168
  %1660 = vmatpush1.bf16.msra.mxu0 %v1167
  %1661 = vmatprep.subr.bf16.mxu0 %v1172
  %1662 = vmatpush1.bf16.msra.mxu0 %v1171
  %1663 = vmatprep.subr.bf16.mxu0 %v1176
  %1664 = vmatpush1.bf16.msra.mxu0 %v1175
  %1665 = vmatprep.subr.bf16.mxu0 %v1180
  %1666 = vmatpush1.bf16.msra.mxu0 %v1179
  %1667 = vmatprep.subr.bf16.mxu0 %v1184
  %1668 = vmatpush1.bf16.msra.mxu0 %v1183
  %1669 = vmatprep.subr.bf16.mxu0 %v1188
  %1670 = vmatpush1.bf16.msra.mxu0 %v1187
  %1671 = vmatprep.mubr.bf16.mxu0 %v74
  %1672 = vmatmul.mubr.bf16.gmra.mrb[0].mxu0 %v73
  %v1673 = vpop.f32.mrb[0].mxu0
  %v1674 = vadd.f32 %v342, %v1673
  %v1675 = vpop.f32.mrb[0].mxu0
  %v1676 = vadd.f32 %v346, %v1675
  %v1677 = vpop.f32.mrb[0].mxu0
  %v1678 = vpop.f32.mrb[0].mxu0
  %1679 = vdwg.mxu0
  %1680 = vmatprep.subr.bf16.mxu0 %v1192
  %1681 = vmatpush1.bf16.msra.mxu0 %v1191
  %1682 = vmatprep.subr.bf16.mxu0 %v1196
  %1683 = vmatpush1.bf16.msra.mxu0 %v1195
  %1684 = vmatprep.subr.bf16.mxu0 %v1200
  %1685 = vmatpush1.bf16.msra.mxu0 %v1199
  %1686 = vmatprep.subr.bf16.mxu0 %v1204
  %1687 = vmatpush1.bf16.msra.mxu0 %v1203
  %1688 = vmatprep.subr.bf16.mxu0 %v1208
  %1689 = vmatpush1.bf16.msra.mxu0 %v1207
  %1690 = vmatprep.subr.bf16.mxu0 %v1212
  %1691 = vmatpush1.bf16.msra.mxu0 %v1211
  %1692 = vmatprep.subr.bf16.mxu0 %v1216
  %1693 = vmatpush1.bf16.msra.mxu0 %v1215
  %1694 = vmatprep.subr.bf16.mxu0 %v1220
  %1695 = vmatpush1.bf16.msra.mxu0 %v1219
  %1696 = vmatprep.subr.bf16.mxu0 %v1224
  %1697 = vmatpush1.bf16.msra.mxu0 %v1223
  %1698 = vmatprep.subr.bf16.mxu0 %v1228
  %1699 = vmatpush1.bf16.msra.mxu0 %v1227
  %1700 = vmatprep.subr.bf16.mxu0 %v1232
  %1701 = vmatpush1.bf16.msra.mxu0 %v1231
  %1702 = vmatprep.subr.bf16.mxu0 %v1236
  %1703 = vmatpush1.bf16.msra.mxu0 %v1235
  %1704 = vmatprep.subr.bf16.mxu0 %v1240
  %1705 = vmatpush1.bf16.msra.mxu0 %v1239
  %1706 = vmatprep.subr.bf16.mxu0 %v1244
  %1707 = vmatpush1.bf16.msra.mxu0 %v1243
  %1708 = vmatprep.subr.bf16.mxu0 %v1248
  %1709 = vmatpush1.bf16.msra.mxu0 %v1247
  %1710 = vmatprep.subr.bf16.mxu0 %v1252
  %1711 = vmatpush1.bf16.msra.mxu0 %v1251
  %1712 = vmatprep.mubr.bf16.mxu0 %v76
  %1713 = vmatmul.mubr.bf16.gmra.mrb[0].mxu0 %v75
  %v1714 = vpop.f32.mrb[0].mxu0
  %v1715 = vadd.f32 %v1674, %v1714
  %v1716 = vpop.f32.mrb[0].mxu0
  %v1717 = vadd.f32 %v1676, %v1716
  %v1718 = vpop.f32.mrb[0].mxu0
  %v1719 = vpop.f32.mrb[0].mxu0
  %1720 = vdwg.mxu0
  %1721 = vmatprep.subr.bf16.mxu0 %v1256
  %1722 = vmatpush1.bf16.msra.mxu0 %v1255
  %1723 = vmatprep.subr.bf16.mxu0 %v1260
  %1724 = vmatpush1.bf16.msra.mxu0 %v1259
  %1725 = vmatprep.subr.bf16.mxu0 %v1264
  %1726 = vmatpush1.bf16.msra.mxu0 %v1263
  %1727 = vmatprep.subr.bf16.mxu0 %v1268
  %1728 = vmatpush1.bf16.msra.mxu0 %v1267
  %1729 = vmatprep.subr.bf16.mxu0 %v1272
  %1730 = vmatpush1.bf16.msra.mxu0 %v1271
  %1731 = vmatprep.subr.bf16.mxu0 %v1276
  %1732 = vmatpush1.bf16.msra.mxu0 %v1275
  %1733 = vmatprep.subr.bf16.mxu0 %v1280
  %1734 = vmatpush1.bf16.msra.mxu0 %v1279
  %1735 = vmatprep.subr.bf16.mxu0 %v1284
  %1736 = vmatpush1.bf16.msra.mxu0 %v1283
  %1737 = vmatprep.subr.bf16.mxu0 %v1288
  %1738 = vmatpush1.bf16.msra.mxu0 %v1287
  %1739 = vmatprep.subr.bf16.mxu0 %v1292
  %1740 = vmatpush1.bf16.msra.mxu0 %v1291
  %1741 = vmatprep.subr.bf16.mxu0 %v1296
  %1742 = vmatpush1.bf16.msra.mxu0 %v1295
  %1743 = vmatprep.subr.bf16.mxu0 %v1300
  %1744 = vmatpush1.bf16.msra.mxu0 %v1299
  %1745 = vmatprep.subr.bf16.mxu0 %v1304
  %1746 = vmatpush1.bf16.msra.mxu0 %v1303
  %1747 = vmatprep.subr.bf16.mxu0 %v1308
  %1748 = vmatpush1.bf16.msra.mxu0 %v1307
  %1749 = vmatprep.subr.bf16.mxu0 %v1312
  %1750 = vmatpush1.bf16.msra.mxu0 %v1311
  %1751 = vmatprep.subr.bf16.mxu0 %v1316
  %1752 = vmatpush1.bf16.msra.mxu0 %v1315
  %1753 = vmatprep.mubr.bf16.mxu0 %v78
  %1754 = vmatmul.mubr.bf16.gmra.mrb[0].mxu0 %v77
  %v1755 = vpop.f32.mrb[0].mxu0
  %v1756 = vadd.f32 %v1715, %v1755
  %v1757 = vpop.f32.mrb[0].mxu0
  %v1758 = vadd.f32 %v1717, %v1757
  %v1759 = vpop.f32.mrb[0].mxu0
  %v1760 = vpop.f32.mrb[0].mxu0
  %1761 = vdwg.mxu0
  %1762 = vmatprep.subr.bf16.mxu0 %v1320
  %1763 = vmatpush1.bf16.msra.mxu0 %v1319
  %1764 = vmatprep.subr.bf16.mxu0 %v1324
  %1765 = vmatpush1.bf16.msra.mxu0 %v1323
  %1766 = vmatprep.subr.bf16.mxu0 %v1328
  %1767 = vmatpush1.bf16.msra.mxu0 %v1327
  %1768 = vmatprep.subr.bf16.mxu0 %v1332
  %1769 = vmatpush1.bf16.msra.mxu0 %v1331
  %1770 = vmatprep.subr.bf16.mxu0 %v1336
  %1771 = vmatpush1.bf16.msra.mxu0 %v1335
  %1772 = vmatprep.subr.bf16.mxu0 %v1340
  %1773 = vmatpush1.bf16.msra.mxu0 %v1339
  %1774 = vmatprep.subr.bf16.mxu0 %v1344
  %1775 = vmatpush1.bf16.msra.mxu0 %v1343
  %1776 = vmatprep.subr.bf16.mxu0 %v1348
  %1777 = vmatpush1.bf16.msra.mxu0 %v1347
  %1778 = vmatprep.subr.bf16.mxu0 %v1352
  %1779 = vmatpush1.bf16.msra.mxu0 %v1351
  %1780 = vmatprep.subr.bf16.mxu0 %v1356
  %1781 = vmatpush1.bf16.msra.mxu0 %v1355
  %1782 = vmatprep.subr.bf16.mxu0 %v1360
  %1783 = vmatpush1.bf16.msra.mxu0 %v1359
  %1784 = vmatprep.subr.bf16.mxu0 %v1364
  %1785 = vmatpush1.bf16.msra.mxu0 %v1363
  %1786 = vmatprep.subr.bf16.mxu0 %v1368
  %1787 = vmatpush1.bf16.msra.mxu0 %v1367
  %1788 = vmatprep.subr.bf16.mxu0 %v1372
  %1789 = vmatpush1.bf16.msra.mxu0 %v1371
  %1790 = vmatprep.subr.bf16.mxu0 %v1376
  %1791 = vmatpush1.bf16.msra.mxu0 %v1375
  %1792 = vmatprep.subr.bf16.mxu0 %v1380
  %1793 = vmatpush1.bf16.msra.mxu0 %v1379
  %1794 = vmatprep.mubr.bf16.mxu0 %v80
  %1795 = vmatmul.mubr.bf16.gmra.mrb[0].mxu0 %v79
  %v1796 = vpop.f32.mrb[0].mxu0
  %v1797 = vadd.f32 %v1756, %v1796
  %v1798 = vpop.f32.mrb[0].mxu0
  %v1799 = vadd.f32 %v1758, %v1798
  %v1800 = vpop.f32.mrb[0].mxu0
  %v1801 = vpop.f32.mrb[0].mxu0
  %1802 = vdwg.mxu0
  %1803 = vmatprep.subr.bf16.mxu0 %v1130
  %1804 = vmatpush1.bf16.msra.mxu0 %v1129
  %1805 = vmatprep.subr.bf16.mxu0 %v1134
  %1806 = vmatpush1.bf16.msra.mxu0 %v1133
  %1807 = vmatprep.subr.bf16.mxu0 %v1138
  %1808 = vmatpush1.bf16.msra.mxu0 %v1137
  %1809 = vmatprep.subr.bf16.mxu0 %v1142
  %1810 = vmatpush1.bf16.msra.mxu0 %v1141
  %1811 = vmatprep.subr.bf16.mxu0 %v1146
  %1812 = vmatpush1.bf16.msra.mxu0 %v1145
  %1813 = vmatprep.subr.bf16.mxu0 %v1150
  %1814 = vmatpush1.bf16.msra.mxu0 %v1149
  %1815 = vmatprep.subr.bf16.mxu0 %v1154
  %1816 = vmatpush1.bf16.msra.mxu0 %v1153
  %1817 = vmatprep.subr.bf16.mxu0 %v1158
  %1818 = vmatpush1.bf16.msra.mxu0 %v1157
  %1819 = vmatprep.subr.bf16.mxu0 %v1162
  %1820 = vmatpush1.bf16.msra.mxu0 %v1161
  %1821 = vmatprep.subr.bf16.mxu0 %v1166
  %1822 = vmatpush1.bf16.msra.mxu0 %v1165
  %1823 = vmatprep.subr.bf16.mxu0 %v1170
  %1824 = vmatpush1.bf16.msra.mxu0 %v1169
  %1825 = vmatprep.subr.bf16.mxu0 %v1174
  %1826 = vmatpush1.bf16.msra.mxu0 %v1173
  %1827 = vmatprep.subr.bf16.mxu0 %v1178
  %1828 = vmatpush1.bf16.msra.mxu0 %v1177
  %1829 = vmatprep.subr.bf16.mxu0 %v1182
  %1830 = vmatpush1.bf16.msra.mxu0 %v1181
  %1831 = vmatprep.subr.bf16.mxu0 %v1186
  %1832 = vmatpush1.bf16.msra.mxu0 %v1185
  %1833 = vmatprep.subr.bf16.mxu0 %v1190
  %1834 = vmatpush1.bf16.msra.mxu0 %v1189
  %1835 = vmatprep.mubr.bf16.mxu0 %v74
  %1836 = vmatmul.mubr.bf16.gmra.mrb[0].mxu0 %v73
  %v1837 = vpop.f32.mrb[0].mxu0
  %v1838 = vadd.f32 %v350, %v1837
  %v1839 = vpop.f32.mrb[0].mxu0
  %v1840 = vadd.f32 %v354, %v1839
  %v1841 = vpop.f32.mrb[0].mxu0
  %v1842 = vpop.f32.mrb[0].mxu0
  %1843 = vdwg.mxu0
  %1844 = vmatprep.subr.bf16.mxu0 %v1194
  %1845 = vmatpush1.bf16.msra.mxu0 %v1193
  %1846 = vmatprep.subr.bf16.mxu0 %v1198
  %1847 = vmatpush1.bf16.msra.mxu0 %v1197
  %1848 = vmatprep.subr.bf16.mxu0 %v1202
  %1849 = vmatpush1.bf16.msra.mxu0 %v1201
  %1850 = vmatprep.subr.bf16.mxu0 %v1206
  %1851 = vmatpush1.bf16.msra.mxu0 %v1205
  %1852 = vmatprep.subr.bf16.mxu0 %v1210
  %1853 = vmatpush1.bf16.msra.mxu0 %v1209
  %1854 = vmatprep.subr.bf16.mxu0 %v1214
  %1855 = vmatpush1.bf16.msra.mxu0 %v1213
  %1856 = vmatprep.subr.bf16.mxu0 %v1218
  %1857 = vmatpush1.bf16.msra.mxu0 %v1217
  %1858 = vmatprep.subr.bf16.mxu0 %v1222
  %1859 = vmatpush1.bf16.msra.mxu0 %v1221
  %1860 = vmatprep.subr.bf16.mxu0 %v1226
  %1861 = vmatpush1.bf16.msra.mxu0 %v1225
  %1862 = vmatprep.subr.bf16.mxu0 %v1230
  %1863 = vmatpush1.bf16.msra.mxu0 %v1229
  %1864 = vmatprep.subr.bf16.mxu0 %v1234
  %1865 = vmatpush1.bf16.msra.mxu0 %v1233
  %1866 = vmatprep.subr.bf16.mxu0 %v1238
  %1867 = vmatpush1.bf16.msra.mxu0 %v1237
  %1868 = vmatprep.subr.bf16.mxu0 %v1242
  %1869 = vmatpush1.bf16.msra.mxu0 %v1241
  %1870 = vmatprep.subr.bf16.mxu0 %v1246
  %1871 = vmatpush1.bf16.msra.mxu0 %v1245
  %1872 = vmatprep.subr.bf16.mxu0 %v1250
  %1873 = vmatpush1.bf16.msra.mxu0 %v1249
  %1874 = vmatprep.subr.bf16.mxu0 %v1254
  %1875 = vmatpush1.bf16.msra.mxu0 %v1253
  %1876 = vmatprep.mubr.bf16.mxu0 %v76
  %1877 = vmatmul.mubr.bf16.gmra.mrb[0].mxu0 %v75
  %v1878 = vpop.f32.mrb[0].mxu0
  %v1879 = vadd.f32 %v1838, %v1878
  %v1880 = vpop.f32.mrb[0].mxu0
  %v1881 = vadd.f32 %v1840, %v1880
  %v1882 = vpop.f32.mrb[0].mxu0
  %v1883 = vpop.f32.mrb[0].mxu0
  %1884 = vdwg.mxu0
  %1885 = vmatprep.subr.bf16.mxu0 %v1258
  %1886 = vmatpush1.bf16.msra.mxu0 %v1257
  %1887 = vmatprep.subr.bf16.mxu0 %v1262
  %1888 = vmatpush1.bf16.msra.mxu0 %v1261
  %1889 = vmatprep.subr.bf16.mxu0 %v1266
  %1890 = vmatpush1.bf16.msra.mxu0 %v1265
  %1891 = vmatprep.subr.bf16.mxu0 %v1270
  %1892 = vmatpush1.bf16.msra.mxu0 %v1269
  %1893 = vmatprep.subr.bf16.mxu0 %v1274
  %1894 = vmatpush1.bf16.msra.mxu0 %v1273
  %1895 = vmatprep.subr.bf16.mxu0 %v1278
  %1896 = vmatpush1.bf16.msra.mxu0 %v1277
  %1897 = vmatprep.subr.bf16.mxu0 %v1282
  %1898 = vmatpush1.bf16.msra.mxu0 %v1281
  %1899 = vmatprep.subr.bf16.mxu0 %v1286
  %1900 = vmatpush1.bf16.msra.mxu0 %v1285
  %1901 = vmatprep.subr.bf16.mxu0 %v1290
  %1902 = vmatpush1.bf16.msra.mxu0 %v1289
  %1903 = vmatprep.subr.bf16.mxu0 %v1294
  %1904 = vmatpush1.bf16.msra.mxu0 %v1293
  %1905 = vmatprep.subr.bf16.mxu0 %v1298
  %1906 = vmatpush1.bf16.msra.mxu0 %v1297
  %1907 = vmatprep.subr.bf16.mxu0 %v1302
  %1908 = vmatpush1.bf16.msra.mxu0 %v1301
  %1909 = vmatprep.subr.bf16.mxu0 %v1306
  %1910 = vmatpush1.bf16.msra.mxu0 %v1305
  %1911 = vmatprep.subr.bf16.mxu0 %v1310
  %1912 = vmatpush1.bf16.msra.mxu0 %v1309
  %1913 = vmatprep.subr.bf16.mxu0 %v1314
  %1914 = vmatpush1.bf16.msra.mxu0 %v1313
  %1915 = vmatprep.subr.bf16.mxu0 %v1318
  %1916 = vmatpush1.bf16.msra.mxu0 %v1317
  %1917 = vmatprep.mubr.bf16.mxu0 %v78
  %1918 = vmatmul.mubr.bf16.gmra.mrb[0].mxu0 %v77
  %v1919 = vpop.f32.mrb[0].mxu0
  %v1920 = vadd.f32 %v1879, %v1919
  %v1921 = vpop.f32.mrb[0].mxu0
  %v1922 = vadd.f32 %v1881, %v1921
  %v1923 = vpop.f32.mrb[0].mxu0
  %v1924 = vpop.f32.mrb[0].mxu0
  %1925 = vdwg.mxu0
  %1926 = vmatprep.subr.bf16.mxu0 %v1322
  %1927 = vmatpush1.bf16.msra.mxu0 %v1321
  %1928 = vmatprep.subr.bf16.mxu0 %v1326
  %1929 = vmatpush1.bf16.msra.mxu0 %v1325
  %1930 = vmatprep.subr.bf16.mxu0 %v1330
  %1931 = vmatpush1.bf16.msra.mxu0 %v1329
  %1932 = vmatprep.subr.bf16.mxu0 %v1334
  %1933 = vmatpush1.bf16.msra.mxu0 %v1333
  %1934 = vmatprep.subr.bf16.mxu0 %v1338
  %1935 = vmatpush1.bf16.msra.mxu0 %v1337
  %1936 = vmatprep.subr.bf16.mxu0 %v1342
  %1937 = vmatpush1.bf16.msra.mxu0 %v1341
  %1938 = vmatprep.subr.bf16.mxu0 %v1346
  %1939 = vmatpush1.bf16.msra.mxu0 %v1345
  %1940 = vmatprep.subr.bf16.mxu0 %v1350
  %1941 = vmatpush1.bf16.msra.mxu0 %v1349
  %1942 = vmatprep.subr.bf16.mxu0 %v1354
  %1943 = vmatpush1.bf16.msra.mxu0 %v1353
  %1944 = vmatprep.subr.bf16.mxu0 %v1358
  %1945 = vmatpush1.bf16.msra.mxu0 %v1357
  %1946 = vmatprep.subr.bf16.mxu0 %v1362
  %1947 = vmatpush1.bf16.msra.mxu0 %v1361
  %1948 = vmatprep.subr.bf16.mxu0 %v1366
  %1949 = vmatpush1.bf16.msra.mxu0 %v1365
  %1950 = vmatprep.subr.bf16.mxu0 %v1370
  %1951 = vmatpush1.bf16.msra.mxu0 %v1369
  %1952 = vmatprep.subr.bf16.mxu0 %v1374
  %1953 = vmatpush1.bf16.msra.mxu0 %v1373
  %1954 = vmatprep.subr.bf16.mxu0 %v1378
  %1955 = vmatpush1.bf16.msra.mxu0 %v1377
  %1956 = vmatprep.subr.bf16.mxu0 %v1382
  %1957 = vmatpush1.bf16.msra.mxu0 %v1381
  %1958 = vmatprep.mubr.bf16.mxu0 %v80
  %1959 = vmatmul.mubr.bf16.gmra.mrb[0].mxu0 %v79
  %v1960 = vpop.f32.mrb[0].mxu0
  %v1961 = vadd.f32 %v1920, %v1960
  %v1962 = vpop.f32.mrb[0].mxu0
  %v1963 = vadd.f32 %v1922, %v1962
  %v1964 = vpop.f32.mrb[0].mxu0
  %v1965 = vpop.f32.mrb[0].mxu0
  %1966 = vdwg.mxu0
  %v1967 = vmax.f32 %v1797, 0.0
  %v1968 = vmax.f32 %v1799, 0.0
  %v1969 = vmax.f32 %v1961, 0.0
  %v1970 = vmax.f32 %v1963, 0.0
  %v1971 = vpack.c.bf16 %v1967, %v1967
  %v1972 = vpack.c.bf16 %v1968, %v1968
  %v1973 = vpack.c.bf16 %v1969, %v1969
  %v1974 = vpack.c.bf16 %v1970, %v1970
  %v1975 = vld [vmem:[%s3] sm:$0xff]
  %v1976 = vld [vmem:[%s3 + $0x8] sm:$0xff]
  %v1977 = vld [vmem:[%s3 + $0x10] sm:$0xff]
  %v1978 = vld [vmem:[%s3 + $0x18] sm:$0xff]
  %v1979 = vld [vmem:[%s3 + $0x20] sm:$0xff]
  %v1980 = vld [vmem:[%s3 + $0x28] sm:$0xff]
  %v1981 = vld [vmem:[%s3 + $0x30] sm:$0xff]
  %v1982 = vld [vmem:[%s3 + $0x38] sm:$0xff]
  %v1983 = vld [vmem:[%s3 + $0x40] sm:$0xff]
  %v1984 = vld [vmem:[%s3 + $0x48] sm:$0xff]
  %v1985 = vld [vmem:[%s3 + $0x50] sm:$0xff]
  %v1986 = vld [vmem:[%s3 + $0x58] sm:$0xff]
  %v1987 = vld [vmem:[%s3 + $0x60] sm:$0xff]
  %v1988 = vld [vmem:[%s3 + $0x68] sm:$0xff]
  %v1989 = vld [vmem:[%s3 + $0x70] sm:$0xff]
  %v1990 = vld [vmem:[%s3 + $0x78] sm:$0xff]
  %v1991 = vld [vmem:[%s3 + $0x80] sm:$0xff]
  %v1992 = vld [vmem:[%s3 + $0x88] sm:$0xff]
  %v1993 = vld [vmem:[%s3 + $0x90] sm:$0xff]
  %v1994 = vld [vmem:[%s3 + $0x98] sm:$0xff]
  %v1995 = vld [vmem:[%s3 + $0xa0] sm:$0xff]
  %v1996 = vld [vmem:[%s3 + $0xa8] sm:$0xff]
  %v1997 = vld [vmem:[%s3 + $0xb0] sm:$0xff]
  %v1998 = vld [vmem:[%s3 + $0xb8] sm:$0xff]
  %v1999 = vld [vmem:[%s3 + $0xc0] sm:$0xff]
  %v2000 = vld [vmem:[%s3 + $0xc8] sm:$0xff]
  %v2001 = vld [vmem:[%s3 + $0xd0] sm:$0xff]
  %v2002 = vld [vmem:[%s3 + $0xd8] sm:$0xff]
  %v2003 = vld [vmem:[%s3 + $0xe0] sm:$0xff]
  %v2004 = vld [vmem:[%s3 + $0xe8] sm:$0xff]
  %v2005 = vld [vmem:[%s3 + $0xf0] sm:$0xff]
  %v2006 = vld [vmem:[%s3 + $0xf8] sm:$0xff]
  %v2007 = vld [vmem:[%s3 + $0x100] sm:$0xff]
  %v2008 = vld [vmem:[%s3 + $0x108] sm:$0xff]
  %v2009 = vld [vmem:[%s3 + $0x110] sm:$0xff]
  %v2010 = vld [vmem:[%s3 + $0x118] sm:$0xff]
  %v2011 = vld [vmem:[%s3 + $0x120] sm:$0xff]
  %v2012 = vld [vmem:[%s3 + $0x128] sm:$0xff]
  %v2013 = vld [vmem:[%s3 + $0x130] sm:$0xff]
  %v2014 = vld [vmem:[%s3 + $0x138] sm:$0xff]
  %v2015 = vld [vmem:[%s3 + $0x140] sm:$0xff]
  %v2016 = vld [vmem:[%s3 + $0x148] sm:$0xff]
  %v2017 = vld [vmem:[%s3 + $0x150] sm:$0xff]
  %v2018 = vld [vmem:[%s3 + $0x158] sm:$0xff]
  %v2019 = vld [vmem:[%s3 + $0x160] sm:$0xff]
  %v2020 = vld [vmem:[%s3 + $0x168] sm:$0xff]
  %v2021 = vld [vmem:[%s3 + $0x170] sm:$0xff]
  %v2022 = vld [vmem:[%s3 + $0x178] sm:$0xff]
  %v2023 = vld [vmem:[%s3 + $0x180] sm:$0xff]
  %v2024 = vld [vmem:[%s3 + $0x188] sm:$0xff]
  %v2025 = vld [vmem:[%s3 + $0x190] sm:$0xff]
  %v2026 = vld [vmem:[%s3 + $0x198] sm:$0xff]
  %v2027 = vld [vmem:[%s3 + $0x1a0] sm:$0xff]
  %v2028 = vld [vmem:[%s3 + $0x1a8] sm:$0xff]
  %v2029 = vld [vmem:[%s3 + $0x1b0] sm:$0xff]
  %v2030 = vld [vmem:[%s3 + $0x1b8] sm:$0xff]
  %v2031 = vld [vmem:[%s3 + $0x1c0] sm:$0xff]
  %v2032 = vld [vmem:[%s3 + $0x1c8] sm:$0xff]
  %v2033 = vld [vmem:[%s3 + $0x1d0] sm:$0xff]
  %v2034 = vld [vmem:[%s3 + $0x1d8] sm:$0xff]
  %v2035 = vld [vmem:[%s3 + $0x1e0] sm:$0xff]
  %v2036 = vld [vmem:[%s3 + $0x1e8] sm:$0xff]
  %v2037 = vld [vmem:[%s3 + $0x1f0] sm:$0xff]
  %v2038 = vld [vmem:[%s3 + $0x1f8] sm:$0xff]
  %v2039 = vld [vmem:[%s4] sm:$0x3]
  %v2041 = vlaneseq
  %v2042 = vshrl.u32 %v2041, 7
  %v2043 = vsub.s32 0, %v2042
  %v2044 = vrot.slane %v2039, %v2043
  %v2045 = vlaneseq
  %v2046 = vshrl.u32 %v2045, 7
  %v2047 = vsub.s32 1, %v2046
  %v2048 = vrot.slane %v2039, %v2047
  %v2115 = vunpack.c.l.b16 %v1975
  %v2116 = vunpack.c.h.b16 %v1975
  %v2117 = vunpack.c.l.b16 %v1976
  %v2118 = vunpack.c.h.b16 %v1976
  %v2119 = vunpack.c.l.b16 %v1977
  %v2120 = vunpack.c.h.b16 %v1977
  %v2121 = vunpack.c.l.b16 %v1978
  %v2122 = vunpack.c.h.b16 %v1978
  %v2123 = vunpack.c.l.b16 %v1979
  %v2124 = vunpack.c.h.b16 %v1979
  %v2125 = vunpack.c.l.b16 %v1980
  %v2126 = vunpack.c.h.b16 %v1980
  %v2127 = vunpack.c.l.b16 %v1981
  %v2128 = vunpack.c.h.b16 %v1981
  %v2129 = vunpack.c.l.b16 %v1982
  %v2130 = vunpack.c.h.b16 %v1982
  %v2131 = vunpack.c.l.b16 %v1983
  %v2132 = vunpack.c.h.b16 %v1983
  %v2133 = vunpack.c.l.b16 %v1984
  %v2134 = vunpack.c.h.b16 %v1984
  %v2135 = vunpack.c.l.b16 %v1985
  %v2136 = vunpack.c.h.b16 %v1985
  %v2137 = vunpack.c.l.b16 %v1986
  %v2138 = vunpack.c.h.b16 %v1986
  %v2139 = vunpack.c.l.b16 %v1987
  %v2140 = vunpack.c.h.b16 %v1987
  %v2141 = vunpack.c.l.b16 %v1988
  %v2142 = vunpack.c.h.b16 %v1988
  %v2143 = vunpack.c.l.b16 %v1989
  %v2144 = vunpack.c.h.b16 %v1989
  %v2145 = vunpack.c.l.b16 %v1990
  %v2146 = vunpack.c.h.b16 %v1990
  %v2147 = vunpack.c.l.b16 %v1991
  %v2148 = vunpack.c.h.b16 %v1991
  %v2149 = vunpack.c.l.b16 %v1992
  %v2150 = vunpack.c.h.b16 %v1992
  %v2151 = vunpack.c.l.b16 %v1993
  %v2152 = vunpack.c.h.b16 %v1993
  %v2153 = vunpack.c.l.b16 %v1994
  %v2154 = vunpack.c.h.b16 %v1994
  %v2155 = vunpack.c.l.b16 %v1995
  %v2156 = vunpack.c.h.b16 %v1995
  %v2157 = vunpack.c.l.b16 %v1996
  %v2158 = vunpack.c.h.b16 %v1996
  %v2159 = vunpack.c.l.b16 %v1997
  %v2160 = vunpack.c.h.b16 %v1997
  %v2161 = vunpack.c.l.b16 %v1998
  %v2162 = vunpack.c.h.b16 %v1998
  %v2163 = vunpack.c.l.b16 %v1999
  %v2164 = vunpack.c.h.b16 %v1999
  %v2165 = vunpack.c.l.b16 %v2000
  %v2166 = vunpack.c.h.b16 %v2000
  %v2167 = vunpack.c.l.b16 %v2001
  %v2168 = vunpack.c.h.b16 %v2001
  %v2169 = vunpack.c.l.b16 %v2002
  %v2170 = vunpack.c.h.b16 %v2002
  %v2171 = vunpack.c.l.b16 %v2003
  %v2172 = vunpack.c.h.b16 %v2003
  %v2173 = vunpack.c.l.b16 %v2004
  %v2174 = vunpack.c.h.b16 %v2004
  %v2175 = vunpack.c.l.b16 %v2005
  %v2176 = vunpack.c.h.b16 %v2005
  %v2177 = vunpack.c.l.b16 %v2006
  %v2178 = vunpack.c.h.b16 %v2006
  %v2179 = vunpack.c.l.b16 %v2007
  %v2180 = vunpack.c.h.b16 %v2007
  %v2181 = vunpack.c.l.b16 %v2008
  %v2182 = vunpack.c.h.b16 %v2008
  %v2183 = vunpack.c.l.b16 %v2009
  %v2184 = vunpack.c.h.b16 %v2009
  %v2185 = vunpack.c.l.b16 %v2010
  %v2186 = vunpack.c.h.b16 %v2010
  %v2187 = vunpack.c.l.b16 %v2011
  %v2188 = vunpack.c.h.b16 %v2011
  %v2189 = vunpack.c.l.b16 %v2012
  %v2190 = vunpack.c.h.b16 %v2012
  %v2191 = vunpack.c.l.b16 %v2013
  %v2192 = vunpack.c.h.b16 %v2013
  %v2193 = vunpack.c.l.b16 %v2014
  %v2194 = vunpack.c.h.b16 %v2014
  %v2195 = vunpack.c.l.b16 %v2015
  %v2196 = vunpack.c.h.b16 %v2015
  %v2197 = vunpack.c.l.b16 %v2016
  %v2198 = vunpack.c.h.b16 %v2016
  %v2199 = vunpack.c.l.b16 %v2017
  %v2200 = vunpack.c.h.b16 %v2017
  %v2201 = vunpack.c.l.b16 %v2018
  %v2202 = vunpack.c.h.b16 %v2018
  %v2203 = vunpack.c.l.b16 %v2019
  %v2204 = vunpack.c.h.b16 %v2019
  %v2205 = vunpack.c.l.b16 %v2020
  %v2206 = vunpack.c.h.b16 %v2020
  %v2207 = vunpack.c.l.b16 %v2021
  %v2208 = vunpack.c.h.b16 %v2021
  %v2209 = vunpack.c.l.b16 %v2022
  %v2210 = vunpack.c.h.b16 %v2022
  %v2211 = vunpack.c.l.b16 %v2023
  %v2212 = vunpack.c.h.b16 %v2023
  %v2213 = vunpack.c.l.b16 %v2024
  %v2214 = vunpack.c.h.b16 %v2024
  %v2215 = vunpack.c.l.b16 %v2025
  %v2216 = vunpack.c.h.b16 %v2025
  %v2217 = vunpack.c.l.b16 %v2026
  %v2218 = vunpack.c.h.b16 %v2026
  %v2219 = vunpack.c.l.b16 %v2027
  %v2220 = vunpack.c.h.b16 %v2027
  %v2221 = vunpack.c.l.b16 %v2028
  %v2222 = vunpack.c.h.b16 %v2028
  %v2223 = vunpack.c.l.b16 %v2029
  %v2224 = vunpack.c.h.b16 %v2029
  %v2225 = vunpack.c.l.b16 %v2030
  %v2226 = vunpack.c.h.b16 %v2030
  %v2227 = vunpack.c.l.b16 %v2031
  %v2228 = vunpack.c.h.b16 %v2031
  %v2229 = vunpack.c.l.b16 %v2032
  %v2230 = vunpack.c.h.b16 %v2032
  %v2231 = vunpack.c.l.b16 %v2033
  %v2232 = vunpack.c.h.b16 %v2033
  %v2233 = vunpack.c.l.b16 %v2034
  %v2234 = vunpack.c.h.b16 %v2034
  %v2235 = vunpack.c.l.b16 %v2035
  %v2236 = vunpack.c.h.b16 %v2035
  %v2237 = vunpack.c.l.b16 %v2036
  %v2238 = vunpack.c.h.b16 %v2036
  %v2239 = vunpack.c.l.b16 %v2037
  %v2240 = vunpack.c.h.b16 %v2037
  %v2241 = vunpack.c.l.b16 %v2038
  %v2242 = vunpack.c.h.b16 %v2038
  %v2243 = vpack.c.b16 %v2117, %v2115
  %v2244 = vpack.c.b16 %v2118, %v2116
  %v2245 = vpack.c.b16 %v2121, %v2119
  %v2246 = vpack.c.b16 %v2122, %v2120
  %v2247 = vpack.c.b16 %v2125, %v2123
  %v2248 = vpack.c.b16 %v2126, %v2124
  %v2249 = vpack.c.b16 %v2129, %v2127
  %v2250 = vpack.c.b16 %v2130, %v2128
  %v2251 = vpack.c.b16 %v2133, %v2131
  %v2252 = vpack.c.b16 %v2134, %v2132
  %v2253 = vpack.c.b16 %v2137, %v2135
  %v2254 = vpack.c.b16 %v2138, %v2136
  %v2255 = vpack.c.b16 %v2141, %v2139
  %v2256 = vpack.c.b16 %v2142, %v2140
  %v2257 = vpack.c.b16 %v2145, %v2143
  %v2258 = vpack.c.b16 %v2146, %v2144
  %v2259 = vpack.c.b16 %v2149, %v2147
  %v2260 = vpack.c.b16 %v2150, %v2148
  %v2261 = vpack.c.b16 %v2153, %v2151
  %v2262 = vpack.c.b16 %v2154, %v2152
  %v2263 = vpack.c.b16 %v2157, %v2155
  %v2264 = vpack.c.b16 %v2158, %v2156
  %v2265 = vpack.c.b16 %v2161, %v2159
  %v2266 = vpack.c.b16 %v2162, %v2160
  %v2267 = vpack.c.b16 %v2165, %v2163
  %v2268 = vpack.c.b16 %v2166, %v2164
  %v2269 = vpack.c.b16 %v2169, %v2167
  %v2270 = vpack.c.b16 %v2170, %v2168
  %v2271 = vpack.c.b16 %v2173, %v2171
  %v2272 = vpack.c.b16 %v2174, %v2172
  %v2273 = vpack.c.b16 %v2177, %v2175
  %v2274 = vpack.c.b16 %v2178, %v2176
  %v2275 = vpack.c.b16 %v2181, %v2179
  %v2276 = vpack.c.b16 %v2182, %v2180
  %v2277 = vpack.c.b16 %v2185, %v2183
  %v2278 = vpack.c.b16 %v2186, %v2184
  %v2279 = vpack.c.b16 %v2189, %v2187
  %v2280 = vpack.c.b16 %v2190, %v2188
  %v2281 = vpack.c.b16 %v2193, %v2191
  %v2282 = vpack.c.b16 %v2194, %v2192
  %v2283 = vpack.c.b16 %v2197, %v2195
  %v2284 = vpack.c.b16 %v2198, %v2196
  %v2285 = vpack.c.b16 %v2201, %v2199
  %v2286 = vpack.c.b16 %v2202, %v2200
  %v2287 = vpack.c.b16 %v2205, %v2203
  %v2288 = vpack.c.b16 %v2206, %v2204
  %v2289 = vpack.c.b16 %v2209, %v2207
  %v2290 = vpack.c.b16 %v2210, %v2208
  %v2291 = vpack.c.b16 %v2213, %v2211
  %v2292 = vpack.c.b16 %v2214, %v2212
  %v2293 = vpack.c.b16 %v2217, %v2215
  %v2294 = vpack.c.b16 %v2218, %v2216
  %v2295 = vpack.c.b16 %v2221, %v2219
  %v2296 = vpack.c.b16 %v2222, %v2220
  %v2297 = vpack.c.b16 %v2225, %v2223
  %v2298 = vpack.c.b16 %v2226, %v2224
  %v2299 = vpack.c.b16 %v2229, %v2227
  %v2300 = vpack.c.b16 %v2230, %v2228
  %v2301 = vpack.c.b16 %v2233, %v2231
  %v2302 = vpack.c.b16 %v2234, %v2232
  %v2303 = vpack.c.b16 %v2237, %v2235
  %v2304 = vpack.c.b16 %v2238, %v2236
  %v2305 = vpack.c.b16 %v2241, %v2239
  %v2306 = vpack.c.b16 %v2242, %v2240
  %2371 = vmatprep.subr.bf16.mxu0 %v2244
  %2372 = vmatpush1.bf16.msra.mxu0 %v2243
  %2373 = vmatprep.subr.bf16.mxu0 %v2246
  %2374 = vmatpush1.bf16.msra.mxu0 %v2245
  %2375 = vmatprep.subr.bf16.mxu0 %v2248
  %2376 = vmatpush1.bf16.msra.mxu0 %v2247
  %2377 = vmatprep.subr.bf16.mxu0 %v2250
  %2378 = vmatpush1.bf16.msra.mxu0 %v2249
  %2379 = vmatprep.subr.bf16.mxu0 %v2252
  %2380 = vmatpush1.bf16.msra.mxu0 %v2251
  %2381 = vmatprep.subr.bf16.mxu0 %v2254
  %2382 = vmatpush1.bf16.msra.mxu0 %v2253
  %2383 = vmatprep.subr.bf16.mxu0 %v2256
  %2384 = vmatpush1.bf16.msra.mxu0 %v2255
  %2385 = vmatprep.subr.bf16.mxu0 %v2258
  %2386 = vmatpush1.bf16.msra.mxu0 %v2257
  %2387 = vmatprep.subr.bf16.mxu0 %v2260
  %2388 = vmatpush1.bf16.msra.mxu0 %v2259
  %2389 = vmatprep.subr.bf16.mxu0 %v2262
  %2390 = vmatpush1.bf16.msra.mxu0 %v2261
  %2391 = vmatprep.subr.bf16.mxu0 %v2264
  %2392 = vmatpush1.bf16.msra.mxu0 %v2263
  %2393 = vmatprep.subr.bf16.mxu0 %v2266
  %2394 = vmatpush1.bf16.msra.mxu0 %v2265
  %2395 = vmatprep.subr.bf16.mxu0 %v2268
  %2396 = vmatpush1.bf16.msra.mxu0 %v2267
  %2397 = vmatprep.subr.bf16.mxu0 %v2270
  %2398 = vmatpush1.bf16.msra.mxu0 %v2269
  %2399 = vmatprep.subr.bf16.mxu0 %v2272
  %2400 = vmatpush1.bf16.msra.mxu0 %v2271
  %2401 = vmatprep.subr.bf16.mxu0 %v2274
  %2402 = vmatpush1.bf16.msra.mxu0 %v2273
  %2403 = vmatprep.mubr.bf16.mxu0 %v1972
  %2404 = vmatmul.mubr.bf16.gmra.mrb[0].mxu0 %v1971
  %v2405 = vpop.f32.mrb[0].mxu0
  %v2406 = vadd.f32 %v2044, %v2405
  %v2407 = vpop.f32.mrb[0].mxu0
  %v2408 = vadd.f32 %v2048, %v2407
  %v2409 = vpop.f32.mrb[0].mxu0
  %v2410 = vpop.f32.mrb[0].mxu0
  %2411 = vdwg.mxu0
  %2412 = vmatprep.subr.bf16.mxu0 %v2276
  %2413 = vmatpush1.bf16.msra.mxu0 %v2275
  %2414 = vmatprep.subr.bf16.mxu0 %v2278
  %2415 = vmatpush1.bf16.msra.mxu0 %v2277
  %2416 = vmatprep.subr.bf16.mxu0 %v2280
  %2417 = vmatpush1.bf16.msra.mxu0 %v2279
  %2418 = vmatprep.subr.bf16.mxu0 %v2282
  %2419 = vmatpush1.bf16.msra.mxu0 %v2281
  %2420 = vmatprep.subr.bf16.mxu0 %v2284
  %2421 = vmatpush1.bf16.msra.mxu0 %v2283
  %2422 = vmatprep.subr.bf16.mxu0 %v2286
  %2423 = vmatpush1.bf16.msra.mxu0 %v2285
  %2424 = vmatprep.subr.bf16.mxu0 %v2288
  %2425 = vmatpush1.bf16.msra.mxu0 %v2287
  %2426 = vmatprep.subr.bf16.mxu0 %v2290
  %2427 = vmatpush1.bf16.msra.mxu0 %v2289
  %2428 = vmatprep.subr.bf16.mxu0 %v2292
  %2429 = vmatpush1.bf16.msra.mxu0 %v2291
  %2430 = vmatprep.subr.bf16.mxu0 %v2294
  %2431 = vmatpush1.bf16.msra.mxu0 %v2293
  %2432 = vmatprep.subr.bf16.mxu0 %v2296
  %2433 = vmatpush1.bf16.msra.mxu0 %v2295
  %2434 = vmatprep.subr.bf16.mxu0 %v2298
  %2435 = vmatpush1.bf16.msra.mxu0 %v2297
  %2436 = vmatprep.subr.bf16.mxu0 %v2300
  %2437 = vmatpush1.bf16.msra.mxu0 %v2299
  %2438 = vmatprep.subr.bf16.mxu0 %v2302
  %2439 = vmatpush1.bf16.msra.mxu0 %v2301
  %2440 = vmatprep.subr.bf16.mxu0 %v2304
  %2441 = vmatpush1.bf16.msra.mxu0 %v2303
  %2442 = vmatprep.subr.bf16.mxu0 %v2306
  %2443 = vmatpush1.bf16.msra.mxu0 %v2305
  %2444 = vmatprep.mubr.bf16.mxu0 %v1974
  %2445 = vmatmul.mubr.bf16.gmra.mrb[0].mxu0 %v1973
  %v2446 = vpop.f32.mrb[0].mxu0
  %v2447 = vadd.f32 %v2406, %v2446
  %v2448 = vpop.f32.mrb[0].mxu0
  %v2449 = vadd.f32 %v2408, %v2448
  %v2450 = vpop.f32.mrb[0].mxu0
  %v2451 = vpop.f32.mrb[0].mxu0
  %2452 = vdwg.mxu0
  %v2453 = vmax.f32 %v2447, 0.0
  %v2454 = vmax.f32 %v2449, 0.0
  %v2455 = vpack.c.bf16 %v2453, %v2453
  %v2456 = vpack.c.bf16 %v2454, %v2454
  %v2457 = vld [vmem:[%s5] sm:$0xf]
  %v2458 = vld [vmem:[%s5 + $0x4] sm:$0xf]
  %v2459 = vld [vmem:[%s5 + $0x8] sm:$0xf]
  %v2460 = vld [vmem:[%s5 + $0xc] sm:$0xf]
  %v2461 = vld [vmem:[%s5 + $0x10] sm:$0xf]
  %v2462 = vld [vmem:[%s5 + $0x14] sm:$0xf]
  %v2463 = vld [vmem:[%s5 + $0x18] sm:$0xf]
  %v2464 = vld [vmem:[%s5 + $0x1c] sm:$0xf]
  %v2465 = vld [vmem:[%s5 + $0x20] sm:$0xf]
  %v2466 = vld [vmem:[%s5 + $0x24] sm:$0xf]
  %v2467 = vld [vmem:[%s5 + $0x28] sm:$0xf]
  %v2468 = vld [vmem:[%s5 + $0x2c] sm:$0xf]
  %v2469 = vld [vmem:[%s5 + $0x30] sm:$0xf]
  %v2470 = vld [vmem:[%s5 + $0x34] sm:$0xf]
  %v2471 = vld [vmem:[%s5 + $0x38] sm:$0xf]
  %v2472 = vld [vmem:[%s5 + $0x3c] sm:$0xf]
  %v2473 = vld [vmem:[%s5 + $0x40] sm:$0xf]
  %v2474 = vld [vmem:[%s5 + $0x44] sm:$0xf]
  %v2475 = vld [vmem:[%s5 + $0x48] sm:$0xf]
  %v2476 = vld [vmem:[%s5 + $0x4c] sm:$0xf]
  %v2477 = vld [vmem:[%s5 + $0x50] sm:$0xf]
  %v2478 = vld [vmem:[%s5 + $0x54] sm:$0xf]
  %v2479 = vld [vmem:[%s5 + $0x58] sm:$0xf]
  %v2480 = vld [vmem:[%s5 + $0x5c] sm:$0xf]
  %v2481 = vld [vmem:[%s5 + $0x60] sm:$0xf]
  %v2482 = vld [vmem:[%s5 + $0x64] sm:$0xf]
  %v2483 = vld [vmem:[%s5 + $0x68] sm:$0xf]
  %v2484 = vld [vmem:[%s5 + $0x6c] sm:$0xf]
  %v2485 = vld [vmem:[%s5 + $0x70] sm:$0xf]
  %v2486 = vld [vmem:[%s5 + $0x74] sm:$0xf]
  %v2487 = vld [vmem:[%s5 + $0x78] sm:$0xf]
  %v2488 = vld [vmem:[%s5 + $0x7c] sm:$0xf]
  %v2489 = vld [vmem:[%s6] sm:$0x1]
  %v2491 = vlaneseq
  %v2492 = vshrl.u32 %v2491, 7
  %v2493 = vsub.s32 0, %v2492
  %v2494 = vrot.slane %v2489, %v2493
  %v2528 = vunpack.c.l.b16 %v2457
  %v2529 = vunpack.c.l.b16 %v2458
  %v2530 = vunpack.c.l.b16 %v2459
  %v2531 = vunpack.c.l.b16 %v2460
  %v2532 = vunpack.c.l.b16 %v2461
  %v2533 = vunpack.c.l.b16 %v2462
  %v2534 = vunpack.c.l.b16 %v2463
  %v2535 = vunpack.c.l.b16 %v2464
  %v2536 = vunpack.c.l.b16 %v2465
  %v2537 = vunpack.c.l.b16 %v2466
  %v2538 = vunpack.c.l.b16 %v2467
  %v2539 = vunpack.c.l.b16 %v2468
  %v2540 = vunpack.c.l.b16 %v2469
  %v2541 = vunpack.c.l.b16 %v2470
  %v2542 = vunpack.c.l.b16 %v2471
  %v2543 = vunpack.c.l.b16 %v2472
  %v2544 = vunpack.c.l.b16 %v2473
  %v2545 = vunpack.c.l.b16 %v2474
  %v2546 = vunpack.c.l.b16 %v2475
  %v2547 = vunpack.c.l.b16 %v2476
  %v2548 = vunpack.c.l.b16 %v2477
  %v2549 = vunpack.c.l.b16 %v2478
  %v2550 = vunpack.c.l.b16 %v2479
  %v2551 = vunpack.c.l.b16 %v2480
  %v2552 = vunpack.c.l.b16 %v2481
  %v2553 = vunpack.c.l.b16 %v2482
  %v2554 = vunpack.c.l.b16 %v2483
  %v2555 = vunpack.c.l.b16 %v2484
  %v2556 = vunpack.c.l.b16 %v2485
  %v2557 = vunpack.c.l.b16 %v2486
  %v2558 = vunpack.c.l.b16 %v2487
  %v2559 = vunpack.c.l.b16 %v2488
  %v2560 = vpack.c.b16 %v2529, %v2528
  %v2561 = vpack.c.b16 %v2531, %v2530
  %v2562 = vpack.c.b16 %v2533, %v2532
  %v2563 = vpack.c.b16 %v2535, %v2534
  %v2564 = vpack.c.b16 %v2537, %v2536
  %v2565 = vpack.c.b16 %v2539, %v2538
  %v2566 = vpack.c.b16 %v2541, %v2540
  %v2567 = vpack.c.b16 %v2543, %v2542
  %v2568 = vpack.c.b16 %v2545, %v2544
  %v2569 = vpack.c.b16 %v2547, %v2546
  %v2570 = vpack.c.b16 %v2549, %v2548
  %v2571 = vpack.c.b16 %v2551, %v2550
  %v2572 = vpack.c.b16 %v2553, %v2552
  %v2573 = vpack.c.b16 %v2555, %v2554
  %v2574 = vpack.c.b16 %v2557, %v2556
  %v2575 = vpack.c.b16 %v2559, %v2558
  %2592 = vmatprep.subr.bf16.mxu0 0
  %2593 = vmatpush1.bf16.msra.mxu0 %v2560
  %2594 = vmatprep.subr.bf16.mxu0 0
  %2595 = vmatpush1.bf16.msra.mxu0 %v2561
  %2596 = vmatprep.subr.bf16.mxu0 0
  %2597 = vmatpush1.bf16.msra.mxu0 %v2562
  %2598 = vmatprep.subr.bf16.mxu0 0
  %2599 = vmatpush1.bf16.msra.mxu0 %v2563
  %2600 = vmatprep.subr.bf16.mxu0 0
  %2601 = vmatpush1.bf16.msra.mxu0 %v2564
  %2602 = vmatprep.subr.bf16.mxu0 0
  %2603 = vmatpush1.bf16.msra.mxu0 %v2565
  %2604 = vmatprep.subr.bf16.mxu0 0
  %2605 = vmatpush1.bf16.msra.mxu0 %v2566
  %2606 = vmatprep.subr.bf16.mxu0 0
  %2607 = vmatpush1.bf16.msra.mxu0 %v2567
  %2608 = vmatprep.subr.bf16.mxu0 0
  %2609 = vmatpush1.bf16.msra.mxu0 %v2568
  %2610 = vmatprep.subr.bf16.mxu0 0
  %2611 = vmatpush1.bf16.msra.mxu0 %v2569
  %2612 = vmatprep.subr.bf16.mxu0 0
  %2613 = vmatpush1.bf16.msra.mxu0 %v2570
  %2614 = vmatprep.subr.bf16.mxu0 0
  %2615 = vmatpush1.bf16.msra.mxu0 %v2571
  %2616 = vmatprep.subr.bf16.mxu0 0
  %2617 = vmatpush1.bf16.msra.mxu0 %v2572
  %2618 = vmatprep.subr.bf16.mxu0 0
  %2619 = vmatpush1.bf16.msra.mxu0 %v2573
  %2620 = vmatprep.subr.bf16.mxu0 0
  %2621 = vmatpush1.bf16.msra.mxu0 %v2574
  %2622 = vmatprep.subr.bf16.mxu0 0
  %2623 = vmatpush1.bf16.msra.mxu0 %v2575
  %2624 = vmatprep.mubr.bf16.mxu0 %v2456
  %2625 = vmatmul.mubr.bf16.gmra.mrb[0].mxu0 %v2455
  %v2626 = vpop.f32.mrb[0].mxu0
  %v2627 = vadd.f32 %v2494, %v2626
  %v2628 = vpop.f32.mrb[0].mxu0
  %v2629 = vpop.f32.mrb[0].mxu0
  %v2630 = vpop.f32.mrb[0].mxu0
  %2631 = vdwg.mxu0
  %vm2632 = vcmask 123904
  %2633 = vst.msk [vmem:[%s7] sm:$0x3] %vm2632, %v2627
  // Predicated region
  $region30: #{_lambda_.3} parent=0 // pred_check
    _
  $region31: #{_lambda_.3} parent=0 // pred_check_branch
    %2635 = sbr.rel (0) target = $region33
  $region32: #{_lambda_.3} parent=0 // pred_region
    _
  $region33: #{_lambda_.3} parent=0 // pred_fallthru
    _
  // Predicated region
  $region34: #{_lambda_.3} parent=0 // pred_check
    _
  $region35: #{_lambda_.3} parent=0 // pred_check_branch
    %2637 = sbr.rel (0) target = $region37
  $region36: #{_lambda_.3} parent=0 // pred_region
    _
  $region37: #{_lambda_.3} parent=0 // pred_fallthru
    _

</llo_original>
